<compile_context>
chip_gen: v5e
topology: v5e:2x2
jax: 0.10.0
libtpu: 0.0.40
codegen_flags: <defaults>
</compile_context>

<pallas_src>
import functools
import math

import jax
import jax.numpy as jnp
from jax import lax
from jax.experimental import pallas as pl
from jax.experimental.pallas import tpu as pltpu


# ----------------------------- Pallas kernel ------------------------------- #
def _block35_kernel(H, W, scale, data_off,
                    x_ref,
                    ws_ref, bs_ref,          # fused stem 1x1 (320 -> 96)
                    w1_ref, b1_ref,          # branch1 3x3 (32 -> 32)
                    w2a_ref, b2a_ref,        # branch2 3x3 (32 -> 48)
                    w2b_ref, b2b_ref,        # branch2 3x3 (48 -> 64)
                    cw0_ref, cw1_ref, cw2_ref, cb_ref,   # final 1x1, split rows
                    out_ref,
                    pad1, pad2a, pad2b):
    HW = H * W

    # Zero the three flat pad slabs once per grid step (~6 bf16 vregs each).
    # Only the border rows and the unused lanes [cin, 128) are ever read as
    # zero; the data region is fully rewritten by each conv3x3 call below.
    pad1[...] = jnp.zeros_like(pad1)
    pad2a[...] = jnp.zeros_like(pad2a)
    pad2b[...] = jnp.zeros_like(pad2b)

    # Row masks fixing the column wrap of the flat-padded layout: taps with
    # dx == 0 (dx == 2) must zero output rows whose w == 0 (w == W-1).
    col = lax.broadcasted_iota(jnp.int32, (HW, 1), 0) % W
    not_left = col != 0
    not_right = col != (W - 1)

    # ---- fused stem: branch0 / branch1[0] / branch2[0] 1x1 convs ----------- #
    x_bf = x_ref[0].astype(jnp.bfloat16)                        # (HW, 320)
    stem = jnp.dot(x_bf, ws_ref[...], preferred_element_type=jnp.float32)
    stem = jnp.maximum(stem + bs_ref[...], 0.0).astype(jnp.bfloat16)   # (HW, 96)

    def conv3x3(t, cin, pad_ref, w_ref, b_ref):
        """3x3 conv (padding=1) as 9 lane-aligned K=128 matmuls, fp32 acc."""
        cout = w_ref.shape[-1]
        # Data region: rows [data_off, data_off+HW), lanes [0, cin).
        pad_ref[data_off:data_off + HW, 0:cin] = t
        acc = jnp.zeros((HW, cout), jnp.float32)
        for dy in range(3):
            for dx in range(3):
                start = data_off + (dy - 1) * W + (dx - 1)
                lhs = pad_ref[start:start + HW, :]              # (HW, 128) bf16
                if dx == 0:
                    lhs = jnp.where(not_left, lhs, jnp.zeros_like(lhs))
                elif dx == 2:
                    lhs = jnp.where(not_right, lhs, jnp.zeros_like(lhs))
                acc = acc + jnp.dot(lhs, w_ref[dy * 3 + dx],
                                    preferred_element_type=jnp.float32)
        return jnp.maximum(acc + b_ref[...], 0.0).astype(jnp.bfloat16)

    y0 = stem[:, 0:32]                                           # branch0
    y1 = conv3x3(stem[:, 32:64], 32, pad1, w1_ref, b1_ref)       # branch1
    t2 = conv3x3(stem[:, 64:96], 32, pad2a, w2a_ref, b2a_ref)    # branch2 (a)
    y2 = conv3x3(t2, 48, pad2b, w2b_ref, b2b_ref)                # branch2 (b)

    # ---- final 1x1 conv via split weights (no concat buffer) --------------- #
    out = jnp.dot(y0, cw0_ref[...], preferred_element_type=jnp.float32)
    out = out + jnp.dot(y1, cw1_ref[...], preferred_element_type=jnp.float32)
    out = out + jnp.dot(y2, cw2_ref[...], preferred_element_type=jnp.float32)
    out = out + cb_ref[...]
    # Residual in fp32, re-read here so it is not live across the convs.
    out = out * scale + x_ref[0]
    out_ref[0] = jnp.maximum(out, 0.0)


# ------------------------------- Wrapper ------------------------------------ #
def block35_forward(x_nchw, p, scale=1.0):
    x = jnp.transpose(x_nchw, (0, 2, 3, 1)).astype(jnp.float32)   # -> NHWC
    N, H, W, C = x.shape
    assert C == 320
    HW = H * W
    x = x.reshape(N, HW, C)                                       # flat spatial

    # Flat pad-slab geometry: data starts at a bf16-sublane-aligned offset
    # >= W+1; the slab covers the largest tap offset (data_off + W + 1 + HW).
    data_off = -(-(W + 1) // 16) * 16
    pad_rows = data_off + (-(-(HW + W + 1) // 16) * 16)

    def pack3x3(w9):  # (9, cin, cout) -> (9, 128, cout) bf16, zero rows >= cin
        cin = w9.shape[1]
        return jnp.pad(w9, ((0, 0), (0, 128 - cin), (0, 0))).astype(jnp.bfloat16)

    ws = jnp.concatenate([p['b0w'], p['b1w0'], p['b2w0']],
                         axis=1).astype(jnp.bfloat16)             # (320, 96)
    bs = jnp.concatenate([p['b0b'], p['b1b0'], p['b2b0']], axis=1)  # (1, 96)
    weights = [ws, bs,
               pack3x3(p['b1w1']), p['b1b1'],
               pack3x3(p['b2w1']), p['b2b1'],
               pack3x3(p['b2w2']), p['b2b2'],
               p['cw'][0:32].astype(jnp.bfloat16),                # branch0 rows
               p['cw'][32:64].astype(jnp.bfloat16),               # branch1 rows
               p['cw'][64:128].astype(jnp.bfloat16),              # branch2 rows
               p['cb']]

    kernel = functools.partial(_block35_kernel, H, W, scale, data_off)

    def full_spec(arr):
        nd = arr.ndim
        return pl.BlockSpec(arr.shape, lambda n, _nd=nd: (0,) * _nd)

    in_specs = ([pl.BlockSpec((1, HW, 320), lambda n: (n, 0, 0))]
                + [full_spec(w) for w in weights])
    out_spec = pl.BlockSpec((1, HW, 320), lambda n: (n, 0, 0))

    out = pl.pallas_call(
        kernel,
        out_shape=jax.ShapeDtypeStruct((N, HW, 320), jnp.float32),
        grid=(N,),
        in_specs=in_specs,
        out_specs=out_spec,
        scratch_shapes=[pltpu.VMEM((pad_rows, 128), jnp.bfloat16),   # branch1
                        pltpu.VMEM((pad_rows, 128), jnp.bfloat16),   # branch2a
                        pltpu.VMEM((pad_rows, 128), jnp.bfloat16)],  # branch2b
        compiler_params=pltpu.CompilerParams(
            dimension_semantics=("parallel",)),
    )(x, *weights)

    out = out.reshape(N, H, W, 320)
    return jnp.transpose(out, (0, 3, 1, 2))        # back to NCHW


# --------------------------- Parameter construction ------------------------- #
def init_params(key):
    keys = jax.random.split(key, 8)

    def conv_w(k, cout, cin, ksz):
        fan = cin * ksz * ksz
        return jax.random.normal(k, (cout, cin, ksz, ksz), jnp.float32) / math.sqrt(fan)

    def bn_params(k, c):
        k1, k2, k3, k4 = jax.random.split(k, 4)
        gamma = jax.random.uniform(k1, (c,), jnp.float32, minval=0.5, maxval=1.5)
        beta = 0.1 * jax.random.normal(k2, (c,), jnp.float32)
        mean = 0.1 * jax.random.normal(k3, (c,), jnp.float32)
        var = jax.random.uniform(k4, (c,), jnp.float32, minval=0.5, maxval=1.5)
        return gamma, beta, mean, var

    def basic_conv(k, cin, cout, ksz):
        kw, kb = jax.random.split(k)
        w = conv_w(kw, cout, cin, ksz)                       # OIHW (PyTorch)
        gamma, beta, mean, var = bn_params(kb, cout)
        s = gamma / jnp.sqrt(var + 1e-3)                     # BN eps = 0.001
        w = w * s[:, None, None, None]                       # fold BN into conv
        b = (beta - mean * s).reshape(1, cout)
        if ksz == 1:
            wk = w[:, :, 0, 0].T                             # (cin, cout)
        else:
            wk = jnp.transpose(w, (2, 3, 1, 0)).reshape(ksz * ksz, cin, cout)
        return wk, b

    p = {}
    p['b0w'], p['b0b'] = basic_conv(keys[0], 320, 32, 1)
    p['b1w0'], p['b1b0'] = basic_conv(keys[1], 320, 32, 1)
    p['b1w1'], p['b1b1'] = basic_conv(keys[2], 32, 32, 3)
    p['b2w0'], p['b2b0'] = basic_conv(keys[3], 320, 32, 1)
    p['b2w1'], p['b2b1'] = basic_conv(keys[4], 32, 48, 3)
    p['b2w2'], p['b2b2'] = basic_conv(keys[5], 48, 64, 3)
    # nn.Conv2d(128, 320, kernel_size=1)  (has bias, no BN)
    kw, kb = jax.random.split(keys[6])
    w = conv_w(kw, 320, 128, 1)
    p['cw'] = w[:, :, 0, 0].T                                # (128, 320)
    p['cb'] = (0.1 * jax.random.normal(kb, (320,), jnp.float32)).reshape(1, 320)
    return p


# ------------------------------ Pure-JAX reference -------------------------- #
def block35_ref(x_nchw, p, scale=1.0):
    x = jnp.transpose(x_nchw, (0, 2, 3, 1)).astype(jnp.float32)
    N, H, W, _ = x.shape
    relu = jax.nn.relu

    def c1(t, w, b):
        return relu(jnp.einsum('nhwc,cd->nhwd', t, w) + b)

    def c3(t, w9, b):
        tp = jnp.pad(t, ((0, 0), (1, 1), (1, 1), (0, 0)))
        acc = jnp.zeros(t.shape[:-1] + (w9.shape[-1],), jnp.float32)
        for dy in range(3):
            for dx in range(3):
                acc = acc + jnp.einsum('nhwc,cd->nhwd',
                                       tp[:, dy:dy + H, dx:dx + W, :],
                                       w9[dy * 3 + dx])
        return relu(acc + b)

    y0 = c1(x, p['b0w'], p['b0b'])
    y1 = c3(c1(x, p['b1w0'], p['b1b0']), p['b1w1'], p['b1b1'])
    y2 = c3(c3(c1(x, p['b2w0'], p['b2b0']), p['b2w1'], p['b2b1']),
            p['b2w2'], p['b2b2'])
    cat = jnp.concatenate([y0, y1, y2], axis=-1)
    out = jnp.einsum('nhwc,cd->nhwd', cat, p['cw']) + p['cb']
    out = relu(out * scale + x)
    return jnp.transpose(out, (0, 3, 1, 2))


# ---------------------------------- Main ------------------------------------ #
if __name__ == "__main__":
    key = jax.random.PRNGKey(0)
    kx, kparams = jax.random.split(key)

    # Input in PyTorch NCHW convention: batch=2, channels=320 (fixed by the
    # module), small spatial 8x8.
    x = jax.random.normal(kx, (2, 320, 8, 8), jnp.float32)
    params = init_params(kparams)

    out = block35_forward(x, params, scale=1.0)
    out = jax.block_until_ready(out)

    ref = block35_ref(x, params, scale=1.0)
    assert out.shape == x.shape, (out.shape, x.shape)

    err = float(jnp.max(jnp.abs(out - ref)))
    rel = float(jnp.linalg.norm(out - ref) / (jnp.linalg.norm(ref) + 1e-12))
    # Kernel matmuls use bf16 operands (fp32 accumulation) vs the fp32
    # reference, so tolerances are looser than pure-fp32 would need.
    assert err < 8e-2, f"max abs err {err}"
    assert rel < 2.5e-2, f"rel L2 err {rel}"
    print("KERNEL_OK")
</pallas_src>

<mosaic_0001>
module attributes {stable_mosaic.version = 11 : i64} {
  func.func @_block35_kernel(%arg0: i32, %arg1: memref<1x64x320xf32, #tpu.memory_space<vmem>>, %arg2: memref<320x96xbf16, #tpu.memory_space<vmem>>, %arg3: memref<1x96xf32, #tpu.memory_space<vmem>>, %arg4: memref<9x128x32xbf16, #tpu.memory_space<vmem>>, %arg5: memref<1x32xf32, #tpu.memory_space<vmem>>, %arg6: memref<9x128x48xbf16, #tpu.memory_space<vmem>>, %arg7: memref<1x48xf32, #tpu.memory_space<vmem>>, %arg8: memref<9x128x64xbf16, #tpu.memory_space<vmem>>, %arg9: memref<1x64xf32, #tpu.memory_space<vmem>>, %arg10: memref<32x320xbf16, #tpu.memory_space<vmem>>, %arg11: memref<32x320xbf16, #tpu.memory_space<vmem>>, %arg12: memref<64x320xbf16, #tpu.memory_space<vmem>>, %arg13: memref<1x320xf32, #tpu.memory_space<vmem>>, %arg14: memref<1x64x320xf32, #tpu.memory_space<vmem>>, %arg15: memref<96x128xbf16, #tpu.memory_space<vmem>>, %arg16: memref<96x128xbf16, #tpu.memory_space<vmem>>, %arg17: memref<96x128xbf16, #tpu.memory_space<vmem>>) attributes {dimension_semantics = [#tpu.dimension_semantics<parallel>], iteration_bounds = array<i64: 2>, scalar_prefetch = 0 : i64, scratch_operands = 3 : i64, tpu.core_type = #tpu.core_type<tc>, window_params = [{transform_indices = @transform_0, window_bounds = array<i64: 1, 64, 320>}, {pipeline_mode = #tpu.pipeline_mode<synchronous>, transform_indices = @transform_1, window_bounds = array<i64: 320, 96>}, {pipeline_mode = #tpu.pipeline_mode<synchronous>, transform_indices = @transform_2, window_bounds = array<i64: 1, 96>}, {pipeline_mode = #tpu.pipeline_mode<synchronous>, transform_indices = @transform_3, window_bounds = array<i64: 9, 128, 32>}, {pipeline_mode = #tpu.pipeline_mode<synchronous>, transform_indices = @transform_4, window_bounds = array<i64: 1, 32>}, {pipeline_mode = #tpu.pipeline_mode<synchronous>, transform_indices = @transform_5, window_bounds = array<i64: 9, 128, 48>}, {pipeline_mode = #tpu.pipeline_mode<synchronous>, transform_indices = @transform_6, window_bounds = array<i64: 1, 48>}, {pipeline_mode = #tpu.pipeline_mode<synchronous>, transform_indices = @transform_7, window_bounds = array<i64: 9, 128, 64>}, {pipeline_mode = #tpu.pipeline_mode<synchronous>, transform_indices = @transform_8, window_bounds = array<i64: 1, 64>}, {pipeline_mode = #tpu.pipeline_mode<synchronous>, transform_indices = @transform_9, window_bounds = array<i64: 32, 320>}, {pipeline_mode = #tpu.pipeline_mode<synchronous>, transform_indices = @transform_10, window_bounds = array<i64: 32, 320>}, {pipeline_mode = #tpu.pipeline_mode<synchronous>, transform_indices = @transform_11, window_bounds = array<i64: 64, 320>}, {pipeline_mode = #tpu.pipeline_mode<synchronous>, transform_indices = @transform_12, window_bounds = array<i64: 1, 320>}, {transform_indices = @transform_13, window_bounds = array<i64: 1, 64, 320>}]} {
    %cst = arith.constant 0.000000e+00 : bf16
    %0 = vector.broadcast %cst : bf16 to vector<96x128xbf16>
    %c0 = arith.constant 0 : index
    %c0_0 = arith.constant 0 : index
    %1 = vector.load %arg15[%c0, %c0_0] : memref<96x128xbf16, #tpu.memory_space<vmem>>, vector<96x128xbf16>
    tpu.vector_store %arg15[%c0, %c0_0], %0 {strides = array<i32>} : memref<96x128xbf16, #tpu.memory_space<vmem>>, vector<96x128xbf16>,
    %cst_1 = arith.constant 0.000000e+00 : bf16
    %2 = vector.broadcast %cst_1 : bf16 to vector<96x128xbf16>
    %c0_2 = arith.constant 0 : index
    %c0_3 = arith.constant 0 : index
    %3 = vector.load %arg16[%c0_2, %c0_3] : memref<96x128xbf16, #tpu.memory_space<vmem>>, vector<96x128xbf16>
    tpu.vector_store %arg16[%c0_2, %c0_3], %2 {strides = array<i32>} : memref<96x128xbf16, #tpu.memory_space<vmem>>, vector<96x128xbf16>,
    %cst_4 = arith.constant 0.000000e+00 : bf16
    %4 = vector.broadcast %cst_4 : bf16 to vector<96x128xbf16>
    %c0_5 = arith.constant 0 : index
    %c0_6 = arith.constant 0 : index
    %5 = vector.load %arg17[%c0_5, %c0_6] : memref<96x128xbf16, #tpu.memory_space<vmem>>, vector<96x128xbf16>
    tpu.vector_store %arg17[%c0_5, %c0_6], %4 {strides = array<i32>} : memref<96x128xbf16, #tpu.memory_space<vmem>>, vector<96x128xbf16>,
    %6 = tpu.iota {dimensions = array<i32: 0>} : vector<64x1xi32>
    %c8_i32 = arith.constant 8 : i32
    %c0_i32 = arith.constant 0 : i32
    %7 = arith.cmpi eq, %c8_i32, %c0_i32 : i32
    %c1_i32 = arith.constant 1 : i32
    %8 = arith.select %7, %c1_i32, %c8_i32 : i32
    %9 = vector.broadcast %8 : i32 to vector<64x1xi32>
    %10 = arith.remsi %6, %9 : vector<64x1xi32>
    %c0_i32_7 = arith.constant 0 : i32
    %11 = vector.broadcast %c0_i32_7 : i32 to vector<64x1xi32>
    %12 = arith.cmpi ne, %10, %11 : vector<64x1xi32>
    %c0_i32_8 = arith.constant 0 : i32
    %13 = vector.broadcast %c0_i32_8 : i32 to vector<64x1xi32>
    %14 = arith.cmpi slt, %10, %13 : vector<64x1xi32>
    %c0_i32_9 = arith.constant 0 : i32
    %15 = arith.cmpi slt, %8, %c0_i32_9 : i32
    %16 = vector.broadcast %15 : i1 to vector<64x1xi1>
    %17 = vector.broadcast %16 : vector<64x1xi1> to vector<64x1xi1>
    %18 = arith.xori %14, %17 : vector<64x1xi1>
    %19 = arith.andi %18, %12 : vector<64x1xi1>
    %20 = vector.broadcast %8 : i32 to vector<64x1xi32>
    %21 = arith.addi %10, %20 : vector<64x1xi32>
    %22 = arith.select %19, %21, %10 : vector<64x1xi1>, vector<64x1xi32>
    %c0_i32_10 = arith.constant 0 : i32
    %23 = vector.broadcast %c0_i32_10 : i32 to vector<64x1xi32>
    %24 = arith.cmpi ne, %22, %23 : vector<64x1xi32>
    %c7_i32 = arith.constant 7 : i32
    %25 = vector.broadcast %c7_i32 : i32 to vector<64x1xi32>
    %26 = arith.cmpi ne, %22, %25 : vector<64x1xi32>
    %c0_11 = arith.constant 0 : index
    %c0_12 = arith.constant 0 : index
    %c0_13 = arith.constant 0 : index
    %27 = vector.load %arg1[%c0_11, %c0_12, %c0_13] : memref<1x64x320xf32, #tpu.memory_space<vmem>>, vector<1x64x320xf32>
    %28 = vector.shape_cast %27 : vector<1x64x320xf32> to vector<64x320xf32>
    %29 = arith.truncf %28 : vector<64x320xf32> to vector<64x320xbf16>
    %c0_14 = arith.constant 0 : index
    %c0_15 = arith.constant 0 : index
    %30 = vector.load %arg2[%c0_14, %c0_15] : memref<320x96xbf16, #tpu.memory_space<vmem>>, vector<320x96xbf16>
    %cst_16 = arith.constant dense<0.000000e+00> : vector<64x96xf32>
    %31 = tpu.matmul %29, %30, %cst_16 {dimension_numbers = #tpu.dot_dimension_numbers<[1], [0], [0], [1], [0, 0, 1, 1], [], []>} : vector<64x320xbf16>, vector<320x96xbf16>, vector<64x96xf32> -> vector<64x96xf32>
    %c0_17 = arith.constant 0 : index
    %c0_18 = arith.constant 0 : index
    %32 = vector.load %arg3[%c0_17, %c0_18] : memref<1x96xf32, #tpu.memory_space<vmem>>, vector<1x96xf32>
    %33 = vector.broadcast %32 : vector<1x96xf32> to vector<64x96xf32>
    %34 = arith.addf %31, %33 : vector<64x96xf32>
    %cst_19 = arith.constant 0.000000e+00 : f32
    %35 = vector.broadcast %cst_19 : f32 to vector<64x96xf32>
    %36 = arith.maximumf %34, %35 : vector<64x96xf32>
    %37 = arith.truncf %36 : vector<64x96xf32> to vector<64x96xbf16>
    %38 = vector.extract_strided_slice %37 {offsets = [0, 0], sizes = [64, 32], strides = [1, 1]} : vector<64x96xbf16> to vector<64x32xbf16>
    %39 = vector.extract_strided_slice %37 {offsets = [0, 32], sizes = [64, 32], strides = [1, 1]} : vector<64x96xbf16> to vector<64x32xbf16>
    %c16 = arith.constant 16 : index
    %c0_20 = arith.constant 0 : index
    %40 = vector.load %arg15[%c16, %c0_20] : memref<96x128xbf16, #tpu.memory_space<vmem>>, vector<64x32xbf16>
    tpu.vector_store %arg15[%c16, %c0_20], %39 {strides = array<i32>} : memref<96x128xbf16, #tpu.memory_space<vmem>>, vector<64x32xbf16>,
    %cst_21 = arith.constant 0.000000e+00 : f32
    %41 = vector.broadcast %cst_21 : f32 to vector<64x32xf32>
    %c7 = arith.constant 7 : index
    %c0_22 = arith.constant 0 : index
    %42 = vector.load %arg15[%c7, %c0_22] : memref<96x128xbf16, #tpu.memory_space<vmem>>, vector<64x128xbf16>
    %cst_23 = arith.constant 0.000000e+00 : bf16
    %43 = vector.broadcast %cst_23 : bf16 to vector<64x128xbf16>
    %44 = vector.shape_cast %24 : vector<64x1xi1> to vector<64x1xi1>
    %45 = vector.broadcast %44 : vector<64x1xi1> to vector<64x128xi1>
    %46 = arith.select %45, %42, %43 : vector<64x128xi1>, vector<64x128xbf16>
    %c0_24 = arith.constant 0 : index
    %c0_25 = arith.constant 0 : index
    %c0_26 = arith.constant 0 : index
    %47 = vector.load %arg4[%c0_24, %c0_25, %c0_26] : memref<9x128x32xbf16, #tpu.memory_space<vmem>>, vector<1x128x32xbf16>
    %48 = vector.shape_cast %47 : vector<1x128x32xbf16> to vector<128x32xbf16>
    %cst_27 = arith.constant dense<0.000000e+00> : vector<64x32xf32>
    %49 = tpu.matmul %46, %48, %cst_27 {dimension_numbers = #tpu.dot_dimension_numbers<[1], [0], [0], [1], [0, 0, 1, 1], [], []>} : vector<64x128xbf16>, vector<128x32xbf16>, vector<64x32xf32> -> vector<64x32xf32>
    %50 = arith.addf %41, %49 : vector<64x32xf32>
    %c8 = arith.constant 8 : index
    %c0_28 = arith.constant 0 : index
    %51 = vector.load %arg15[%c8, %c0_28] : memref<96x128xbf16, #tpu.memory_space<vmem>>, vector<64x128xbf16>
    %c1 = arith.constant 1 : index
    %c0_29 = arith.constant 0 : index
    %c0_30 = arith.constant 0 : index
    %52 = vector.load %arg4[%c1, %c0_29, %c0_30] : memref<9x128x32xbf16, #tpu.memory_space<vmem>>, vector<1x128x32xbf16>
    %53 = vector.shape_cast %52 : vector<1x128x32xbf16> to vector<128x32xbf16>
    %cst_31 = arith.constant dense<0.000000e+00> : vector<64x32xf32>
    %54 = tpu.matmul %51, %53, %cst_31 {dimension_numbers = #tpu.dot_dimension_numbers<[1], [0], [0], [1], [0, 0, 1, 1], [], []>} : vector<64x128xbf16>, vector<128x32xbf16>, vector<64x32xf32> -> vector<64x32xf32>
    %55 = arith.addf %50, %54 : vector<64x32xf32>
    %c9 = arith.constant 9 : index
    %c0_32 = arith.constant 0 : index
    %56 = vector.load %arg15[%c9, %c0_32] : memref<96x128xbf16, #tpu.memory_space<vmem>>, vector<64x128xbf16>
    %cst_33 = arith.constant 0.000000e+00 : bf16
    %57 = vector.broadcast %cst_33 : bf16 to vector<64x128xbf16>
    %58 = vector.shape_cast %26 : vector<64x1xi1> to vector<64x1xi1>
    %59 = vector.broadcast %58 : vector<64x1xi1> to vector<64x128xi1>
    %60 = arith.select %59, %56, %57 : vector<64x128xi1>, vector<64x128xbf16>
    %c2 = arith.constant 2 : index
    %c0_34 = arith.constant 0 : index
    %c0_35 = arith.constant 0 : index
    %61 = vector.load %arg4[%c2, %c0_34, %c0_35] : memref<9x128x32xbf16, #tpu.memory_space<vmem>>, vector<1x128x32xbf16>
    %62 = vector.shape_cast %61 : vector<1x128x32xbf16> to vector<128x32xbf16>
    %cst_36 = arith.constant dense<0.000000e+00> : vector<64x32xf32>
    %63 = tpu.matmul %60, %62, %cst_36 {dimension_numbers = #tpu.dot_dimension_numbers<[1], [0], [0], [1], [0, 0, 1, 1], [], []>} : vector<64x128xbf16>, vector<128x32xbf16>, vector<64x32xf32> -> vector<64x32xf32>
    %64 = arith.addf %55, %63 : vector<64x32xf32>
    %c15 = arith.constant 15 : index
    %c0_37 = arith.constant 0 : index
    %65 = vector.load %arg15[%c15, %c0_37] : memref<96x128xbf16, #tpu.memory_space<vmem>>, vector<64x128xbf16>
    %cst_38 = arith.constant 0.000000e+00 : bf16
    %66 = vector.broadcast %cst_38 : bf16 to vector<64x128xbf16>
    %67 = vector.shape_cast %24 : vector<64x1xi1> to vector<64x1xi1>
    %68 = vector.broadcast %67 : vector<64x1xi1> to vector<64x128xi1>
    %69 = arith.select %68, %65, %66 : vector<64x128xi1>, vector<64x128xbf16>
    %c3 = arith.constant 3 : index
    %c0_39 = arith.constant 0 : index
    %c0_40 = arith.constant 0 : index
    %70 = vector.load %arg4[%c3, %c0_39, %c0_40] : memref<9x128x32xbf16, #tpu.memory_space<vmem>>, vector<1x128x32xbf16>
    %71 = vector.shape_cast %70 : vector<1x128x32xbf16> to vector<128x32xbf16>
    %cst_41 = arith.constant dense<0.000000e+00> : vector<64x32xf32>
    %72 = tpu.matmul %69, %71, %cst_41 {dimension_numbers = #tpu.dot_dimension_numbers<[1], [0], [0], [1], [0, 0, 1, 1], [], []>} : vector<64x128xbf16>, vector<128x32xbf16>, vector<64x32xf32> -> vector<64x32xf32>
    %73 = arith.addf %64, %72 : vector<64x32xf32>
    %c16_42 = arith.constant 16 : index
    %c0_43 = arith.constant 0 : index
    %74 = vector.load %arg15[%c16_42, %c0_43] : memref<96x128xbf16, #tpu.memory_space<vmem>>, vector<64x128xbf16>
    %c4 = arith.constant 4 : index
    %c0_44 = arith.constant 0 : index
    %c0_45 = arith.constant 0 : index
    %75 = vector.load %arg4[%c4, %c0_44, %c0_45] : memref<9x128x32xbf16, #tpu.memory_space<vmem>>, vector<1x128x32xbf16>
    %76 = vector.shape_cast %75 : vector<1x128x32xbf16> to vector<128x32xbf16>
    %cst_46 = arith.constant dense<0.000000e+00> : vector<64x32xf32>
    %77 = tpu.matmul %74, %76, %cst_46 {dimension_numbers = #tpu.dot_dimension_numbers<[1], [0], [0], [1], [0, 0, 1, 1], [], []>} : vector<64x128xbf16>, vector<128x32xbf16>, vector<64x32xf32> -> vector<64x32xf32>
    %78 = arith.addf %73, %77 : vector<64x32xf32>
    %c17 = arith.constant 17 : index
    %c0_47 = arith.constant 0 : index
    %79 = vector.load %arg15[%c17, %c0_47] : memref<96x128xbf16, #tpu.memory_space<vmem>>, vector<64x128xbf16>
    %cst_48 = arith.constant 0.000000e+00 : bf16
    %80 = vector.broadcast %cst_48 : bf16 to vector<64x128xbf16>
    %81 = vector.shape_cast %26 : vector<64x1xi1> to vector<64x1xi1>
    %82 = vector.broadcast %81 : vector<64x1xi1> to vector<64x128xi1>
    %83 = arith.select %82, %79, %80 : vector<64x128xi1>, vector<64x128xbf16>
    %c5 = arith.constant 5 : index
    %c0_49 = arith.constant 0 : index
    %c0_50 = arith.constant 0 : index
    %84 = vector.load %arg4[%c5, %c0_49, %c0_50] : memref<9x128x32xbf16, #tpu.memory_space<vmem>>, vector<1x128x32xbf16>
    %85 = vector.shape_cast %84 : vector<1x128x32xbf16> to vector<128x32xbf16>
    %cst_51 = arith.constant dense<0.000000e+00> : vector<64x32xf32>
    %86 = tpu.matmul %83, %85, %cst_51 {dimension_numbers = #tpu.dot_dimension_numbers<[1], [0], [0], [1], [0, 0, 1, 1], [], []>} : vector<64x128xbf16>, vector<128x32xbf16>, vector<64x32xf32> -> vector<64x32xf32>
    %87 = arith.addf %78, %86 : vector<64x32xf32>
    %c23 = arith.constant 23 : index
    %c0_52 = arith.constant 0 : index
    %88 = vector.load %arg15[%c23, %c0_52] : memref<96x128xbf16, #tpu.memory_space<vmem>>, vector<64x128xbf16>
    %cst_53 = arith.constant 0.000000e+00 : bf16
    %89 = vector.broadcast %cst_53 : bf16 to vector<64x128xbf16>
    %90 = vector.shape_cast %24 : vector<64x1xi1> to vector<64x1xi1>
    %91 = vector.broadcast %90 : vector<64x1xi1> to vector<64x128xi1>
    %92 = arith.select %91, %88, %89 : vector<64x128xi1>, vector<64x128xbf16>
    %c6 = arith.constant 6 : index
    %c0_54 = arith.constant 0 : index
    %c0_55 = arith.constant 0 : index
    %93 = vector.load %arg4[%c6, %c0_54, %c0_55] : memref<9x128x32xbf16, #tpu.memory_space<vmem>>, vector<1x128x32xbf16>
    %94 = vector.shape_cast %93 : vector<1x128x32xbf16> to vector<128x32xbf16>
    %cst_56 = arith.constant dense<0.000000e+00> : vector<64x32xf32>
    %95 = tpu.matmul %92, %94, %cst_56 {dimension_numbers = #tpu.dot_dimension_numbers<[1], [0], [0], [1], [0, 0, 1, 1], [], []>} : vector<64x128xbf16>, vector<128x32xbf16>, vector<64x32xf32> -> vector<64x32xf32>
    %96 = arith.addf %87, %95 : vector<64x32xf32>
    %c24 = arith.constant 24 : index
    %c0_57 = arith.constant 0 : index
    %97 = vector.load %arg15[%c24, %c0_57] : memref<96x128xbf16, #tpu.memory_space<vmem>>, vector<64x128xbf16>
    %c7_58 = arith.constant 7 : index
    %c0_59 = arith.constant 0 : index
    %c0_60 = arith.constant 0 : index
    %98 = vector.load %arg4[%c7_58, %c0_59, %c0_60] : memref<9x128x32xbf16, #tpu.memory_space<vmem>>, vector<1x128x32xbf16>
    %99 = vector.shape_cast %98 : vector<1x128x32xbf16> to vector<128x32xbf16>
    %cst_61 = arith.constant dense<0.000000e+00> : vector<64x32xf32>
    %100 = tpu.matmul %97, %99, %cst_61 {dimension_numbers = #tpu.dot_dimension_numbers<[1], [0], [0], [1], [0, 0, 1, 1], [], []>} : vector<64x128xbf16>, vector<128x32xbf16>, vector<64x32xf32> -> vector<64x32xf32>
    %101 = arith.addf %96, %100 : vector<64x32xf32>
    %c25 = arith.constant 25 : index
    %c0_62 = arith.constant 0 : index
    %102 = vector.load %arg15[%c25, %c0_62] : memref<96x128xbf16, #tpu.memory_space<vmem>>, vector<64x128xbf16>
    %cst_63 = arith.constant 0.000000e+00 : bf16
    %103 = vector.broadcast %cst_63 : bf16 to vector<64x128xbf16>
    %104 = vector.shape_cast %26 : vector<64x1xi1> to vector<64x1xi1>
    %105 = vector.broadcast %104 : vector<64x1xi1> to vector<64x128xi1>
    %106 = arith.select %105, %102, %103 : vector<64x128xi1>, vector<64x128xbf16>
    %c8_64 = arith.constant 8 : index
    %c0_65 = arith.constant 0 : index
    %c0_66 = arith.constant 0 : index
    %107 = vector.load %arg4[%c8_64, %c0_65, %c0_66] : memref<9x128x32xbf16, #tpu.memory_space<vmem>>, vector<1x128x32xbf16>
    %108 = vector.shape_cast %107 : vector<1x128x32xbf16> to vector<128x32xbf16>
    %cst_67 = arith.constant dense<0.000000e+00> : vector<64x32xf32>
    %109 = tpu.matmul %106, %108, %cst_67 {dimension_numbers = #tpu.dot_dimension_numbers<[1], [0], [0], [1], [0, 0, 1, 1], [], []>} : vector<64x128xbf16>, vector<128x32xbf16>, vector<64x32xf32> -> vector<64x32xf32>
    %110 = arith.addf %101, %109 : vector<64x32xf32>
    %c0_68 = arith.constant 0 : index
    %c0_69 = arith.constant 0 : index
    %111 = vector.load %arg5[%c0_68, %c0_69] : memref<1x32xf32, #tpu.memory_space<vmem>>, vector<1x32xf32>
    %112 = vector.broadcast %111 : vector<1x32xf32> to vector<64x32xf32>
    %113 = arith.addf %110, %112 : vector<64x32xf32>
    %cst_70 = arith.constant 0.000000e+00 : f32
    %114 = vector.broadcast %cst_70 : f32 to vector<64x32xf32>
    %115 = arith.maximumf %113, %114 : vector<64x32xf32>
    %116 = arith.truncf %115 : vector<64x32xf32> to vector<64x32xbf16>
    %117 = vector.extract_strided_slice %37 {offsets = [0, 64], sizes = [64, 32], strides = [1, 1]} : vector<64x96xbf16> to vector<64x32xbf16>
    %c16_71 = arith.constant 16 : index
    %c0_72 = arith.constant 0 : index
    %118 = vector.load %arg16[%c16_71, %c0_72] : memref<96x128xbf16, #tpu.memory_space<vmem>>, vector<64x32xbf16>
    tpu.vector_store %arg16[%c16_71, %c0_72], %117 {strides = array<i32>} : memref<96x128xbf16, #tpu.memory_space<vmem>>, vector<64x32xbf16>,
    %cst_73 = arith.constant 0.000000e+00 : f32
    %119 = vector.broadcast %cst_73 : f32 to vector<64x48xf32>
    %c7_74 = arith.constant 7 : index
    %c0_75 = arith.constant 0 : index
    %120 = vector.load %arg16[%c7_74, %c0_75] : memref<96x128xbf16, #tpu.memory_space<vmem>>, vector<64x128xbf16>
    %cst_76 = arith.constant 0.000000e+00 : bf16
    %121 = vector.broadcast %cst_76 : bf16 to vector<64x128xbf16>
    %122 = vector.shape_cast %24 : vector<64x1xi1> to vector<64x1xi1>
    %123 = vector.broadcast %122 : vector<64x1xi1> to vector<64x128xi1>
    %124 = arith.select %123, %120, %121 : vector<64x128xi1>, vector<64x128xbf16>
    %c0_77 = arith.constant 0 : index
    %c0_78 = arith.constant 0 : index
    %c0_79 = arith.constant 0 : index
    %125 = vector.load %arg6[%c0_77, %c0_78, %c0_79] : memref<9x128x48xbf16, #tpu.memory_space<vmem>>, vector<1x128x48xbf16>
    %126 = vector.shape_cast %125 : vector<1x128x48xbf16> to vector<128x48xbf16>
    %cst_80 = arith.constant dense<0.000000e+00> : vector<64x48xf32>
    %127 = tpu.matmul %124, %126, %cst_80 {dimension_numbers = #tpu.dot_dimension_numbers<[1], [0], [0], [1], [0, 0, 1, 1], [], []>} : vector<64x128xbf16>, vector<128x48xbf16>, vector<64x48xf32> -> vector<64x48xf32>
    %128 = arith.addf %119, %127 : vector<64x48xf32>
    %c8_81 = arith.constant 8 : index
    %c0_82 = arith.constant 0 : index
    %129 = vector.load %arg16[%c8_81, %c0_82] : memref<96x128xbf16, #tpu.memory_space<vmem>>, vector<64x128xbf16>
    %c1_83 = arith.constant 1 : index
    %c0_84 = arith.constant 0 : index
    %c0_85 = arith.constant 0 : index
    %130 = vector.load %arg6[%c1_83, %c0_84, %c0_85] : memref<9x128x48xbf16, #tpu.memory_space<vmem>>, vector<1x128x48xbf16>
    %131 = vector.shape_cast %130 : vector<1x128x48xbf16> to vector<128x48xbf16>
    %cst_86 = arith.constant dense<0.000000e+00> : vector<64x48xf32>
    %132 = tpu.matmul %129, %131, %cst_86 {dimension_numbers = #tpu.dot_dimension_numbers<[1], [0], [0], [1], [0, 0, 1, 1], [], []>} : vector<64x128xbf16>, vector<128x48xbf16>, vector<64x48xf32> -> vector<64x48xf32>
    %133 = arith.addf %128, %132 : vector<64x48xf32>
    %c9_87 = arith.constant 9 : index
    %c0_88 = arith.constant 0 : index
    %134 = vector.load %arg16[%c9_87, %c0_88] : memref<96x128xbf16, #tpu.memory_space<vmem>>, vector<64x128xbf16>
    %cst_89 = arith.constant 0.000000e+00 : bf16
    %135 = vector.broadcast %cst_89 : bf16 to vector<64x128xbf16>
    %136 = vector.shape_cast %26 : vector<64x1xi1> to vector<64x1xi1>
    %137 = vector.broadcast %136 : vector<64x1xi1> to vector<64x128xi1>
    %138 = arith.select %137, %134, %135 : vector<64x128xi1>, vector<64x128xbf16>
    %c2_90 = arith.constant 2 : index
    %c0_91 = arith.constant 0 : index
    %c0_92 = arith.constant 0 : index
    %139 = vector.load %arg6[%c2_90, %c0_91, %c0_92] : memref<9x128x48xbf16, #tpu.memory_space<vmem>>, vector<1x128x48xbf16>
    %140 = vector.shape_cast %139 : vector<1x128x48xbf16> to vector<128x48xbf16>
    %cst_93 = arith.constant dense<0.000000e+00> : vector<64x48xf32>
    %141 = tpu.matmul %138, %140, %cst_93 {dimension_numbers = #tpu.dot_dimension_numbers<[1], [0], [0], [1], [0, 0, 1, 1], [], []>} : vector<64x128xbf16>, vector<128x48xbf16>, vector<64x48xf32> -> vector<64x48xf32>
    %142 = arith.addf %133, %141 : vector<64x48xf32>
    %c15_94 = arith.constant 15 : index
    %c0_95 = arith.constant 0 : index
    %143 = vector.load %arg16[%c15_94, %c0_95] : memref<96x128xbf16, #tpu.memory_space<vmem>>, vector<64x128xbf16>
    %cst_96 = arith.constant 0.000000e+00 : bf16
    %144 = vector.broadcast %cst_96 : bf16 to vector<64x128xbf16>
    %145 = vector.shape_cast %24 : vector<64x1xi1> to vector<64x1xi1>
    %146 = vector.broadcast %145 : vector<64x1xi1> to vector<64x128xi1>
    %147 = arith.select %146, %143, %144 : vector<64x128xi1>, vector<64x128xbf16>
    %c3_97 = arith.constant 3 : index
    %c0_98 = arith.constant 0 : index
    %c0_99 = arith.constant 0 : index
    %148 = vector.load %arg6[%c3_97, %c0_98, %c0_99] : memref<9x128x48xbf16, #tpu.memory_space<vmem>>, vector<1x128x48xbf16>
    %149 = vector.shape_cast %148 : vector<1x128x48xbf16> to vector<128x48xbf16>
    %cst_100 = arith.constant dense<0.000000e+00> : vector<64x48xf32>
    %150 = tpu.matmul %147, %149, %cst_100 {dimension_numbers = #tpu.dot_dimension_numbers<[1], [0], [0], [1], [0, 0, 1, 1], [], []>} : vector<64x128xbf16>, vector<128x48xbf16>, vector<64x48xf32> -> vector<64x48xf32>
    %151 = arith.addf %142, %150 : vector<64x48xf32>
    %c16_101 = arith.constant 16 : index
    %c0_102 = arith.constant 0 : index
    %152 = vector.load %arg16[%c16_101, %c0_102] : memref<96x128xbf16, #tpu.memory_space<vmem>>, vector<64x128xbf16>
    %c4_103 = arith.constant 4 : index
    %c0_104 = arith.constant 0 : index
    %c0_105 = arith.constant 0 : index
    %153 = vector.load %arg6[%c4_103, %c0_104, %c0_105] : memref<9x128x48xbf16, #tpu.memory_space<vmem>>, vector<1x128x48xbf16>
    %154 = vector.shape_cast %153 : vector<1x128x48xbf16> to vector<128x48xbf16>
    %cst_106 = arith.constant dense<0.000000e+00> : vector<64x48xf32>
    %155 = tpu.matmul %152, %154, %cst_106 {dimension_numbers = #tpu.dot_dimension_numbers<[1], [0], [0], [1], [0, 0, 1, 1], [], []>} : vector<64x128xbf16>, vector<128x48xbf16>, vector<64x48xf32> -> vector<64x48xf32>
    %156 = arith.addf %151, %155 : vector<64x48xf32>
    %c17_107 = arith.constant 17 : index
    %c0_108 = arith.constant 0 : index
    %157 = vector.load %arg16[%c17_107, %c0_108] : memref<96x128xbf16, #tpu.memory_space<vmem>>, vector<64x128xbf16>
    %cst_109 = arith.constant 0.000000e+00 : bf16
    %158 = vector.broadcast %cst_109 : bf16 to vector<64x128xbf16>
    %159 = vector.shape_cast %26 : vector<64x1xi1> to vector<64x1xi1>
    %160 = vector.broadcast %159 : vector<64x1xi1> to vector<64x128xi1>
    %161 = arith.select %160, %157, %158 : vector<64x128xi1>, vector<64x128xbf16>
    %c5_110 = arith.constant 5 : index
    %c0_111 = arith.constant 0 : index
    %c0_112 = arith.constant 0 : index
    %162 = vector.load %arg6[%c5_110, %c0_111, %c0_112] : memref<9x128x48xbf16, #tpu.memory_space<vmem>>, vector<1x128x48xbf16>
    %163 = vector.shape_cast %162 : vector<1x128x48xbf16> to vector<128x48xbf16>
    %cst_113 = arith.constant dense<0.000000e+00> : vector<64x48xf32>
    %164 = tpu.matmul %161, %163, %cst_113 {dimension_numbers = #tpu.dot_dimension_numbers<[1], [0], [0], [1], [0, 0, 1, 1], [], []>} : vector<64x128xbf16>, vector<128x48xbf16>, vector<64x48xf32> -> vector<64x48xf32>
    %165 = arith.addf %156, %164 : vector<64x48xf32>
    %c23_114 = arith.constant 23 : index
    %c0_115 = arith.constant 0 : index
    %166 = vector.load %arg16[%c23_114, %c0_115] : memref<96x128xbf16, #tpu.memory_space<vmem>>, vector<64x128xbf16>
    %cst_116 = arith.constant 0.000000e+00 : bf16
    %167 = vector.broadcast %cst_116 : bf16 to vector<64x128xbf16>
    %168 = vector.shape_cast %24 : vector<64x1xi1> to vector<64x1xi1>
    %169 = vector.broadcast %168 : vector<64x1xi1> to vector<64x128xi1>
    %170 = arith.select %169, %166, %167 : vector<64x128xi1>, vector<64x128xbf16>
    %c6_117 = arith.constant 6 : index
    %c0_118 = arith.constant 0 : index
    %c0_119 = arith.constant 0 : index
    %171 = vector.load %arg6[%c6_117, %c0_118, %c0_119] : memref<9x128x48xbf16, #tpu.memory_space<vmem>>, vector<1x128x48xbf16>
    %172 = vector.shape_cast %171 : vector<1x128x48xbf16> to vector<128x48xbf16>
    %cst_120 = arith.constant dense<0.000000e+00> : vector<64x48xf32>
    %173 = tpu.matmul %170, %172, %cst_120 {dimension_numbers = #tpu.dot_dimension_numbers<[1], [0], [0], [1], [0, 0, 1, 1], [], []>} : vector<64x128xbf16>, vector<128x48xbf16>, vector<64x48xf32> -> vector<64x48xf32>
    %174 = arith.addf %165, %173 : vector<64x48xf32>
    %c24_121 = arith.constant 24 : index
    %c0_122 = arith.constant 0 : index
    %175 = vector.load %arg16[%c24_121, %c0_122] : memref<96x128xbf16, #tpu.memory_space<vmem>>, vector<64x128xbf16>
    %c7_123 = arith.constant 7 : index
    %c0_124 = arith.constant 0 : index
    %c0_125 = arith.constant 0 : index
    %176 = vector.load %arg6[%c7_123, %c0_124, %c0_125] : memref<9x128x48xbf16, #tpu.memory_space<vmem>>, vector<1x128x48xbf16>
    %177 = vector.shape_cast %176 : vector<1x128x48xbf16> to vector<128x48xbf16>
    %cst_126 = arith.constant dense<0.000000e+00> : vector<64x48xf32>
    %178 = tpu.matmul %175, %177, %cst_126 {dimension_numbers = #tpu.dot_dimension_numbers<[1], [0], [0], [1], [0, 0, 1, 1], [], []>} : vector<64x128xbf16>, vector<128x48xbf16>, vector<64x48xf32> -> vector<64x48xf32>
    %179 = arith.addf %174, %178 : vector<64x48xf32>
    %c25_127 = arith.constant 25 : index
    %c0_128 = arith.constant 0 : index
    %180 = vector.load %arg16[%c25_127, %c0_128] : memref<96x128xbf16, #tpu.memory_space<vmem>>, vector<64x128xbf16>
    %cst_129 = arith.constant 0.000000e+00 : bf16
    %181 = vector.broadcast %cst_129 : bf16 to vector<64x128xbf16>
    %182 = vector.shape_cast %26 : vector<64x1xi1> to vector<64x1xi1>
    %183 = vector.broadcast %182 : vector<64x1xi1> to vector<64x128xi1>
    %184 = arith.select %183, %180, %181 : vector<64x128xi1>, vector<64x128xbf16>
    %c8_130 = arith.constant 8 : index
    %c0_131 = arith.constant 0 : index
    %c0_132 = arith.constant 0 : index
    %185 = vector.load %arg6[%c8_130, %c0_131, %c0_132] : memref<9x128x48xbf16, #tpu.memory_space<vmem>>, vector<1x128x48xbf16>
    %186 = vector.shape_cast %185 : vector<1x128x48xbf16> to vector<128x48xbf16>
    %cst_133 = arith.constant dense<0.000000e+00> : vector<64x48xf32>
    %187 = tpu.matmul %184, %186, %cst_133 {dimension_numbers = #tpu.dot_dimension_numbers<[1], [0], [0], [1], [0, 0, 1, 1], [], []>} : vector<64x128xbf16>, vector<128x48xbf16>, vector<64x48xf32> -> vector<64x48xf32>
    %188 = arith.addf %179, %187 : vector<64x48xf32>
    %c0_134 = arith.constant 0 : index
    %c0_135 = arith.constant 0 : index
    %189 = vector.load %arg7[%c0_134, %c0_135] : memref<1x48xf32, #tpu.memory_space<vmem>>, vector<1x48xf32>
    %190 = vector.broadcast %189 : vector<1x48xf32> to vector<64x48xf32>
    %191 = arith.addf %188, %190 : vector<64x48xf32>
    %cst_136 = arith.constant 0.000000e+00 : f32
    %192 = vector.broadcast %cst_136 : f32 to vector<64x48xf32>
    %193 = arith.maximumf %191, %192 : vector<64x48xf32>
    %194 = arith.truncf %193 : vector<64x48xf32> to vector<64x48xbf16>
    %c16_137 = arith.constant 16 : index
    %c0_138 = arith.constant 0 : index
    %195 = vector.load %arg17[%c16_137, %c0_138] : memref<96x128xbf16, #tpu.memory_space<vmem>>, vector<64x48xbf16>
    tpu.vector_store %arg17[%c16_137, %c0_138], %194 {strides = array<i32>} : memref<96x128xbf16, #tpu.memory_space<vmem>>, vector<64x48xbf16>,
    %cst_139 = arith.constant 0.000000e+00 : f32
    %196 = vector.broadcast %cst_139 : f32 to vector<64x64xf32>
    %c7_140 = arith.constant 7 : index
    %c0_141 = arith.constant 0 : index
    %197 = vector.load %arg17[%c7_140, %c0_141] : memref<96x128xbf16, #tpu.memory_space<vmem>>, vector<64x128xbf16>
    %cst_142 = arith.constant 0.000000e+00 : bf16
    %198 = vector.broadcast %cst_142 : bf16 to vector<64x128xbf16>
    %199 = vector.shape_cast %24 : vector<64x1xi1> to vector<64x1xi1>
    %200 = vector.broadcast %199 : vector<64x1xi1> to vector<64x128xi1>
    %201 = arith.select %200, %197, %198 : vector<64x128xi1>, vector<64x128xbf16>
    %c0_143 = arith.constant 0 : index
    %c0_144 = arith.constant 0 : index
    %c0_145 = arith.constant 0 : index
    %202 = vector.load %arg8[%c0_143, %c0_144, %c0_145] : memref<9x128x64xbf16, #tpu.memory_space<vmem>>, vector<1x128x64xbf16>
    %203 = vector.shape_cast %202 : vector<1x128x64xbf16> to vector<128x64xbf16>
    %cst_146 = arith.constant dense<0.000000e+00> : vector<64x64xf32>
    %204 = tpu.matmul %201, %203, %cst_146 {dimension_numbers = #tpu.dot_dimension_numbers<[1], [0], [0], [1], [0, 0, 1, 1], [], []>} : vector<64x128xbf16>, vector<128x64xbf16>, vector<64x64xf32> -> vector<64x64xf32>
    %205 = arith.addf %196, %204 : vector<64x64xf32>
    %c8_147 = arith.constant 8 : index
    %c0_148 = arith.constant 0 : index
    %206 = vector.load %arg17[%c8_147, %c0_148] : memref<96x128xbf16, #tpu.memory_space<vmem>>, vector<64x128xbf16>
    %c1_149 = arith.constant 1 : index
    %c0_150 = arith.constant 0 : index
    %c0_151 = arith.constant 0 : index
    %207 = vector.load %arg8[%c1_149, %c0_150, %c0_151] : memref<9x128x64xbf16, #tpu.memory_space<vmem>>, vector<1x128x64xbf16>
    %208 = vector.shape_cast %207 : vector<1x128x64xbf16> to vector<128x64xbf16>
    %cst_152 = arith.constant dense<0.000000e+00> : vector<64x64xf32>
    %209 = tpu.matmul %206, %208, %cst_152 {dimension_numbers = #tpu.dot_dimension_numbers<[1], [0], [0], [1], [0, 0, 1, 1], [], []>} : vector<64x128xbf16>, vector<128x64xbf16>, vector<64x64xf32> -> vector<64x64xf32>
    %210 = arith.addf %205, %209 : vector<64x64xf32>
    %c9_153 = arith.constant 9 : index
    %c0_154 = arith.constant 0 : index
    %211 = vector.load %arg17[%c9_153, %c0_154] : memref<96x128xbf16, #tpu.memory_space<vmem>>, vector<64x128xbf16>
    %cst_155 = arith.constant 0.000000e+00 : bf16
    %212 = vector.broadcast %cst_155 : bf16 to vector<64x128xbf16>
    %213 = vector.shape_cast %26 : vector<64x1xi1> to vector<64x1xi1>
    %214 = vector.broadcast %213 : vector<64x1xi1> to vector<64x128xi1>
    %215 = arith.select %214, %211, %212 : vector<64x128xi1>, vector<64x128xbf16>
    %c2_156 = arith.constant 2 : index
    %c0_157 = arith.constant 0 : index
    %c0_158 = arith.constant 0 : index
    %216 = vector.load %arg8[%c2_156, %c0_157, %c0_158] : memref<9x128x64xbf16, #tpu.memory_space<vmem>>, vector<1x128x64xbf16>
    %217 = vector.shape_cast %216 : vector<1x128x64xbf16> to vector<128x64xbf16>
    %cst_159 = arith.constant dense<0.000000e+00> : vector<64x64xf32>
    %218 = tpu.matmul %215, %217, %cst_159 {dimension_numbers = #tpu.dot_dimension_numbers<[1], [0], [0], [1], [0, 0, 1, 1], [], []>} : vector<64x128xbf16>, vector<128x64xbf16>, vector<64x64xf32> -> vector<64x64xf32>
    %219 = arith.addf %210, %218 : vector<64x64xf32>
    %c15_160 = arith.constant 15 : index
    %c0_161 = arith.constant 0 : index
    %220 = vector.load %arg17[%c15_160, %c0_161] : memref<96x128xbf16, #tpu.memory_space<vmem>>, vector<64x128xbf16>
    %cst_162 = arith.constant 0.000000e+00 : bf16
    %221 = vector.broadcast %cst_162 : bf16 to vector<64x128xbf16>
    %222 = vector.shape_cast %24 : vector<64x1xi1> to vector<64x1xi1>
    %223 = vector.broadcast %222 : vector<64x1xi1> to vector<64x128xi1>
    %224 = arith.select %223, %220, %221 : vector<64x128xi1>, vector<64x128xbf16>
    %c3_163 = arith.constant 3 : index
    %c0_164 = arith.constant 0 : index
    %c0_165 = arith.constant 0 : index
    %225 = vector.load %arg8[%c3_163, %c0_164, %c0_165] : memref<9x128x64xbf16, #tpu.memory_space<vmem>>, vector<1x128x64xbf16>
    %226 = vector.shape_cast %225 : vector<1x128x64xbf16> to vector<128x64xbf16>
    %cst_166 = arith.constant dense<0.000000e+00> : vector<64x64xf32>
    %227 = tpu.matmul %224, %226, %cst_166 {dimension_numbers = #tpu.dot_dimension_numbers<[1], [0], [0], [1], [0, 0, 1, 1], [], []>} : vector<64x128xbf16>, vector<128x64xbf16>, vector<64x64xf32> -> vector<64x64xf32>
    %228 = arith.addf %219, %227 : vector<64x64xf32>
    %c16_167 = arith.constant 16 : index
    %c0_168 = arith.constant 0 : index
    %229 = vector.load %arg17[%c16_167, %c0_168] : memref<96x128xbf16, #tpu.memory_space<vmem>>, vector<64x128xbf16>
    %c4_169 = arith.constant 4 : index
    %c0_170 = arith.constant 0 : index
    %c0_171 = arith.constant 0 : index
    %230 = vector.load %arg8[%c4_169, %c0_170, %c0_171] : memref<9x128x64xbf16, #tpu.memory_space<vmem>>, vector<1x128x64xbf16>
    %231 = vector.shape_cast %230 : vector<1x128x64xbf16> to vector<128x64xbf16>
    %cst_172 = arith.constant dense<0.000000e+00> : vector<64x64xf32>
    %232 = tpu.matmul %229, %231, %cst_172 {dimension_numbers = #tpu.dot_dimension_numbers<[1], [0], [0], [1], [0, 0, 1, 1], [], []>} : vector<64x128xbf16>, vector<128x64xbf16>, vector<64x64xf32> -> vector<64x64xf32>
    %233 = arith.addf %228, %232 : vector<64x64xf32>
    %c17_173 = arith.constant 17 : index
    %c0_174 = arith.constant 0 : index
    %234 = vector.load %arg17[%c17_173, %c0_174] : memref<96x128xbf16, #tpu.memory_space<vmem>>, vector<64x128xbf16>
    %cst_175 = arith.constant 0.000000e+00 : bf16
    %235 = vector.broadcast %cst_175 : bf16 to vector<64x128xbf16>
    %236 = vector.shape_cast %26 : vector<64x1xi1> to vector<64x1xi1>
    %237 = vector.broadcast %236 : vector<64x1xi1> to vector<64x128xi1>
    %238 = arith.select %237, %234, %235 : vector<64x128xi1>, vector<64x128xbf16>
    %c5_176 = arith.constant 5 : index
    %c0_177 = arith.constant 0 : index
    %c0_178 = arith.constant 0 : index
    %239 = vector.load %arg8[%c5_176, %c0_177, %c0_178] : memref<9x128x64xbf16, #tpu.memory_space<vmem>>, vector<1x128x64xbf16>
    %240 = vector.shape_cast %239 : vector<1x128x64xbf16> to vector<128x64xbf16>
    %cst_179 = arith.constant dense<0.000000e+00> : vector<64x64xf32>
    %241 = tpu.matmul %238, %240, %cst_179 {dimension_numbers = #tpu.dot_dimension_numbers<[1], [0], [0], [1], [0, 0, 1, 1], [], []>} : vector<64x128xbf16>, vector<128x64xbf16>, vector<64x64xf32> -> vector<64x64xf32>
    %242 = arith.addf %233, %241 : vector<64x64xf32>
    %c23_180 = arith.constant 23 : index
    %c0_181 = arith.constant 0 : index
    %243 = vector.load %arg17[%c23_180, %c0_181] : memref<96x128xbf16, #tpu.memory_space<vmem>>, vector<64x128xbf16>
    %cst_182 = arith.constant 0.000000e+00 : bf16
    %244 = vector.broadcast %cst_182 : bf16 to vector<64x128xbf16>
    %245 = vector.shape_cast %24 : vector<64x1xi1> to vector<64x1xi1>
    %246 = vector.broadcast %245 : vector<64x1xi1> to vector<64x128xi1>
    %247 = arith.select %246, %243, %244 : vector<64x128xi1>, vector<64x128xbf16>
    %c6_183 = arith.constant 6 : index
    %c0_184 = arith.constant 0 : index
    %c0_185 = arith.constant 0 : index
    %248 = vector.load %arg8[%c6_183, %c0_184, %c0_185] : memref<9x128x64xbf16, #tpu.memory_space<vmem>>, vector<1x128x64xbf16>
    %249 = vector.shape_cast %248 : vector<1x128x64xbf16> to vector<128x64xbf16>
    %cst_186 = arith.constant dense<0.000000e+00> : vector<64x64xf32>
    %250 = tpu.matmul %247, %249, %cst_186 {dimension_numbers = #tpu.dot_dimension_numbers<[1], [0], [0], [1], [0, 0, 1, 1], [], []>} : vector<64x128xbf16>, vector<128x64xbf16>, vector<64x64xf32> -> vector<64x64xf32>
    %251 = arith.addf %242, %250 : vector<64x64xf32>
    %c24_187 = arith.constant 24 : index
    %c0_188 = arith.constant 0 : index
    %252 = vector.load %arg17[%c24_187, %c0_188] : memref<96x128xbf16, #tpu.memory_space<vmem>>, vector<64x128xbf16>
    %c7_189 = arith.constant 7 : index
    %c0_190 = arith.constant 0 : index
    %c0_191 = arith.constant 0 : index
    %253 = vector.load %arg8[%c7_189, %c0_190, %c0_191] : memref<9x128x64xbf16, #tpu.memory_space<vmem>>, vector<1x128x64xbf16>
    %254 = vector.shape_cast %253 : vector<1x128x64xbf16> to vector<128x64xbf16>
    %cst_192 = arith.constant dense<0.000000e+00> : vector<64x64xf32>
    %255 = tpu.matmul %252, %254, %cst_192 {dimension_numbers = #tpu.dot_dimension_numbers<[1], [0], [0], [1], [0, 0, 1, 1], [], []>} : vector<64x128xbf16>, vector<128x64xbf16>, vector<64x64xf32> -> vector<64x64xf32>
    %256 = arith.addf %251, %255 : vector<64x64xf32>
    %c25_193 = arith.constant 25 : index
    %c0_194 = arith.constant 0 : index
    %257 = vector.load %arg17[%c25_193, %c0_194] : memref<96x128xbf16, #tpu.memory_space<vmem>>, vector<64x128xbf16>
    %cst_195 = arith.constant 0.000000e+00 : bf16
    %258 = vector.broadcast %cst_195 : bf16 to vector<64x128xbf16>
    %259 = vector.shape_cast %26 : vector<64x1xi1> to vector<64x1xi1>
    %260 = vector.broadcast %259 : vector<64x1xi1> to vector<64x128xi1>
    %261 = arith.select %260, %257, %258 : vector<64x128xi1>, vector<64x128xbf16>
    %c8_196 = arith.constant 8 : index
    %c0_197 = arith.constant 0 : index
    %c0_198 = arith.constant 0 : index
    %262 = vector.load %arg8[%c8_196, %c0_197, %c0_198] : memref<9x128x64xbf16, #tpu.memory_space<vmem>>, vector<1x128x64xbf16>
    %263 = vector.shape_cast %262 : vector<1x128x64xbf16> to vector<128x64xbf16>
    %cst_199 = arith.constant dense<0.000000e+00> : vector<64x64xf32>
    %264 = tpu.matmul %261, %263, %cst_199 {dimension_numbers = #tpu.dot_dimension_numbers<[1], [0], [0], [1], [0, 0, 1, 1], [], []>} : vector<64x128xbf16>, vector<128x64xbf16>, vector<64x64xf32> -> vector<64x64xf32>
    %265 = arith.addf %256, %264 : vector<64x64xf32>
    %c0_200 = arith.constant 0 : index
    %c0_201 = arith.constant 0 : index
    %266 = vector.load %arg9[%c0_200, %c0_201] : memref<1x64xf32, #tpu.memory_space<vmem>>, vector<1x64xf32>
    %267 = vector.broadcast %266 : vector<1x64xf32> to vector<64x64xf32>
    %268 = arith.addf %265, %267 : vector<64x64xf32>
    %cst_202 = arith.constant 0.000000e+00 : f32
    %269 = vector.broadcast %cst_202 : f32 to vector<64x64xf32>
    %270 = arith.maximumf %268, %269 : vector<64x64xf32>
    %271 = arith.truncf %270 : vector<64x64xf32> to vector<64x64xbf16>
    %c0_203 = arith.constant 0 : index
    %c0_204 = arith.constant 0 : index
    %272 = vector.load %arg10[%c0_203, %c0_204] : memref<32x320xbf16, #tpu.memory_space<vmem>>, vector<32x320xbf16>
    %cst_205 = arith.constant dense<0.000000e+00> : vector<64x320xf32>
    %273 = tpu.matmul %38, %272, %cst_205 {dimension_numbers = #tpu.dot_dimension_numbers<[1], [0], [0], [1], [0, 0, 1, 1], [], []>} : vector<64x32xbf16>, vector<32x320xbf16>, vector<64x320xf32> -> vector<64x320xf32>
    %c0_206 = arith.constant 0 : index
    %c0_207 = arith.constant 0 : index
    %274 = vector.load %arg11[%c0_206, %c0_207] : memref<32x320xbf16, #tpu.memory_space<vmem>>, vector<32x320xbf16>
    %cst_208 = arith.constant dense<0.000000e+00> : vector<64x320xf32>
    %275 = tpu.matmul %116, %274, %cst_208 {dimension_numbers = #tpu.dot_dimension_numbers<[1], [0], [0], [1], [0, 0, 1, 1], [], []>} : vector<64x32xbf16>, vector<32x320xbf16>, vector<64x320xf32> -> vector<64x320xf32>
    %276 = arith.addf %273, %275 : vector<64x320xf32>
    %c0_209 = arith.constant 0 : index
    %c0_210 = arith.constant 0 : index
    %277 = vector.load %arg12[%c0_209, %c0_210] : memref<64x320xbf16, #tpu.memory_space<vmem>>, vector<64x320xbf16>
    %cst_211 = arith.constant dense<0.000000e+00> : vector<64x320xf32>
    %278 = tpu.matmul %271, %277, %cst_211 {dimension_numbers = #tpu.dot_dimension_numbers<[1], [0], [0], [1], [0, 0, 1, 1], [], []>} : vector<64x64xbf16>, vector<64x320xbf16>, vector<64x320xf32> -> vector<64x320xf32>
    %279 = arith.addf %276, %278 : vector<64x320xf32>
    %c0_212 = arith.constant 0 : index
    %c0_213 = arith.constant 0 : index
    %280 = vector.load %arg13[%c0_212, %c0_213] : memref<1x320xf32, #tpu.memory_space<vmem>>, vector<1x320xf32>
    %281 = vector.broadcast %280 : vector<1x320xf32> to vector<64x320xf32>
    %282 = arith.addf %279, %281 : vector<64x320xf32>
    %cst_214 = arith.constant 1.000000e+00 : f32
    %283 = vector.broadcast %cst_214 : f32 to vector<64x320xf32>
    %284 = arith.mulf %282, %283 : vector<64x320xf32>
    %c0_215 = arith.constant 0 : index
    %c0_216 = arith.constant 0 : index
    %c0_217 = arith.constant 0 : index
    %285 = vector.load %arg1[%c0_215, %c0_216, %c0_217] : memref<1x64x320xf32, #tpu.memory_space<vmem>>, vector<1x64x320xf32>
    %286 = vector.shape_cast %285 : vector<1x64x320xf32> to vector<64x320xf32>
    %287 = arith.addf %284, %286 : vector<64x320xf32>
    %cst_218 = arith.constant 0.000000e+00 : f32
    %288 = vector.broadcast %cst_218 : f32 to vector<64x320xf32>
    %289 = arith.maximumf %287, %288 : vector<64x320xf32>
    %c0_219 = arith.constant 0 : index
    %c0_220 = arith.constant 0 : index
    %c0_221 = arith.constant 0 : index
    %290 = vector.load %arg14[%c0_219, %c0_220, %c0_221] : memref<1x64x320xf32, #tpu.memory_space<vmem>>, vector<1x64x320xf32>
    %291 = vector.shape_cast %290 : vector<1x64x320xf32> to vector<64x320xf32>
    %292 = vector.shape_cast %289 : vector<64x320xf32> to vector<1x64x320xf32>
    tpu.vector_store %arg14[%c0_219, %c0_220, %c0_221], %292 {strides = array<i32>} : memref<1x64x320xf32, #tpu.memory_space<vmem>>, vector<1x64x320xf32>,
    return
  }
  func.func @transform_0(%arg0: i32) -> (i32, i32, i32) {
    %c0_i32 = arith.constant 0 : i32
    %c0_i32_0 = arith.constant 0 : i32
    %c0_i32_1 = arith.constant 0 : i32
    return %arg0, %c0_i32, %c0_i32_0 : i32, i32, i32
  }
  func.func @transform_1(%arg0: i32) -> (i32, i32) {
    %c0_i32 = arith.constant 0 : i32
    %c0_i32_0 = arith.constant 0 : i32
    %c0_i32_1 = arith.constant 0 : i32
    return %c0_i32, %c0_i32_0 : i32, i32
  }
  func.func @transform_2(%arg0: i32) -> (i32, i32) {
    %c0_i32 = arith.constant 0 : i32
    %c0_i32_0 = arith.constant 0 : i32
    %c0_i32_1 = arith.constant 0 : i32
    return %c0_i32, %c0_i32_0 : i32, i32
  }
  func.func @transform_3(%arg0: i32) -> (i32, i32, i32) {
    %c0_i32 = arith.constant 0 : i32
    %c0_i32_0 = arith.constant 0 : i32
    %c0_i32_1 = arith.constant 0 : i32
    %c0_i32_2 = arith.constant 0 : i32
    return %c0_i32, %c0_i32_0, %c0_i32_1 : i32, i32, i32
  }
  func.func @transform_4(%arg0: i32) -> (i32, i32) {
    %c0_i32 = arith.constant 0 : i32
    %c0_i32_0 = arith.constant 0 : i32
    %c0_i32_1 = arith.constant 0 : i32
    return %c0_i32, %c0_i32_0 : i32, i32
  }
  func.func @transform_5(%arg0: i32) -> (i32, i32, i32) {
    %c0_i32 = arith.constant 0 : i32
    %c0_i32_0 = arith.constant 0 : i32
    %c0_i32_1 = arith.constant 0 : i32
    %c0_i32_2 = arith.constant 0 : i32
    return %c0_i32, %c0_i32_0, %c0_i32_1 : i32, i32, i32
  }
  func.func @transform_6(%arg0: i32) -> (i32, i32) {
    %c0_i32 = arith.constant 0 : i32
    %c0_i32_0 = arith.constant 0 : i32
    %c0_i32_1 = arith.constant 0 : i32
    return %c0_i32, %c0_i32_0 : i32, i32
  }
  func.func @transform_7(%arg0: i32) -> (i32, i32, i32) {
    %c0_i32 = arith.constant 0 : i32
    %c0_i32_0 = arith.constant 0 : i32
    %c0_i32_1 = arith.constant 0 : i32
    %c0_i32_2 = arith.constant 0 : i32
    return %c0_i32, %c0_i32_0, %c0_i32_1 : i32, i32, i32
  }
  func.func @transform_8(%arg0: i32) -> (i32, i32) {
    %c0_i32 = arith.constant 0 : i32
    %c0_i32_0 = arith.constant 0 : i32
    %c0_i32_1 = arith.constant 0 : i32
    return %c0_i32, %c0_i32_0 : i32, i32
  }
  func.func @transform_9(%arg0: i32) -> (i32, i32) {
    %c0_i32 = arith.constant 0 : i32
    %c0_i32_0 = arith.constant 0 : i32
    %c0_i32_1 = arith.constant 0 : i32
    return %c0_i32, %c0_i32_0 : i32, i32
  }
  func.func @transform_10(%arg0: i32) -> (i32, i32) {
    %c0_i32 = arith.constant 0 : i32
    %c0_i32_0 = arith.constant 0 : i32
    %c0_i32_1 = arith.constant 0 : i32
    return %c0_i32, %c0_i32_0 : i32, i32
  }
  func.func @transform_11(%arg0: i32) -> (i32, i32) {
    %c0_i32 = arith.constant 0 : i32
    %c0_i32_0 = arith.constant 0 : i32
    %c0_i32_1 = arith.constant 0 : i32
    return %c0_i32, %c0_i32_0 : i32, i32
  }
  func.func @transform_12(%arg0: i32) -> (i32, i32) {
    %c0_i32 = arith.constant 0 : i32
    %c0_i32_0 = arith.constant 0 : i32
    %c0_i32_1 = arith.constant 0 : i32
    return %c0_i32, %c0_i32_0 : i32, i32
  }
  func.func @transform_13(%arg0: i32) -> (i32, i32, i32) {
    %c0_i32 = arith.constant 0 : i32
    %c0_i32_0 = arith.constant 0 : i32
    %c0_i32_1 = arith.constant 0 : i32
    return %arg0, %c0_i32, %c0_i32_0 : i32, i32, i32
  }
}

</mosaic_0001>

<llo_original>
// kernel: tpu_custom_call.1
$region0: #{tpu_custom_call.1}
  #allocation0 [shape = 'u32[]', space=smem, size = 0x4, offset = 0x4, fixed_abs, tag = 'smem constant byte address 0x4 - core index']
  #allocation1 [shape = 'u32[72,128]{1,0:T(1,128)}', space=vmem, size = 0x9000, scoped, tag = 'internal scratch']
  #allocation2 [shape = 'bf16[96,128]{1,0:T(8,128)(2,1)}', space=vmem, size = 0x6000, scoped, tag = 'scratch operand']
  #allocation3 [shape = 'bf16[96,128]{1,0:T(8,128)(2,1)}', space=vmem, size = 0x6000, scoped, tag = 'scratch operand']
  #allocation4 [shape = 'bf16[96,128]{1,0:T(8,128)(2,1)}', space=vmem, size = 0x6000, scoped, tag = 'scratch operand']
  %s0 = inlined_call_operand.vmem [shape: f32[2,64,320], index: 0, kind: input, shape index: {}]
  %s1 = inlined_call_operand.vmem [shape: bf16[320,96], index: 1, kind: input, shape index: {}]
  %s2 = inlined_call_operand.vmem [shape: f32[1,96], index: 2, kind: input, shape index: {}]
  %s3 = inlined_call_operand.vmem [shape: bf16[9,128,32], index: 3, kind: input, shape index: {}]
  %s4 = inlined_call_operand.vmem [shape: f32[1,32], index: 4, kind: input, shape index: {}]
  %s5 = inlined_call_operand.vmem [shape: bf16[9,128,48], index: 5, kind: input, shape index: {}]
  %s6 = inlined_call_operand.vmem [shape: f32[1,48], index: 6, kind: input, shape index: {}]
  %s7 = inlined_call_operand.vmem [shape: bf16[9,128,64], index: 7, kind: input, shape index: {}]
  %s8 = inlined_call_operand.vmem [shape: f32[1,64], index: 8, kind: input, shape index: {}]
  %s9 = inlined_call_operand.vmem [shape: bf16[32,320], index: 9, kind: input, shape index: {}]
  %s10 = inlined_call_operand.vmem [shape: bf16[32,320], index: 10, kind: input, shape index: {}]
  %s11 = inlined_call_operand.vmem [shape: bf16[64,320], index: 11, kind: input, shape index: {}]
  %s12 = inlined_call_operand.vmem [shape: f32[1,320], index: 12, kind: input, shape index: {}]
  %s13 = inlined_call_operand.hbm [shape: f32[2,64,320], index: 13, kind: output, shape index: {}]
  %s14 = sld [smem:[#allocation0]]
  $region85: #{tpu_custom_call.1} parent=0
    _
  %s16 = ssub.s32 1, %s14
  %s17 = scalar_select 0, %s16, %s14
  $region1: #{tpu_custom_call.1} parent=0
    #allocation5 [shape = 'u8[196608]{0}', space=vmem, size = 0x30000, scoped, tag = 'output window, operand 0']
    #allocation6 [shape = 's32[2]{0}', space=sflag, size = 0x8, scoped, tag = 'scoped memory for tpu_custom_call.1']
    %18 = vsyncpa [#allocation6], 0
    %s19 = scalar_lea.sflag [#allocation6], 1
    %20 = vsyncpa %s19, 0
    loop: start=0, step=1, limit=4
    $region2: #{tpu_custom_call.1} parent=1 // loop_pre_header
      _
    $region3: #{tpu_custom_call.1} parent=1 // loop_header
      %s22 = sphi 0, %s26
      %p23 = scmp.ge.s32.totalorder %s22, 4
      %s32 = sphi 0, %s34
      %s35 = sphi 0, %s32
      %s36 = sphi 0, %s35
      %s52 = sphi 0, %s36
      %s56 = sphi 0, %s56
      %s58 = sphi 0, %s56
      %s59 = sphi 0, %s58
      %s73 = sphi 0, %s59
      %s77 = sphi 0, %s77
      %s79 = sphi 0, %s77
      %s80 = sphi 0, %s79
      %s94 = sphi 0, %s80
      %s98 = sphi 0, %s98
      %s100 = sphi 0, %s98
      %s101 = sphi 0, %s100
      %s115 = sphi 0, %s101
      %s119 = sphi 0, %s119
      %s121 = sphi 0, %s119
      %s122 = sphi 0, %s121
      %s136 = sphi 0, %s122
      %s140 = sphi 0, %s140
      %s142 = sphi 0, %s140
      %s143 = sphi 0, %s142
      %s157 = sphi 0, %s143
      %s161 = sphi 0, %s161
      %s163 = sphi 0, %s161
      %s164 = sphi 0, %s163
      %s178 = sphi 0, %s164
      %s182 = sphi 0, %s182
      %s184 = sphi 0, %s182
      %s185 = sphi 0, %s184
      %s199 = sphi 0, %s185
      %s203 = sphi 0, %s203
      %s205 = sphi 0, %s203
      %s206 = sphi 0, %s205
      %s220 = sphi 0, %s206
      %s224 = sphi 0, %s224
      %s226 = sphi 0, %s224
      %s227 = sphi 0, %s226
      %s241 = sphi 0, %s227
      %s245 = sphi 0, %s245
      %s247 = sphi 0, %s245
      %s248 = sphi 0, %s247
      %s262 = sphi 0, %s248
      %s266 = sphi 0, %s266
      %s268 = sphi 0, %s266
      %s269 = sphi 0, %s268
      %s283 = sphi 0, %s269
      %s287 = sphi 0, %s287
      %s289 = sphi 0, %s287
      %s290 = sphi 0, %s289
      %s304 = sphi 0, %s290
      %s310 = sphi 0, %s312
      %s313 = sphi 0, %s310
      %s314 = sphi 0, %s313
      %s330 = sphi 0, %s314
    $region4: #{tpu_custom_call.1} parent=1 // loop_header_branch
      %25 = sbr.rel (%p23) target = $region8
    $region5: #{tpu_custom_call.1} parent=1 // loop_body
      %s27 = ssub.s32 %s22, 1
      %s28 = ssub.s32 %s22, 2
      %s29 = sadd.s32 %s22, 1
      %s30 = ssub.s32 %s22, %s29
      %p31 = scmp.eq.s32.totalorder %s30, 0
      %s33 = sadd.s32 %s32, 1
      %s34 = scalar_select %p31, %s32, %s33
      %p37 = pneg %p31
      %p38 = scmp.eq.s32.totalorder %s22, 1
      %p39 = por %p37, %p38
      %p40 = scmp.ne.s32.totalorder %s32, %s35
      %p41 = scmp.eq.s32.totalorder %s22, 0
      %p42 = por %p40, %p41
      %p43 = scmp.ne.s32.totalorder %s32, %s35
      %p44 = scmp.eq.s32.totalorder %s27, 1
      %p45 = por %p43, %p44
      %p46 = scmp.ne.s32.totalorder %s35, %s36
      %p47 = scmp.eq.s32.totalorder %s27, 0
      %p48 = por %p46, %p47
      %p49 = scmp.ne.s32.totalorder %s35, %s36
      %p50 = scmp.eq.s32.totalorder %s28, 1
      %p51 = por %p49, %p50
      %p53 = scmp.ne.s32.totalorder %s36, %s52
      %p54 = scmp.eq.s32.totalorder %s28, 0
      %p55 = por %p53, %p54
      %s57 = sadd.s32 %s56, 1
      %p60 = scmp.eq.s32.totalorder %s22, 1
      %p61 = scmp.ne.s32.totalorder %s56, %s58
      %p62 = scmp.eq.s32.totalorder %s22, 0
      %p63 = por %p61, %p62
      %p64 = scmp.ne.s32.totalorder %s56, %s58
      %p65 = scmp.eq.s32.totalorder %s27, 1
      %p66 = por %p64, %p65
      %p67 = scmp.ne.s32.totalorder %s58, %s59
      %p68 = scmp.eq.s32.totalorder %s27, 0
      %p69 = por %p67, %p68
      %p70 = scmp.ne.s32.totalorder %s58, %s59
      %p71 = scmp.eq.s32.totalorder %s28, 1
      %p72 = por %p70, %p71
      %p74 = scmp.ne.s32.totalorder %s59, %s73
      %p75 = scmp.eq.s32.totalorder %s28, 0
      %p76 = por %p74, %p75
      %s78 = sadd.s32 %s77, 1
      %p81 = scmp.eq.s32.totalorder %s22, 1
      %p82 = scmp.ne.s32.totalorder %s77, %s79
      %p83 = scmp.eq.s32.totalorder %s22, 0
      %p84 = por %p82, %p83
      %p85 = scmp.ne.s32.totalorder %s77, %s79
      %p86 = scmp.eq.s32.totalorder %s27, 1
      %p87 = por %p85, %p86
      %p88 = scmp.ne.s32.totalorder %s79, %s80
      %p89 = scmp.eq.s32.totalorder %s27, 0
      %p90 = por %p88, %p89
      %p91 = scmp.ne.s32.totalorder %s79, %s80
      %p92 = scmp.eq.s32.totalorder %s28, 1
      %p93 = por %p91, %p92
      %p95 = scmp.ne.s32.totalorder %s80, %s94
      %p96 = scmp.eq.s32.totalorder %s28, 0
      %p97 = por %p95, %p96
      %s99 = sadd.s32 %s98, 1
      %p102 = scmp.eq.s32.totalorder %s22, 1
      %p103 = scmp.ne.s32.totalorder %s98, %s100
      %p104 = scmp.eq.s32.totalorder %s22, 0
      %p105 = por %p103, %p104
      %p106 = scmp.ne.s32.totalorder %s98, %s100
      %p107 = scmp.eq.s32.totalorder %s27, 1
      %p108 = por %p106, %p107
      %p109 = scmp.ne.s32.totalorder %s100, %s101
      %p110 = scmp.eq.s32.totalorder %s27, 0
      %p111 = por %p109, %p110
      %p112 = scmp.ne.s32.totalorder %s100, %s101
      %p113 = scmp.eq.s32.totalorder %s28, 1
      %p114 = por %p112, %p113
      %p116 = scmp.ne.s32.totalorder %s101, %s115
      %p117 = scmp.eq.s32.totalorder %s28, 0
      %p118 = por %p116, %p117
      %s120 = sadd.s32 %s119, 1
      %p123 = scmp.eq.s32.totalorder %s22, 1
      %p124 = scmp.ne.s32.totalorder %s119, %s121
      %p125 = scmp.eq.s32.totalorder %s22, 0
      %p126 = por %p124, %p125
      %p127 = scmp.ne.s32.totalorder %s119, %s121
      %p128 = scmp.eq.s32.totalorder %s27, 1
      %p129 = por %p127, %p128
      %p130 = scmp.ne.s32.totalorder %s121, %s122
      %p131 = scmp.eq.s32.totalorder %s27, 0
      %p132 = por %p130, %p131
      %p133 = scmp.ne.s32.totalorder %s121, %s122
      %p134 = scmp.eq.s32.totalorder %s28, 1
      %p135 = por %p133, %p134
      %p137 = scmp.ne.s32.totalorder %s122, %s136
      %p138 = scmp.eq.s32.totalorder %s28, 0
      %p139 = por %p137, %p138
      %s141 = sadd.s32 %s140, 1
      %p144 = scmp.eq.s32.totalorder %s22, 1
      %p145 = scmp.ne.s32.totalorder %s140, %s142
      %p146 = scmp.eq.s32.totalorder %s22, 0
      %p147 = por %p145, %p146
      %p148 = scmp.ne.s32.totalorder %s140, %s142
      %p149 = scmp.eq.s32.totalorder %s27, 1
      %p150 = por %p148, %p149
      %p151 = scmp.ne.s32.totalorder %s142, %s143
      %p152 = scmp.eq.s32.totalorder %s27, 0
      %p153 = por %p151, %p152
      %p154 = scmp.ne.s32.totalorder %s142, %s143
      %p155 = scmp.eq.s32.totalorder %s28, 1
      %p156 = por %p154, %p155
      %p158 = scmp.ne.s32.totalorder %s143, %s157
      %p159 = scmp.eq.s32.totalorder %s28, 0
      %p160 = por %p158, %p159
      %s162 = sadd.s32 %s161, 1
      %p165 = scmp.eq.s32.totalorder %s22, 1
      %p166 = scmp.ne.s32.totalorder %s161, %s163
      %p167 = scmp.eq.s32.totalorder %s22, 0
      %p168 = por %p166, %p167
      %p169 = scmp.ne.s32.totalorder %s161, %s163
      %p170 = scmp.eq.s32.totalorder %s27, 1
      %p171 = por %p169, %p170
      %p172 = scmp.ne.s32.totalorder %s163, %s164
      %p173 = scmp.eq.s32.totalorder %s27, 0
      %p174 = por %p172, %p173
      %p175 = scmp.ne.s32.totalorder %s163, %s164
      %p176 = scmp.eq.s32.totalorder %s28, 1
      %p177 = por %p175, %p176
      %p179 = scmp.ne.s32.totalorder %s164, %s178
      %p180 = scmp.eq.s32.totalorder %s28, 0
      %p181 = por %p179, %p180
      %s183 = sadd.s32 %s182, 1
      %p186 = scmp.eq.s32.totalorder %s22, 1
      %p187 = scmp.ne.s32.totalorder %s182, %s184
      %p188 = scmp.eq.s32.totalorder %s22, 0
      %p189 = por %p187, %p188
      %p190 = scmp.ne.s32.totalorder %s182, %s184
      %p191 = scmp.eq.s32.totalorder %s27, 1
      %p192 = por %p190, %p191
      %p193 = scmp.ne.s32.totalorder %s184, %s185
      %p194 = scmp.eq.s32.totalorder %s27, 0
      %p195 = por %p193, %p194
      %p196 = scmp.ne.s32.totalorder %s184, %s185
      %p197 = scmp.eq.s32.totalorder %s28, 1
      %p198 = por %p196, %p197
      %p200 = scmp.ne.s32.totalorder %s185, %s199
      %p201 = scmp.eq.s32.totalorder %s28, 0
      %p202 = por %p200, %p201
      %s204 = sadd.s32 %s203, 1
      %p207 = scmp.eq.s32.totalorder %s22, 1
      %p208 = scmp.ne.s32.totalorder %s203, %s205
      %p209 = scmp.eq.s32.totalorder %s22, 0
      %p210 = por %p208, %p209
      %p211 = scmp.ne.s32.totalorder %s203, %s205
      %p212 = scmp.eq.s32.totalorder %s27, 1
      %p213 = por %p211, %p212
      %p214 = scmp.ne.s32.totalorder %s205, %s206
      %p215 = scmp.eq.s32.totalorder %s27, 0
      %p216 = por %p214, %p215
      %p217 = scmp.ne.s32.totalorder %s205, %s206
      %p218 = scmp.eq.s32.totalorder %s28, 1
      %p219 = por %p217, %p218
      %p221 = scmp.ne.s32.totalorder %s206, %s220
      %p222 = scmp.eq.s32.totalorder %s28, 0
      %p223 = por %p221, %p222
      %s225 = sadd.s32 %s224, 1
      %p228 = scmp.eq.s32.totalorder %s22, 1
      %p229 = scmp.ne.s32.totalorder %s224, %s226
      %p230 = scmp.eq.s32.totalorder %s22, 0
      %p231 = por %p229, %p230
      %p232 = scmp.ne.s32.totalorder %s224, %s226
      %p233 = scmp.eq.s32.totalorder %s27, 1
      %p234 = por %p232, %p233
      %p235 = scmp.ne.s32.totalorder %s226, %s227
      %p236 = scmp.eq.s32.totalorder %s27, 0
      %p237 = por %p235, %p236
      %p238 = scmp.ne.s32.totalorder %s226, %s227
      %p239 = scmp.eq.s32.totalorder %s28, 1
      %p240 = por %p238, %p239
      %p242 = scmp.ne.s32.totalorder %s227, %s241
      %p243 = scmp.eq.s32.totalorder %s28, 0
      %p244 = por %p242, %p243
      %s246 = sadd.s32 %s245, 1
      %p249 = scmp.eq.s32.totalorder %s22, 1
      %p250 = scmp.ne.s32.totalorder %s245, %s247
      %p251 = scmp.eq.s32.totalorder %s22, 0
      %p252 = por %p250, %p251
      %p253 = scmp.ne.s32.totalorder %s245, %s247
      %p254 = scmp.eq.s32.totalorder %s27, 1
      %p255 = por %p253, %p254
      %p256 = scmp.ne.s32.totalorder %s247, %s248
      %p257 = scmp.eq.s32.totalorder %s27, 0
      %p258 = por %p256, %p257
      %p259 = scmp.ne.s32.totalorder %s247, %s248
      %p260 = scmp.eq.s32.totalorder %s28, 1
      %p261 = por %p259, %p260
      %p263 = scmp.ne.s32.totalorder %s248, %s262
      %p264 = scmp.eq.s32.totalorder %s28, 0
      %p265 = por %p263, %p264
      %s267 = sadd.s32 %s266, 1
      %p270 = scmp.eq.s32.totalorder %s22, 1
      %p271 = scmp.ne.s32.totalorder %s266, %s268
      %p272 = scmp.eq.s32.totalorder %s22, 0
      %p273 = por %p271, %p272
      %p274 = scmp.ne.s32.totalorder %s266, %s268
      %p275 = scmp.eq.s32.totalorder %s27, 1
      %p276 = por %p274, %p275
      %p277 = scmp.ne.s32.totalorder %s268, %s269
      %p278 = scmp.eq.s32.totalorder %s27, 0
      %p279 = por %p277, %p278
      %p280 = scmp.ne.s32.totalorder %s268, %s269
      %p281 = scmp.eq.s32.totalorder %s28, 1
      %p282 = por %p280, %p281
      %p284 = scmp.ne.s32.totalorder %s269, %s283
      %p285 = scmp.eq.s32.totalorder %s28, 0
      %p286 = por %p284, %p285
      %s288 = sadd.s32 %s287, 1
      %p291 = scmp.eq.s32.totalorder %s22, 1
      %p292 = scmp.ne.s32.totalorder %s287, %s289
      %p293 = scmp.eq.s32.totalorder %s22, 0
      %p294 = por %p292, %p293
      %p295 = scmp.ne.s32.totalorder %s287, %s289
      %p296 = scmp.eq.s32.totalorder %s27, 1
      %p297 = por %p295, %p296
      %p298 = scmp.ne.s32.totalorder %s289, %s290
      %p299 = scmp.eq.s32.totalorder %s27, 0
      %p300 = por %p298, %p299
      %p301 = scmp.ne.s32.totalorder %s289, %s290
      %p302 = scmp.eq.s32.totalorder %s28, 1
      %p303 = por %p301, %p302
      %p305 = scmp.ne.s32.totalorder %s290, %s304
      %p306 = scmp.eq.s32.totalorder %s28, 0
      %p307 = por %p305, %p306
      %s308 = ssub.s32 %s22, %s29
      %p309 = scmp.eq.s32.totalorder %s308, 0
      %s311 = sadd.s32 %s310, 1
      %s312 = scalar_select %p309, %s310, %s311
      %p315 = pneg %p309
      %p316 = scmp.eq.s32.totalorder %s22, 1
      %p317 = por %p315, %p316
      %p318 = scmp.ne.s32.totalorder %s310, %s313
      %p319 = scmp.eq.s32.totalorder %s22, 0
      %p320 = por %p318, %p319
      %p321 = scmp.ne.s32.totalorder %s310, %s313
      %p322 = scmp.eq.s32.totalorder %s27, 1
      %p323 = por %p321, %p322
      %p324 = scmp.ne.s32.totalorder %s313, %s314
      %p325 = scmp.eq.s32.totalorder %s27, 0
      %p326 = por %p324, %p325
      %p327 = scmp.ne.s32.totalorder %s313, %s314
      %p328 = scmp.eq.s32.totalorder %s28, 1
      %p329 = por %p327, %p328
      %p331 = scmp.ne.s32.totalorder %s314, %s330
      %p332 = scmp.eq.s32.totalorder %s28, 0
      %p333 = por %p331, %p332
      %p334 = scmp.le.s32.totalorder 1, %s22
      %p335 = scmp.lt.s32.totalorder %s22, 3
      %p336 = pnand %p334, %p335
      %p337 = pneg %p336
      // Predicated region
      $region9: #{tpu_custom_call.1} parent=5 // pred_check
        _
      $region10: #{tpu_custom_call.1} parent=5 // pred_check_branch
        %339 = sbr.rel (%p336) target = $region12
      $region11: #{tpu_custom_call.1} parent=5 // pred_region
        %s340 = ssub.s32 %s22, 1
        // Predicated region
        $region13: #{tpu_custom_call.1} parent=11 // pred_check
          %p341 = pneg %p69
        $region14: #{tpu_custom_call.1} parent=11 // pred_check_branch
          %343 = sbr.rel (%p341) target = $region16
        $region15: #{tpu_custom_call.1} parent=11 // pred_region
          _
        $region16: #{tpu_custom_call.1} parent=11 // pred_fallthru
          _
        // Predicated region
        $region17: #{tpu_custom_call.1} parent=11 // pred_check
          %p344 = pneg %p90
        $region18: #{tpu_custom_call.1} parent=11 // pred_check_branch
          %346 = sbr.rel (%p344) target = $region20
        $region19: #{tpu_custom_call.1} parent=11 // pred_region
          _
        $region20: #{tpu_custom_call.1} parent=11 // pred_fallthru
          _
        // Predicated region
        $region21: #{tpu_custom_call.1} parent=11 // pred_check
          %p347 = pneg %p111
        $region22: #{tpu_custom_call.1} parent=11 // pred_check_branch
          %349 = sbr.rel (%p347) target = $region24
        $region23: #{tpu_custom_call.1} parent=11 // pred_region
          _
        $region24: #{tpu_custom_call.1} parent=11 // pred_fallthru
          _
        // Predicated region
        $region25: #{tpu_custom_call.1} parent=11 // pred_check
          %p350 = pneg %p132
        $region26: #{tpu_custom_call.1} parent=11 // pred_check_branch
          %352 = sbr.rel (%p350) target = $region28
        $region27: #{tpu_custom_call.1} parent=11 // pred_region
          _
        $region28: #{tpu_custom_call.1} parent=11 // pred_fallthru
          _
        // Predicated region
        $region29: #{tpu_custom_call.1} parent=11 // pred_check
          %p353 = pneg %p153
        $region30: #{tpu_custom_call.1} parent=11 // pred_check_branch
          %355 = sbr.rel (%p353) target = $region32
        $region31: #{tpu_custom_call.1} parent=11 // pred_region
          _
        $region32: #{tpu_custom_call.1} parent=11 // pred_fallthru
          _
        // Predicated region
        $region33: #{tpu_custom_call.1} parent=11 // pred_check
          %p356 = pneg %p174
        $region34: #{tpu_custom_call.1} parent=11 // pred_check_branch
          %358 = sbr.rel (%p356) target = $region36
        $region35: #{tpu_custom_call.1} parent=11 // pred_region
          _
        $region36: #{tpu_custom_call.1} parent=11 // pred_fallthru
          _
        // Predicated region
        $region37: #{tpu_custom_call.1} parent=11 // pred_check
          %p359 = pneg %p195
        $region38: #{tpu_custom_call.1} parent=11 // pred_check_branch
          %361 = sbr.rel (%p359) target = $region40
        $region39: #{tpu_custom_call.1} parent=11 // pred_region
          _
        $region40: #{tpu_custom_call.1} parent=11 // pred_fallthru
          _
        // Predicated region
        $region41: #{tpu_custom_call.1} parent=11 // pred_check
          %p362 = pneg %p216
        $region42: #{tpu_custom_call.1} parent=11 // pred_check_branch
          %364 = sbr.rel (%p362) target = $region44
        $region43: #{tpu_custom_call.1} parent=11 // pred_region
          _
        $region44: #{tpu_custom_call.1} parent=11 // pred_fallthru
          _
        // Predicated region
        $region45: #{tpu_custom_call.1} parent=11 // pred_check
          %p365 = pneg %p237
        $region46: #{tpu_custom_call.1} parent=11 // pred_check_branch
          %367 = sbr.rel (%p365) target = $region48
        $region47: #{tpu_custom_call.1} parent=11 // pred_region
          _
        $region48: #{tpu_custom_call.1} parent=11 // pred_fallthru
          _
        // Predicated region
        $region49: #{tpu_custom_call.1} parent=11 // pred_check
          %p368 = pneg %p258
        $region50: #{tpu_custom_call.1} parent=11 // pred_check_branch
          %370 = sbr.rel (%p368) target = $region52
        $region51: #{tpu_custom_call.1} parent=11 // pred_region
          _
        $region52: #{tpu_custom_call.1} parent=11 // pred_fallthru
          _
        // Predicated region
        $region53: #{tpu_custom_call.1} parent=11 // pred_check
          %p371 = pneg %p279
        $region54: #{tpu_custom_call.1} parent=11 // pred_check_branch
          %373 = sbr.rel (%p371) target = $region56
        $region55: #{tpu_custom_call.1} parent=11 // pred_region
          _
        $region56: #{tpu_custom_call.1} parent=11 // pred_fallthru
          _
        // Predicated region
        $region57: #{tpu_custom_call.1} parent=11 // pred_check
          %p374 = pneg %p300
        $region58: #{tpu_custom_call.1} parent=11 // pred_check_branch
          %376 = sbr.rel (%p374) target = $region60
        $region59: #{tpu_custom_call.1} parent=11 // pred_region
          _
        $region60: #{tpu_custom_call.1} parent=11 // pred_fallthru
          _
      $region12: #{tpu_custom_call.1} parent=5 // pred_fallthru
        _
      %p377 = scmp.lt.s32.totalorder %s22, 2
      // Predicated region
      $region61: #{tpu_custom_call.1} parent=5 // pred_check
        %p378 = pneg %p377
      $region62: #{tpu_custom_call.1} parent=5 // pred_check_branch
        %380 = sbr.rel (%p378) target = $region64
      $region63: #{tpu_custom_call.1} parent=5 // pred_region
        // Predicated region
        $region65: #{tpu_custom_call.1} parent=63 // pred_check
          %p381 = pneg %p42
        $region66: #{tpu_custom_call.1} parent=63 // pred_check_branch
          %383 = sbr.rel (%p381) target = $region68
        $region67: #{tpu_custom_call.1} parent=63 // pred_region
          %p384 = scmp.lt.s32.totalorder %s22, 1
          %s385 = scalar_select %p384, %s22, 1
          %s386 = smul.addr %s385, 24
          %s387 = smul.addr %s386, 8
          %s388 = scalar_lea.vmem %s0, %s387
        $region68: #{tpu_custom_call.1} parent=63 // pred_fallthru
          _
      $region64: #{tpu_custom_call.1} parent=5 // pred_fallthru
        _
      %p389 = scmp.le.s32.totalorder 1, %s22
      %p390 = scmp.lt.s32.totalorder %s22, 3
      %p391 = pnand %p389, %p390
      %p392 = pneg %p391
      // Predicated region
      $region69: #{tpu_custom_call.1} parent=5 // pred_check
        _
      $region70: #{tpu_custom_call.1} parent=5 // pred_check_branch
        %394 = sbr.rel (%p391) target = $region72
      $region71: #{tpu_custom_call.1} parent=5 // pred_region
        %s395 = ssub.s32 %s22, 1
        %p396 = scmp.lt.s32.totalorder %s27, 1
        %s397 = scalar_select %p396, %s27, 1
        %s398 = smul.addr %s397, 24
        %s399 = smul.addr %s398, 8
        %s400 = scalar_lea.vmem %s0, %s399
        %p401 = pneg %p48
        %p402 = pneg %p45
        %p403 = pneg %p69
        %p404 = pneg %p66
        %p405 = pneg %p90
        %p406 = pneg %p87
        %p407 = pneg %p111
        %p408 = pneg %p108
        %p409 = pneg %p132
        %p410 = pneg %p129
        %p411 = pneg %p153
        %p412 = pneg %p150
        %p413 = pneg %p174
        %p414 = pneg %p171
        %p415 = pneg %p195
        %p416 = pneg %p192
        %p417 = pneg %p216
        %p418 = pneg %p213
        %p419 = pneg %p237
        %p420 = pneg %p234
        %p421 = pneg %p258
        %p422 = pneg %p255
        %p423 = pneg %p279
        %p424 = pneg %p276
        %p425 = pneg %p300
        %p426 = pneg %p297
        %p427 = pneg %p326
        %p428 = pneg %p323
        %s429 = sand.u32 %s313, 1
        %s430 = scalar_lea.sflag [#allocation6], %s429
        %s431 = sand.u32 %s313, 1
        %s432 = smul.addr %s431, 192
        %s433 = scalar_lea.vmem [#allocation5], %s432
        %p434 = scmp.lt.s32.totalorder %s27, 1
        %s435 = scalar_select %p434, %s27, 1
        %s436 = smul.addr %s435, 24
        %s437 = smul.addr %s436, 8
        %s438 = scalar_lea.vmem %s0, %s437
        %442 = vst [vmem:[#allocation2] sm:$0xf] 0
        %443 = vst [vmem:[#allocation2 + $0x4] sm:$0xf] 0
        %444 = vst [vmem:[#allocation2 + $0x8] sm:$0xf] 0
        %445 = vst [vmem:[#allocation2 + $0xc] sm:$0xf] 0
        %446 = vst [vmem:[#allocation2 + $0x10] sm:$0xf] 0
        %447 = vst [vmem:[#allocation2 + $0x14] sm:$0xf] 0
        %448 = vst [vmem:[#allocation2 + $0x18] sm:$0xf] 0
        %449 = vst [vmem:[#allocation2 + $0x1c] sm:$0xf] 0
        %450 = vst [vmem:[#allocation2 + $0x20] sm:$0xf] 0
        %451 = vst [vmem:[#allocation2 + $0x24] sm:$0xf] 0
        %452 = vst [vmem:[#allocation2 + $0x28] sm:$0xf] 0
        %453 = vst [vmem:[#allocation2 + $0x2c] sm:$0xf] 0
        %454 = vst [vmem:[#allocation3] sm:$0xf] 0
        %455 = vst [vmem:[#allocation3 + $0x4] sm:$0xf] 0
        %456 = vst [vmem:[#allocation3 + $0x8] sm:$0xf] 0
        %457 = vst [vmem:[#allocation3 + $0xc] sm:$0xf] 0
        %458 = vst [vmem:[#allocation3 + $0x10] sm:$0xf] 0
        %459 = vst [vmem:[#allocation3 + $0x14] sm:$0xf] 0
        %460 = vst [vmem:[#allocation3 + $0x18] sm:$0xf] 0
        %461 = vst [vmem:[#allocation3 + $0x1c] sm:$0xf] 0
        %462 = vst [vmem:[#allocation3 + $0x20] sm:$0xf] 0
        %463 = vst [vmem:[#allocation3 + $0x24] sm:$0xf] 0
        %464 = vst [vmem:[#allocation3 + $0x28] sm:$0xf] 0
        %465 = vst [vmem:[#allocation3 + $0x2c] sm:$0xf] 0
        %466 = vst [vmem:[#allocation4] sm:$0xf] 0
        %467 = vst [vmem:[#allocation4 + $0x4] sm:$0xf] 0
        %468 = vst [vmem:[#allocation4 + $0x8] sm:$0xf] 0
        %469 = vst [vmem:[#allocation4 + $0xc] sm:$0xf] 0
        %470 = vst [vmem:[#allocation4 + $0x10] sm:$0xf] 0
        %471 = vst [vmem:[#allocation4 + $0x14] sm:$0xf] 0
        %472 = vst [vmem:[#allocation4 + $0x18] sm:$0xf] 0
        %473 = vst [vmem:[#allocation4 + $0x1c] sm:$0xf] 0
        %474 = vst [vmem:[#allocation4 + $0x20] sm:$0xf] 0
        %475 = vst [vmem:[#allocation4 + $0x24] sm:$0xf] 0
        %476 = vst [vmem:[#allocation4 + $0x28] sm:$0xf] 0
        %477 = vst [vmem:[#allocation4 + $0x2c] sm:$0xf] 0
        %v478 = vlaneseq
        %v479 = vshrl.u32 %v478, 7
        %v480 = vadd.s32 %v479, 8
        %v481 = vadd.s32 %v479, 16
        %v482 = vadd.s32 %v479, 24
        %v483 = vadd.s32 %v479, 32
        %v484 = vadd.s32 %v479, 40
        %v485 = vadd.s32 %v479, 48
        %v486 = vadd.s32 %v479, 56
        %vm487 = vcmp.lt.s32.totalorder %v479, 0
        %v488 = vsub.s32 0, %v479
        %v489 = vsel %vm487, %v488, %v479
        %v490 = vshrl.u32 %v489, 3
        %v491 = vand.u32 %v489, 7
        %v492 = vsub.s32 0, %v491
        %v493 = vsel %vm487, %v492, %v491
        %vm494 = vcmp.lt.s32.totalorder %v480, 0
        %v495 = vsub.s32 0, %v480
        %v496 = vsel %vm494, %v495, %v480
        %v497 = vshrl.u32 %v496, 3
        %v498 = vand.u32 %v496, 7
        %v499 = vsub.s32 0, %v498
        %v500 = vsel %vm494, %v499, %v498
        %vm501 = vcmp.lt.s32.totalorder %v481, 0
        %v502 = vsub.s32 0, %v481
        %v503 = vsel %vm501, %v502, %v481
        %v504 = vshrl.u32 %v503, 3
        %v505 = vand.u32 %v503, 7
        %v506 = vsub.s32 0, %v505
        %v507 = vsel %vm501, %v506, %v505
        %vm508 = vcmp.lt.s32.totalorder %v482, 0
        %v509 = vsub.s32 0, %v482
        %v510 = vsel %vm508, %v509, %v482
        %v511 = vshrl.u32 %v510, 3
        %v512 = vand.u32 %v510, 7
        %v513 = vsub.s32 0, %v512
        %v514 = vsel %vm508, %v513, %v512
        %vm515 = vcmp.lt.s32.totalorder %v483, 0
        %v516 = vsub.s32 0, %v483
        %v517 = vsel %vm515, %v516, %v483
        %v518 = vshrl.u32 %v517, 3
        %v519 = vand.u32 %v517, 7
        %v520 = vsub.s32 0, %v519
        %v521 = vsel %vm515, %v520, %v519
        %vm522 = vcmp.lt.s32.totalorder %v484, 0
        %v523 = vsub.s32 0, %v484
        %v524 = vsel %vm522, %v523, %v484
        %v525 = vshrl.u32 %v524, 3
        %v526 = vand.u32 %v524, 7
        %v527 = vsub.s32 0, %v526
        %v528 = vsel %vm522, %v527, %v526
        %vm529 = vcmp.lt.s32.totalorder %v485, 0
        %v530 = vsub.s32 0, %v485
        %v531 = vsel %vm529, %v530, %v485
        %v532 = vshrl.u32 %v531, 3
        %v533 = vand.u32 %v531, 7
        %v534 = vsub.s32 0, %v533
        %v535 = vsel %vm529, %v534, %v533
        %vm536 = vcmp.lt.s32.totalorder %v486, 0
        %v537 = vsub.s32 0, %v486
        %v538 = vsel %vm536, %v537, %v486
        %v539 = vshrl.u32 %v538, 3
        %v540 = vand.u32 %v538, 7
        %v541 = vsub.s32 0, %v540
        %v542 = vsel %vm536, %v541, %v540
        %vm543 = vcmp.ne.s32.totalorder %v493, 0
        %vm544 = vcmp.ne.s32.totalorder %v500, 0
        %vm545 = vcmp.ne.s32.totalorder %v507, 0
        %vm546 = vcmp.ne.s32.totalorder %v514, 0
        %vm547 = vcmp.ne.s32.totalorder %v521, 0
        %vm548 = vcmp.ne.s32.totalorder %v528, 0
        %vm549 = vcmp.ne.s32.totalorder %v535, 0
        %vm550 = vcmp.ne.s32.totalorder %v542, 0
        %vm551 = vcmp.lt.s32.totalorder %v493, 0
        %vm552 = vcmp.lt.s32.totalorder %v500, 0
        %vm553 = vcmp.lt.s32.totalorder %v507, 0
        %vm554 = vcmp.lt.s32.totalorder %v514, 0
        %vm555 = vcmp.lt.s32.totalorder %v521, 0
        %vm556 = vcmp.lt.s32.totalorder %v528, 0
        %vm557 = vcmp.lt.s32.totalorder %v535, 0
        %vm558 = vcmp.lt.s32.totalorder %v542, 0
        %vm559 = vmand %vm551, %vm543
        %vm560 = vmand %vm552, %vm544
        %vm561 = vmand %vm553, %vm545
        %vm562 = vmand %vm554, %vm546
        %vm563 = vmand %vm555, %vm547
        %vm564 = vmand %vm556, %vm548
        %vm565 = vmand %vm557, %vm549
        %vm566 = vmand %vm558, %vm550
        %v567 = vadd.s32 %v493, 8
        %v568 = vadd.s32 %v500, 8
        %v569 = vadd.s32 %v507, 8
        %v570 = vadd.s32 %v514, 8
        %v571 = vadd.s32 %v521, 8
        %v572 = vadd.s32 %v528, 8
        %v573 = vadd.s32 %v535, 8
        %v574 = vadd.s32 %v542, 8
        %v575 = vsel %vm559, %v567, %v493
        %v576 = vsel %vm560, %v568, %v500
        %v577 = vsel %vm561, %v569, %v507
        %v578 = vsel %vm562, %v570, %v514
        %v579 = vsel %vm563, %v571, %v521
        %v580 = vsel %vm564, %v572, %v528
        %v581 = vsel %vm565, %v573, %v535
        %v582 = vsel %vm566, %v574, %v542
        %vm583 = vcmp.ne.s32.totalorder %v575, 0
        %vm584 = vcmp.ne.s32.totalorder %v576, 0
        %vm585 = vcmp.ne.s32.totalorder %v577, 0
        %vm586 = vcmp.ne.s32.totalorder %v578, 0
        %vm587 = vcmp.ne.s32.totalorder %v579, 0
        %vm588 = vcmp.ne.s32.totalorder %v580, 0
        %vm589 = vcmp.ne.s32.totalorder %v581, 0
        %vm590 = vcmp.ne.s32.totalorder %v582, 0
        %vm591 = vcmp.ne.s32.totalorder %v575, 7
        %vm592 = vcmp.ne.s32.totalorder %v576, 7
        %vm593 = vcmp.ne.s32.totalorder %v577, 7
        %vm594 = vcmp.ne.s32.totalorder %v578, 7
        %vm595 = vcmp.ne.s32.totalorder %v579, 7
        %vm596 = vcmp.ne.s32.totalorder %v580, 7
        %vm597 = vcmp.ne.s32.totalorder %v581, 7
        %vm598 = vcmp.ne.s32.totalorder %v582, 7
        %v599 = vld [vmem:[%s438] sm:$0xff]
        %v600 = vld [vmem:[%s438 + $0x8] sm:$0xff]
        %v601 = vld [vmem:[%s438 + $0x10] sm:$0xff]
        %v602 = vld [vmem:[%s438 + $0x18] sm:$0xff]
        %v603 = vld [vmem:[%s438 + $0x20] sm:$0xff]
        %v604 = vld [vmem:[%s438 + $0x28] sm:$0xff]
        %v605 = vld [vmem:[%s438 + $0x30] sm:$0xff]
        %v606 = vld [vmem:[%s438 + $0x38] sm:$0xff]
        %v607 = vld [vmem:[%s438 + $0x40] sm:$0xff]
        %v608 = vld [vmem:[%s438 + $0x48] sm:$0xff]
        %v609 = vld [vmem:[%s438 + $0x50] sm:$0xff]
        %v610 = vld [vmem:[%s438 + $0x58] sm:$0xff]
        %v611 = vld [vmem:[%s438 + $0x60] sm:$0xff]
        %v612 = vld [vmem:[%s438 + $0x68] sm:$0xff]
        %v613 = vld [vmem:[%s438 + $0x70] sm:$0xff]
        %v614 = vld [vmem:[%s438 + $0x78] sm:$0xff]
        %v615 = vld [vmem:[%s438 + $0x80] sm:$0xff]
        %v616 = vld [vmem:[%s438 + $0x88] sm:$0xff]
        %v617 = vld [vmem:[%s438 + $0x90] sm:$0xff]
        %v618 = vld [vmem:[%s438 + $0x98] sm:$0xff]
        %v619 = vld [vmem:[%s438 + $0xa0] sm:$0xff]
        %v620 = vld [vmem:[%s438 + $0xa8] sm:$0xff]
        %v621 = vld [vmem:[%s438 + $0xb0] sm:$0xff]
        %v622 = vld [vmem:[%s438 + $0xb8] sm:$0xff]
        %v623 = vpack.c.bf16 %v602, %v599
        %v624 = vpack.c.bf16 %v603, %v600
        %v625 = vpack.c.bf16 %v604, %v601
        %v626 = vpack.c.bf16 %v608, %v605
        %v627 = vpack.c.bf16 %v609, %v606
        %v628 = vpack.c.bf16 %v610, %v607
        %v629 = vpack.c.bf16 %v614, %v611
        %v630 = vpack.c.bf16 %v615, %v612
        %v631 = vpack.c.bf16 %v616, %v613
        %v632 = vpack.c.bf16 %v620, %v617
        %v633 = vpack.c.bf16 %v621, %v618
        %v634 = vpack.c.bf16 %v622, %v619
        %v635 = vld [vmem:[%s1] sm:$0xf]
        %v636 = vld [vmem:[%s1 + $0x4] sm:$0xf]
        %v637 = vld [vmem:[%s1 + $0x8] sm:$0xf]
        %v638 = vld [vmem:[%s1 + $0xc] sm:$0xf]
        %v639 = vld [vmem:[%s1 + $0x10] sm:$0xf]
        %v640 = vld [vmem:[%s1 + $0x14] sm:$0xf]
        %v641 = vld [vmem:[%s1 + $0x18] sm:$0xf]
        %v642 = vld [vmem:[%s1 + $0x1c] sm:$0xf]
        %v643 = vld [vmem:[%s1 + $0x20] sm:$0xf]
        %v644 = vld [vmem:[%s1 + $0x24] sm:$0xf]
        %v645 = vld [vmem:[%s1 + $0x28] sm:$0xf]
        %v646 = vld [vmem:[%s1 + $0x2c] sm:$0xf]
        %v647 = vld [vmem:[%s1 + $0x30] sm:$0xf]
        %v648 = vld [vmem:[%s1 + $0x34] sm:$0xf]
        %v649 = vld [vmem:[%s1 + $0x38] sm:$0xf]
        %v650 = vld [vmem:[%s1 + $0x3c] sm:$0xf]
        %v651 = vld [vmem:[%s1 + $0x40] sm:$0xf]
        %v652 = vld [vmem:[%s1 + $0x44] sm:$0xf]
        %v653 = vld [vmem:[%s1 + $0x48] sm:$0xf]
        %v654 = vld [vmem:[%s1 + $0x4c] sm:$0xf]
        %v655 = vld [vmem:[%s1 + $0x50] sm:$0xf]
        %v656 = vld [vmem:[%s1 + $0x54] sm:$0xf]
        %v657 = vld [vmem:[%s1 + $0x58] sm:$0xf]
        %v658 = vld [vmem:[%s1 + $0x5c] sm:$0xf]
        %v659 = vld [vmem:[%s1 + $0x60] sm:$0xf]
        %v660 = vld [vmem:[%s1 + $0x64] sm:$0xf]
        %v661 = vld [vmem:[%s1 + $0x68] sm:$0xf]
        %v662 = vld [vmem:[%s1 + $0x6c] sm:$0xf]
        %v663 = vld [vmem:[%s1 + $0x70] sm:$0xf]
        %v664 = vld [vmem:[%s1 + $0x74] sm:$0xf]
        %v665 = vld [vmem:[%s1 + $0x78] sm:$0xf]
        %v666 = vld [vmem:[%s1 + $0x7c] sm:$0xf]
        %v667 = vld [vmem:[%s1 + $0x80] sm:$0xf]
        %v668 = vld [vmem:[%s1 + $0x84] sm:$0xf]
        %v669 = vld [vmem:[%s1 + $0x88] sm:$0xf]
        %v670 = vld [vmem:[%s1 + $0x8c] sm:$0xf]
        %v671 = vld [vmem:[%s1 + $0x90] sm:$0xf]
        %v672 = vld [vmem:[%s1 + $0x94] sm:$0xf]
        %v673 = vld [vmem:[%s1 + $0x98] sm:$0xf]
        %v674 = vld [vmem:[%s1 + $0x9c] sm:$0xf]
        %v675 = vld [vmem:[%s2] sm:$0x1]
        %v677 = vperm.slane %v675, 0
        %v719 = vunpack.c.l.b16 %v635
        %v720 = vunpack.c.l.b16 %v636
        %v721 = vunpack.c.l.b16 %v637
        %v722 = vunpack.c.l.b16 %v638
        %v723 = vunpack.c.l.b16 %v639
        %v724 = vunpack.c.l.b16 %v640
        %v725 = vunpack.c.l.b16 %v641
        %v726 = vunpack.c.l.b16 %v642
        %v727 = vunpack.c.l.b16 %v643
        %v728 = vunpack.c.l.b16 %v644
        %v729 = vunpack.c.l.b16 %v645
        %v730 = vunpack.c.l.b16 %v646
        %v731 = vunpack.c.l.b16 %v647
        %v732 = vunpack.c.l.b16 %v648
        %v733 = vunpack.c.l.b16 %v649
        %v734 = vunpack.c.l.b16 %v650
        %v735 = vunpack.c.l.b16 %v651
        %v736 = vunpack.c.l.b16 %v652
        %v737 = vunpack.c.l.b16 %v653
        %v738 = vunpack.c.l.b16 %v654
        %v739 = vunpack.c.l.b16 %v655
        %v740 = vunpack.c.l.b16 %v656
        %v741 = vunpack.c.l.b16 %v657
        %v742 = vunpack.c.l.b16 %v658
        %v743 = vunpack.c.l.b16 %v659
        %v744 = vunpack.c.l.b16 %v660
        %v745 = vunpack.c.l.b16 %v661
        %v746 = vunpack.c.l.b16 %v662
        %v747 = vunpack.c.l.b16 %v663
        %v748 = vunpack.c.l.b16 %v664
        %v749 = vunpack.c.l.b16 %v665
        %v750 = vunpack.c.l.b16 %v666
        %v751 = vunpack.c.l.b16 %v667
        %v752 = vunpack.c.l.b16 %v668
        %v753 = vunpack.c.l.b16 %v669
        %v754 = vunpack.c.l.b16 %v670
        %v755 = vunpack.c.l.b16 %v671
        %v756 = vunpack.c.l.b16 %v672
        %v757 = vunpack.c.l.b16 %v673
        %v758 = vunpack.c.l.b16 %v674
        %v759 = vpack.c.b16 %v720, %v719
        %v760 = vpack.c.b16 %v722, %v721
        %v761 = vpack.c.b16 %v724, %v723
        %v762 = vpack.c.b16 %v726, %v725
        %v763 = vpack.c.b16 %v728, %v727
        %v764 = vpack.c.b16 %v730, %v729
        %v765 = vpack.c.b16 %v732, %v731
        %v766 = vpack.c.b16 %v734, %v733
        %v767 = vpack.c.b16 %v736, %v735
        %v768 = vpack.c.b16 %v738, %v737
        %v769 = vpack.c.b16 %v740, %v739
        %v770 = vpack.c.b16 %v742, %v741
        %v771 = vpack.c.b16 %v744, %v743
        %v772 = vpack.c.b16 %v746, %v745
        %v773 = vpack.c.b16 %v748, %v747
        %v774 = vpack.c.b16 %v750, %v749
        %v775 = vpack.c.b16 %v752, %v751
        %v776 = vpack.c.b16 %v754, %v753
        %v777 = vpack.c.b16 %v756, %v755
        %v778 = vpack.c.b16 %v758, %v757
        %vm799 = vcmask 523264
        %v801 = vsel %vm799, %v625, 0
        %v804 = vsel %vm799, %v628, 0
        %v807 = vsel %vm799, %v631, 0
        %v810 = vsel %vm799, %v634, 0
        %812 = vmatpush.bf16.msra.mxu0 %v766
        %813 = vmatpush.bf16.msra.mxu0 %v765
        %814 = vmatpush.bf16.msra.mxu0 %v764
        %815 = vmatpush.bf16.msra.mxu0 %v763
        %816 = vmatpush.bf16.msra.mxu0 %v762
        %817 = vmatpush.bf16.msra.mxu0 %v761
        %818 = vmatpush.bf16.msra.mxu0 %v760
        %819 = vmatpush.bf16.msra.mxu0 %v759
        %820 = vmatmul.bf16.gmra.mxu0 %v623
        %v821 = vpop.f32.mrf.mxu0
        %v822 = vadd.f32 %v677, %v821
        %v823 = vpop.f32.mrf.mxu0
        %v824 = vadd.f32 %v677, %v823
        %825 = vmatmul.bf16.gmra.mxu0 %v626
        %v826 = vpop.f32.mrf.mxu0
        %v827 = vadd.f32 %v677, %v826
        %v828 = vpop.f32.mrf.mxu0
        %v829 = vadd.f32 %v677, %v828
        %830 = vmatmul.bf16.gmra.mxu0 %v629
        %v831 = vpop.f32.mrf.mxu0
        %v832 = vadd.f32 %v677, %v831
        %v833 = vpop.f32.mrf.mxu0
        %v834 = vadd.f32 %v677, %v833
        %835 = vmatmul.bf16.gmra.mxu0 %v632
        %v836 = vpop.f32.mrf.mxu0
        %v837 = vadd.f32 %v677, %v836
        %v838 = vpop.f32.mrf.mxu0
        %v839 = vadd.f32 %v677, %v838
        %840 = vdwg.mxu0
        %841 = vmatpush.bf16.msra.mxu0 %v774
        %842 = vmatpush.bf16.msra.mxu0 %v773
        %843 = vmatpush.bf16.msra.mxu0 %v772
        %844 = vmatpush.bf16.msra.mxu0 %v771
        %845 = vmatpush.bf16.msra.mxu0 %v770
        %846 = vmatpush.bf16.msra.mxu0 %v769
        %847 = vmatpush.bf16.msra.mxu0 %v768
        %848 = vmatpush.bf16.msra.mxu0 %v767
        %849 = vmatmul.bf16.gmra.mxu0 %v624
        %v850 = vpop.f32.mrf.mxu0
        %v851 = vadd.f32 %v822, %v850
        %v852 = vpop.f32.mrf.mxu0
        %v853 = vadd.f32 %v824, %v852
        %854 = vmatmul.bf16.gmra.mxu0 %v627
        %v855 = vpop.f32.mrf.mxu0
        %v856 = vadd.f32 %v827, %v855
        %v857 = vpop.f32.mrf.mxu0
        %v858 = vadd.f32 %v829, %v857
        %859 = vmatmul.bf16.gmra.mxu0 %v630
        %v860 = vpop.f32.mrf.mxu0
        %v861 = vadd.f32 %v832, %v860
        %v862 = vpop.f32.mrf.mxu0
        %v863 = vadd.f32 %v834, %v862
        %864 = vmatmul.bf16.gmra.mxu0 %v633
        %v865 = vpop.f32.mrf.mxu0
        %v866 = vadd.f32 %v837, %v865
        %v867 = vpop.f32.mrf.mxu0
        %v868 = vadd.f32 %v839, %v867
        %869 = vdwg.mxu0
        %870 = vmatpush.bf16.msra.mxu0 0
        %871 = vmatpush.bf16.msra.mxu0 0
        %872 = vmatpush.bf16.msra.mxu0 0
        %873 = vmatpush.bf16.msra.mxu0 0
        %874 = vmatpush.bf16.msra.mxu0 %v778
        %875 = vmatpush.bf16.msra.mxu0 %v777
        %876 = vmatpush.bf16.msra.mxu0 %v776
        %877 = vmatpush.bf16.msra.mxu0 %v775
        %878 = vmatmul.bf16.gmra.mxu0 %v801
        %v879 = vpop.f32.mrf.mxu0
        %v880 = vadd.f32 %v851, %v879
        %v881 = vpop.f32.mrf.mxu0
        %v882 = vadd.f32 %v853, %v881
        %883 = vmatmul.bf16.gmra.mxu0 %v804
        %v884 = vpop.f32.mrf.mxu0
        %v885 = vadd.f32 %v856, %v884
        %v886 = vpop.f32.mrf.mxu0
        %v887 = vadd.f32 %v858, %v886
        %888 = vmatmul.bf16.gmra.mxu0 %v807
        %v889 = vpop.f32.mrf.mxu0
        %v890 = vadd.f32 %v861, %v889
        %v891 = vpop.f32.mrf.mxu0
        %v892 = vadd.f32 %v863, %v891
        %893 = vmatmul.bf16.gmra.mxu0 %v810
        %v894 = vpop.f32.mrf.mxu0
        %v895 = vadd.f32 %v866, %v894
        %v896 = vpop.f32.mrf.mxu0
        %v897 = vadd.f32 %v868, %v896
        %898 = vdwg.mxu0
        %v899 = vmax.f32 %v880, 0.0
        %v900 = vmax.f32 %v882, 0.0
        %v901 = vmax.f32 %v885, 0.0
        %v902 = vmax.f32 %v887, 0.0
        %v903 = vmax.f32 %v890, 0.0
        %v904 = vmax.f32 %v892, 0.0
        %v905 = vmax.f32 %v895, 0.0
        %v906 = vmax.f32 %v897, 0.0
        %v907 = vpack.c.bf16 %v899, %v899
        %v908 = vpack.c.bf16 %v900, %v900
        %v909 = vpack.c.bf16 %v901, %v901
        %v910 = vpack.c.bf16 %v902, %v902
        %v911 = vpack.c.bf16 %v903, %v903
        %v912 = vpack.c.bf16 %v904, %v904
        %v913 = vpack.c.bf16 %v905, %v905
        %v914 = vpack.c.bf16 %v906, %v906
        %923 = vrot.lane.b32.xlu0 %v907, 96
        %v924 = vpop.permute.xlu0 %923
        %925 = vrot.lane.b32.xlu0 %v908, 96
        %v926 = vpop.permute.xlu0 %925
        %927 = vrot.lane.b32.xlu0 %v909, 96
        %v928 = vpop.permute.xlu0 %927
        %929 = vrot.lane.b32.xlu0 %v910, 96
        %v930 = vpop.permute.xlu0 %929
        %931 = vrot.lane.b32.xlu0 %v911, 96
        %v932 = vpop.permute.xlu0 %931
        %933 = vrot.lane.b32.xlu0 %v912, 96
        %v934 = vpop.permute.xlu0 %933
        %935 = vrot.lane.b32.xlu0 %v913, 96
        %v936 = vpop.permute.xlu0 %935
        %937 = vrot.lane.b32.xlu0 %v914, 96
        %v938 = vpop.permute.xlu0 %937
        %vm947 = vcmask 257024
        %948 = vst.msk [vmem:[#allocation2 + $0x8] sm:$0xf] %vm947, %v924
        %949 = vst.msk [vmem:[#allocation2 + $0xc] sm:$0xf] %vm947, %v926
        %950 = vst.msk [vmem:[#allocation2 + $0x10] sm:$0xf] %vm947, %v928
        %951 = vst.msk [vmem:[#allocation2 + $0x14] sm:$0xf] %vm947, %v930
        %952 = vst.msk [vmem:[#allocation2 + $0x18] sm:$0xf] %vm947, %v932
        %953 = vst.msk [vmem:[#allocation2 + $0x1c] sm:$0xf] %vm947, %v934
        %954 = vst.msk [vmem:[#allocation2 + $0x20] sm:$0xf] %vm947, %v936
        %955 = vst.msk [vmem:[#allocation2 + $0x24] sm:$0xf] %vm947, %v938
        %v956 = vld [vmem:[#allocation2] sm:$0x8]
        %v957 = vld [vmem:[#allocation2 + $0x4] sm:$0xf]
        %v958 = vld [vmem:[#allocation2 + $0x8] sm:$0xf]
        %v959 = vld [vmem:[#allocation2 + $0xc] sm:$0xf]
        %v960 = vld [vmem:[#allocation2 + $0x10] sm:$0xf]
        %v961 = vld [vmem:[#allocation2 + $0x14] sm:$0xf]
        %v962 = vld [vmem:[#allocation2 + $0x18] sm:$0xf]
        %v963 = vld [vmem:[#allocation2 + $0x1c] sm:$0xf]
        %v964 = vld [vmem:[#allocation2 + $0x20] sm:$0xf]
        %v965 = vsel %vm583, 1, 0
        %v966 = vsel %vm584, 1, 0
        %v967 = vsel %vm585, 1, 0
        %v968 = vsel %vm586, 1, 0
        %v969 = vsel %vm587, 1, 0
        %v970 = vsel %vm588, 1, 0
        %v971 = vsel %vm589, 1, 0
        %v972 = vsel %vm590, 1, 0
        %vm973 = vcmp.eq.s32.totalorder %v965, 1
        %vm974 = vcmp.eq.s32.totalorder %v966, 1
        %vm975 = vcmp.eq.s32.totalorder %v967, 1
        %vm976 = vcmp.eq.s32.totalorder %v968, 1
        %vm977 = vcmp.eq.s32.totalorder %v969, 1
        %vm978 = vcmp.eq.s32.totalorder %v970, 1
        %vm979 = vcmp.eq.s32.totalorder %v971, 1
        %vm980 = vcmp.eq.s32.totalorder %v972, 1
        %vm981 = vmpackc.low %vm973, %vm973
        %vm982 = vmpackc.low %vm974, %vm974
        %vm983 = vmpackc.low %vm975, %vm975
        %vm984 = vmpackc.low %vm976, %vm976
        %vm985 = vmpackc.low %vm977, %vm977
        %vm986 = vmpackc.low %vm978, %vm978
        %vm987 = vmpackc.low %vm979, %vm979
        %vm988 = vmpackc.low %vm980, %vm980
        %v989 = vsel %vm981, 65537, 0
        %v990 = vsel %vm982, 65537, 0
        %v991 = vsel %vm983, 65537, 0
        %v992 = vsel %vm984, 65537, 0
        %v993 = vsel %vm985, 65537, 0
        %v994 = vsel %vm986, 65537, 0
        %v995 = vsel %vm987, 65537, 0
        %v996 = vsel %vm988, 65537, 0
        %vm997 = vsmask.f32 3328
        %vm998 = vsmask.f32 7440
        %vm999 = vmor %vm997, %vm998
        %v1001 = vshll.u32 %v989, 16
        %v1003 = vrot.slane %v1001, 5
        %v1004 = vshrl.u32 %v989, 16
        %v1006 = vrot.slane %v1004, 4
        %v1007 = vor.u32 %v1006, %v1003
        %v1008 = vrot.slane %v1007, 4
        %v1010 = vshll.u32 %v990, 16
        %v1012 = vrot.slane %v1010, 5
        %v1013 = vsel %vm999, %v1008, %v1012
        %v1014 = vshrl.u32 %v990, 16
        %v1016 = vrot.slane %v1014, 4
        %v1017 = vor.u32 %v1016, %v1012
        %v1018 = vrot.slane %v1017, 4
        %v1020 = vshll.u32 %v991, 16
        %v1022 = vrot.slane %v1020, 5
        %v1023 = vsel %vm999, %v1018, %v1022
        %v1024 = vshrl.u32 %v991, 16
        %v1026 = vrot.slane %v1024, 4
        %v1027 = vor.u32 %v1026, %v1022
        %v1028 = vrot.slane %v1027, 4
        %v1030 = vshll.u32 %v992, 16
        %v1032 = vrot.slane %v1030, 5
        %v1033 = vsel %vm999, %v1028, %v1032
        %v1034 = vshrl.u32 %v992, 16
        %v1036 = vrot.slane %v1034, 4
        %v1037 = vor.u32 %v1036, %v1032
        %v1038 = vrot.slane %v1037, 4
        %v1040 = vshll.u32 %v993, 16
        %v1042 = vrot.slane %v1040, 5
        %v1043 = vsel %vm999, %v1038, %v1042
        %v1044 = vshrl.u32 %v993, 16
        %v1046 = vrot.slane %v1044, 4
        %v1047 = vor.u32 %v1046, %v1042
        %v1048 = vrot.slane %v1047, 4
        %v1050 = vshll.u32 %v994, 16
        %v1052 = vrot.slane %v1050, 5
        %v1053 = vsel %vm999, %v1048, %v1052
        %v1054 = vshrl.u32 %v994, 16
        %v1056 = vrot.slane %v1054, 4
        %v1057 = vor.u32 %v1056, %v1052
        %v1058 = vrot.slane %v1057, 4
        %v1060 = vshll.u32 %v995, 16
        %v1062 = vrot.slane %v1060, 5
        %v1063 = vsel %vm999, %v1058, %v1062
        %v1064 = vshrl.u32 %v995, 16
        %v1066 = vrot.slane %v1064, 4
        %v1067 = vor.u32 %v1066, %v1062
        %v1068 = vrot.slane %v1067, 4
        %v1070 = vshll.u32 %v996, 16
        %v1072 = vrot.slane %v1070, 5
        %v1073 = vsel %vm999, %v1068, %v1072
        %v1074 = vshrl.u32 %v996, 16
        %v1076 = vrot.slane %v1074, 4
        %v1077 = vor.u32 %v1076, %v1072
        %v1078 = vrot.slane %v1077, 4
        %v1079 = vunpack.c.l.b16 %v1003
        %v1080 = vunpack.c.h.b16 %v1003
        %v1081 = vunpack.c.l.b16 0
        %v1082 = vunpack.c.h.b16 0
        %vm1083 = vcmp.ne.s32.totalorder %v1079, %v1081
        %vm1084 = vcmp.ne.s32.totalorder %v1080, %v1082
        %vm1085 = vmpackc.low %vm1084, %vm1083
        %v1086 = vunpack.c.l.b16 %v1013
        %v1087 = vunpack.c.h.b16 %v1013
        %v1088 = vunpack.c.l.b16 0
        %v1089 = vunpack.c.h.b16 0
        %vm1090 = vcmp.ne.s32.totalorder %v1086, %v1088
        %vm1091 = vcmp.ne.s32.totalorder %v1087, %v1089
        %vm1092 = vmpackc.low %vm1091, %vm1090
        %v1093 = vunpack.c.l.b16 %v1023
        %v1094 = vunpack.c.h.b16 %v1023
        %v1095 = vunpack.c.l.b16 0
        %v1096 = vunpack.c.h.b16 0
        %vm1097 = vcmp.ne.s32.totalorder %v1093, %v1095
        %vm1098 = vcmp.ne.s32.totalorder %v1094, %v1096
        %vm1099 = vmpackc.low %vm1098, %vm1097
        %v1100 = vunpack.c.l.b16 %v1033
        %v1101 = vunpack.c.h.b16 %v1033
        %v1102 = vunpack.c.l.b16 0
        %v1103 = vunpack.c.h.b16 0
        %vm1104 = vcmp.ne.s32.totalorder %v1100, %v1102
        %vm1105 = vcmp.ne.s32.totalorder %v1101, %v1103
        %vm1106 = vmpackc.low %vm1105, %vm1104
        %v1107 = vunpack.c.l.b16 %v1043
        %v1108 = vunpack.c.h.b16 %v1043
        %v1109 = vunpack.c.l.b16 0
        %v1110 = vunpack.c.h.b16 0
        %vm1111 = vcmp.ne.s32.totalorder %v1107, %v1109
        %vm1112 = vcmp.ne.s32.totalorder %v1108, %v1110
        %vm1113 = vmpackc.low %vm1112, %vm1111
        %v1114 = vunpack.c.l.b16 %v1053
        %v1115 = vunpack.c.h.b16 %v1053
        %v1116 = vunpack.c.l.b16 0
        %v1117 = vunpack.c.h.b16 0
        %vm1118 = vcmp.ne.s32.totalorder %v1114, %v1116
        %vm1119 = vcmp.ne.s32.totalorder %v1115, %v1117
        %vm1120 = vmpackc.low %vm1119, %vm1118
        %v1121 = vunpack.c.l.b16 %v1063
        %v1122 = vunpack.c.h.b16 %v1063
        %v1123 = vunpack.c.l.b16 0
        %v1124 = vunpack.c.h.b16 0
        %vm1125 = vcmp.ne.s32.totalorder %v1121, %v1123
        %vm1126 = vcmp.ne.s32.totalorder %v1122, %v1124
        %vm1127 = vmpackc.low %vm1126, %vm1125
        %v1128 = vunpack.c.l.b16 %v1073
        %v1129 = vunpack.c.h.b16 %v1073
        %v1130 = vunpack.c.l.b16 0
        %v1131 = vunpack.c.h.b16 0
        %vm1132 = vcmp.ne.s32.totalorder %v1128, %v1130
        %vm1133 = vcmp.ne.s32.totalorder %v1129, %v1131
        %vm1134 = vmpackc.low %vm1133, %vm1132
        %v1135 = vunpack.c.l.b16 %v1078
        %v1136 = vunpack.c.h.b16 %v1078
        %v1137 = vunpack.c.l.b16 0
        %v1138 = vunpack.c.h.b16 0
        %vm1139 = vcmp.ne.s32.totalorder %v1135, %v1137
        %vm1140 = vcmp.ne.s32.totalorder %v1136, %v1138
        %vm1141 = vmpackc.low %vm1140, %vm1139
        %v1142 = vsel %vm1085, %v956, 0
        %v1143 = vsel %vm1092, %v957, 0
        %v1144 = vsel %vm1099, %v958, 0
        %v1145 = vsel %vm1106, %v959, 0
        %v1146 = vsel %vm1113, %v960, 0
        %v1147 = vsel %vm1120, %v961, 0
        %v1148 = vsel %vm1127, %v962, 0
        %v1149 = vsel %vm1134, %v963, 0
        %v1150 = vsel %vm1141, %v964, 0
        %v1151 = vld [vmem:[%s3] sm:$0xf]
        %v1152 = vld [vmem:[%s3 + $0x4] sm:$0xf]
        %v1153 = vld [vmem:[%s3 + $0x8] sm:$0xf]
        %v1154 = vld [vmem:[%s3 + $0xc] sm:$0xf]
        %v1155 = vld [vmem:[%s3 + $0x10] sm:$0xf]
        %v1156 = vld [vmem:[%s3 + $0x14] sm:$0xf]
        %v1157 = vld [vmem:[%s3 + $0x18] sm:$0xf]
        %v1158 = vld [vmem:[%s3 + $0x1c] sm:$0xf]
        %v1159 = vld [vmem:[%s3 + $0x20] sm:$0xf]
        %v1160 = vld [vmem:[%s3 + $0x24] sm:$0xf]
        %v1161 = vld [vmem:[%s3 + $0x28] sm:$0xf]
        %v1162 = vld [vmem:[%s3 + $0x2c] sm:$0xf]
        %v1163 = vld [vmem:[%s3 + $0x30] sm:$0xf]
        %v1164 = vld [vmem:[%s3 + $0x34] sm:$0xf]
        %v1165 = vld [vmem:[%s3 + $0x38] sm:$0xf]
        %v1166 = vld [vmem:[%s3 + $0x3c] sm:$0xf]
        %s1167 = scalar_lea.vmem %s3, 64
        %v1168 = vld [vmem:[%s1167] sm:$0xf]
        %v1169 = vld [vmem:[%s1167 + $0x4] sm:$0xf]
        %v1170 = vld [vmem:[%s1167 + $0x8] sm:$0xf]
        %v1171 = vld [vmem:[%s1167 + $0xc] sm:$0xf]
        %v1172 = vld [vmem:[%s1167 + $0x10] sm:$0xf]
        %v1173 = vld [vmem:[%s1167 + $0x14] sm:$0xf]
        %v1174 = vld [vmem:[%s1167 + $0x18] sm:$0xf]
        %v1175 = vld [vmem:[%s1167 + $0x1c] sm:$0xf]
        %v1176 = vld [vmem:[%s1167 + $0x20] sm:$0xf]
        %v1177 = vld [vmem:[%s1167 + $0x24] sm:$0xf]
        %v1178 = vld [vmem:[%s1167 + $0x28] sm:$0xf]
        %v1179 = vld [vmem:[%s1167 + $0x2c] sm:$0xf]
        %v1180 = vld [vmem:[%s1167 + $0x30] sm:$0xf]
        %v1181 = vld [vmem:[%s1167 + $0x34] sm:$0xf]
        %v1182 = vld [vmem:[%s1167 + $0x38] sm:$0xf]
        %v1183 = vld [vmem:[%s1167 + $0x3c] sm:$0xf]
        %v1192 = vunpack.c.l.b16 %v957
        %v1193 = vunpack.c.l.b16 %v958
        %v1194 = vunpack.c.l.b16 %v959
        %v1195 = vunpack.c.l.b16 %v960
        %v1196 = vunpack.c.l.b16 %v961
        %v1197 = vunpack.c.l.b16 %v962
        %v1198 = vunpack.c.l.b16 %v963
        %v1199 = vunpack.c.l.b16 %v964
        %v1200 = vpack.c.b16 %v1193, %v1192
        %v1201 = vpack.c.b16 %v1195, %v1194
        %v1202 = vpack.c.b16 %v1197, %v1196
        %v1203 = vpack.c.b16 %v1199, %v1198
        %v1224 = vunpack.c.l.b16 %v1168
        %v1225 = vunpack.c.l.b16 %v1169
        %v1226 = vunpack.c.l.b16 %v1170
        %v1227 = vunpack.c.l.b16 %v1171
        %v1228 = vunpack.c.l.b16 %v1172
        %v1229 = vunpack.c.l.b16 %v1173
        %v1230 = vunpack.c.l.b16 %v1174
        %v1231 = vunpack.c.l.b16 %v1175
        %v1232 = vunpack.c.l.b16 %v1176
        %v1233 = vunpack.c.l.b16 %v1177
        %v1234 = vunpack.c.l.b16 %v1178
        %v1235 = vunpack.c.l.b16 %v1179
        %v1236 = vunpack.c.l.b16 %v1180
        %v1237 = vunpack.c.l.b16 %v1181
        %v1238 = vunpack.c.l.b16 %v1182
        %v1239 = vunpack.c.l.b16 %v1183
        %v1240 = vpack.c.b16 %v1225, %v1224
        %v1241 = vpack.c.b16 %v1227, %v1226
        %v1242 = vpack.c.b16 %v1229, %v1228
        %v1243 = vpack.c.b16 %v1231, %v1230
        %v1244 = vpack.c.b16 %v1233, %v1232
        %v1245 = vpack.c.b16 %v1235, %v1234
        %v1246 = vpack.c.b16 %v1237, %v1236
        %v1247 = vpack.c.b16 %v1239, %v1238
        %1256 = vmatpush.bf16.msra.mxu0 %v1247
        %1257 = vmatpush.bf16.msra.mxu0 %v1246
        %1258 = vmatpush.bf16.msra.mxu0 %v1245
        %1259 = vmatpush.bf16.msra.mxu0 %v1244
        %1260 = vmatpush.bf16.msra.mxu0 %v1243
        %1261 = vmatpush.bf16.msra.mxu0 %v1242
        %1262 = vmatpush.bf16.msra.mxu0 %v1241
        %1263 = vmatpush.bf16.msra.mxu0 %v1240
        %1264 = vmatmul.bf16.gmra.mxu0 %v1200
        %v1265 = vpop.f32.mrf.mxu0
        %v1266 = vadd.f32 0.0, %v1265
        %v1267 = vpop.f32.mrf.mxu0
        %v1268 = vadd.f32 0.0, %v1267
        %1269 = vmatmul.bf16.gmra.mxu0 %v1201
        %v1270 = vpop.f32.mrf.mxu0
        %v1271 = vadd.f32 0.0, %v1270
        %v1272 = vpop.f32.mrf.mxu0
        %v1273 = vadd.f32 0.0, %v1272
        %1274 = vmatmul.bf16.gmra.mxu0 %v1202
        %v1275 = vpop.f32.mrf.mxu0
        %v1276 = vadd.f32 0.0, %v1275
        %v1277 = vpop.f32.mrf.mxu0
        %v1278 = vadd.f32 0.0, %v1277
        %1279 = vmatmul.bf16.gmra.mxu0 %v1203
        %v1280 = vpop.f32.mrf.mxu0
        %v1281 = vadd.f32 0.0, %v1280
        %v1282 = vpop.f32.mrf.mxu0
        %v1283 = vadd.f32 0.0, %v1282
        %1284 = vdwg.mxu0
        %v1294 = vunpack.c.l.b16 %v1142
        %v1295 = vunpack.c.l.b16 %v1143
        %v1296 = vunpack.c.l.b16 %v1144
        %v1297 = vunpack.c.l.b16 %v1145
        %v1298 = vunpack.c.l.b16 %v1146
        %v1299 = vunpack.c.l.b16 %v1147
        %v1300 = vunpack.c.l.b16 %v1148
        %v1301 = vunpack.c.l.b16 %v1149
        %v1302 = vunpack.c.l.b16 %v1150
        %v1303 = vpack.c.b16 %v1295, %v1294
        %v1304 = vpack.c.b16 %v1297, %v1296
        %v1305 = vpack.c.b16 %v1299, %v1298
        %v1306 = vpack.c.b16 %v1301, %v1300
        %v1307 = vpack.c.b16 %v1302, %v1302
        %vm1308 = vsmask.f32 4352
        %v1310 = vshrl.u32 %v1303, 16
        %v1312 = vrot.slane %v1310, 3
        %v1313 = vshll.u32 %v1303, 16
        %v1315 = vrot.slane %v1313, 4
        %v1316 = vor.u32 %v1312, %v1315
        %v1318 = vshrl.u32 %v1304, 16
        %v1320 = vrot.slane %v1318, 3
        %v1321 = vshll.u32 %v1304, 16
        %v1323 = vrot.slane %v1321, 4
        %v1324 = vor.u32 %v1320, %v1323
        %v1325 = vsel %vm1308, %v1316, %v1324
        %v1327 = vshrl.u32 %v1305, 16
        %v1329 = vrot.slane %v1327, 3
        %v1330 = vshll.u32 %v1305, 16
        %v1332 = vrot.slane %v1330, 4
        %v1333 = vor.u32 %v1329, %v1332
        %v1334 = vsel %vm1308, %v1324, %v1333
        %v1336 = vshrl.u32 %v1306, 16
        %v1338 = vrot.slane %v1336, 3
        %v1339 = vshll.u32 %v1306, 16
        %v1341 = vrot.slane %v1339, 4
        %v1342 = vor.u32 %v1338, %v1341
        %v1343 = vsel %vm1308, %v1333, %v1342
        %v1345 = vshrl.u32 %v1307, 16
        %v1347 = vrot.slane %v1345, 3
        %v1348 = vshll.u32 %v1307, 16
        %v1350 = vrot.slane %v1348, 4
        %v1351 = vor.u32 %v1347, %v1350
        %v1352 = vsel %vm1308, %v1342, %v1351
        %v1373 = vunpack.c.l.b16 %v1151
        %v1374 = vunpack.c.l.b16 %v1152
        %v1375 = vunpack.c.l.b16 %v1153
        %v1376 = vunpack.c.l.b16 %v1154
        %v1377 = vunpack.c.l.b16 %v1155
        %v1378 = vunpack.c.l.b16 %v1156
        %v1379 = vunpack.c.l.b16 %v1157
        %v1380 = vunpack.c.l.b16 %v1158
        %v1381 = vunpack.c.l.b16 %v1159
        %v1382 = vunpack.c.l.b16 %v1160
        %v1383 = vunpack.c.l.b16 %v1161
        %v1384 = vunpack.c.l.b16 %v1162
        %v1385 = vunpack.c.l.b16 %v1163
        %v1386 = vunpack.c.l.b16 %v1164
        %v1387 = vunpack.c.l.b16 %v1165
        %v1388 = vunpack.c.l.b16 %v1166
        %v1389 = vpack.c.b16 %v1374, %v1373
        %v1390 = vpack.c.b16 %v1376, %v1375
        %v1391 = vpack.c.b16 %v1378, %v1377
        %v1392 = vpack.c.b16 %v1380, %v1379
        %v1393 = vpack.c.b16 %v1382, %v1381
        %v1394 = vpack.c.b16 %v1384, %v1383
        %v1395 = vpack.c.b16 %v1386, %v1385
        %v1396 = vpack.c.b16 %v1388, %v1387
        %1405 = vmatpush.bf16.msra.mxu0 %v1396
        %1406 = vmatpush.bf16.msra.mxu0 %v1395
        %1407 = vmatpush.bf16.msra.mxu0 %v1394
        %1408 = vmatpush.bf16.msra.mxu0 %v1393
        %1409 = vmatpush.bf16.msra.mxu0 %v1392
        %1410 = vmatpush.bf16.msra.mxu0 %v1391
        %1411 = vmatpush.bf16.msra.mxu0 %v1390
        %1412 = vmatpush.bf16.msra.mxu0 %v1389
        %1413 = vmatmul.bf16.gmra.mxu0 %v1325
        %v1414 = vpop.f32.mrf.mxu0
        %v1415 = vadd.f32 %v1266, %v1414
        %v1416 = vpop.f32.mrf.mxu0
        %v1417 = vadd.f32 %v1268, %v1416
        %1418 = vmatmul.bf16.gmra.mxu0 %v1334
        %v1419 = vpop.f32.mrf.mxu0
        %v1420 = vadd.f32 %v1271, %v1419
        %v1421 = vpop.f32.mrf.mxu0
        %v1422 = vadd.f32 %v1273, %v1421
        %1423 = vmatmul.bf16.gmra.mxu0 %v1343
        %v1424 = vpop.f32.mrf.mxu0
        %v1425 = vadd.f32 %v1276, %v1424
        %v1426 = vpop.f32.mrf.mxu0
        %v1427 = vadd.f32 %v1278, %v1426
        %1428 = vmatmul.bf16.gmra.mxu0 %v1352
        %v1429 = vpop.f32.mrf.mxu0
        %v1430 = vadd.f32 %v1281, %v1429
        %v1431 = vpop.f32.mrf.mxu0
        %v1432 = vadd.f32 %v1283, %v1431
        %1433 = vdwg.mxu0
        %v1434 = vld [vmem:[#allocation2 + $0x4] sm:$0xf]
        %v1435 = vld [vmem:[#allocation2 + $0x8] sm:$0xf]
        %v1436 = vld [vmem:[#allocation2 + $0xc] sm:$0xf]
        %v1437 = vld [vmem:[#allocation2 + $0x10] sm:$0xf]
        %v1438 = vld [vmem:[#allocation2 + $0x14] sm:$0xf]
        %v1439 = vld [vmem:[#allocation2 + $0x18] sm:$0xf]
        %v1440 = vld [vmem:[#allocation2 + $0x1c] sm:$0xf]
        %v1441 = vld [vmem:[#allocation2 + $0x20] sm:$0xf]
        %v1442 = vld [vmem:[#allocation2 + $0x24] sm:$0x1]
        %v1443 = vsel %vm591, 1, 0
        %v1444 = vsel %vm592, 1, 0
        %v1445 = vsel %vm593, 1, 0
        %v1446 = vsel %vm594, 1, 0
        %v1447 = vsel %vm595, 1, 0
        %v1448 = vsel %vm596, 1, 0
        %v1449 = vsel %vm597, 1, 0
        %v1450 = vsel %vm598, 1, 0
        %vm1451 = vcmp.eq.s32.totalorder %v1443, 1
        %vm1452 = vcmp.eq.s32.totalorder %v1444, 1
        %vm1453 = vcmp.eq.s32.totalorder %v1445, 1
        %vm1454 = vcmp.eq.s32.totalorder %v1446, 1
        %vm1455 = vcmp.eq.s32.totalorder %v1447, 1
        %vm1456 = vcmp.eq.s32.totalorder %v1448, 1
        %vm1457 = vcmp.eq.s32.totalorder %v1449, 1
        %vm1458 = vcmp.eq.s32.totalorder %v1450, 1
        %vm1459 = vmpackc.low %vm1451, %vm1451
        %vm1460 = vmpackc.low %vm1452, %vm1452
        %vm1461 = vmpackc.low %vm1453, %vm1453
        %vm1462 = vmpackc.low %vm1454, %vm1454
        %vm1463 = vmpackc.low %vm1455, %vm1455
        %vm1464 = vmpackc.low %vm1456, %vm1456
        %vm1465 = vmpackc.low %vm1457, %vm1457
        %vm1466 = vmpackc.low %vm1458, %vm1458
        %v1467 = vsel %vm1459, 65537, 0
        %v1468 = vsel %vm1460, 65537, 0
        %v1469 = vsel %vm1461, 65537, 0
        %v1470 = vsel %vm1462, 65537, 0
        %v1471 = vsel %vm1463, 65537, 0
        %v1472 = vsel %vm1464, 65537, 0
        %v1473 = vsel %vm1465, 65537, 0
        %v1474 = vsel %vm1466, 65537, 0
        %vm1475 = vsmask.f32 256
        %vm1476 = vsmask.f32 4368
        %vm1477 = vmor %vm1475, %vm1476
        %v1479 = vshrl.u32 %v1467, 16
        %v1481 = vrot.slane %v1479, 7
        %v1482 = vshll.u32 %v1467, 16
        %v1484 = vor.u32 %v1481, %v1482
        %v1485 = vrot.slane %v1481, 4
        %v1487 = vshrl.u32 %v1468, 16
        %v1489 = vrot.slane %v1487, 7
        %v1490 = vshll.u32 %v1468, 16
        %v1492 = vor.u32 %v1489, %v1490
        %v1493 = vsel %vm1477, %v1485, %v1492
        %v1494 = vrot.slane %v1489, 4
        %v1496 = vshrl.u32 %v1469, 16
        %v1498 = vrot.slane %v1496, 7
        %v1499 = vshll.u32 %v1469, 16
        %v1501 = vor.u32 %v1498, %v1499
        %v1502 = vsel %vm1477, %v1494, %v1501
        %v1503 = vrot.slane %v1498, 4
        %v1505 = vshrl.u32 %v1470, 16
        %v1507 = vrot.slane %v1505, 7
        %v1508 = vshll.u32 %v1470, 16
        %v1510 = vor.u32 %v1507, %v1508
        %v1511 = vsel %vm1477, %v1503, %v1510
        %v1512 = vrot.slane %v1507, 4
        %v1514 = vshrl.u32 %v1471, 16
        %v1516 = vrot.slane %v1514, 7
        %v1517 = vshll.u32 %v1471, 16
        %v1519 = vor.u32 %v1516, %v1517
        %v1520 = vsel %vm1477, %v1512, %v1519
        %v1521 = vrot.slane %v1516, 4
        %v1523 = vshrl.u32 %v1472, 16
        %v1525 = vrot.slane %v1523, 7
        %v1526 = vshll.u32 %v1472, 16
        %v1528 = vor.u32 %v1525, %v1526
        %v1529 = vsel %vm1477, %v1521, %v1528
        %v1530 = vrot.slane %v1525, 4
        %v1532 = vshrl.u32 %v1473, 16
        %v1534 = vrot.slane %v1532, 7
        %v1535 = vshll.u32 %v1473, 16
        %v1537 = vor.u32 %v1534, %v1535
        %v1538 = vsel %vm1477, %v1530, %v1537
        %v1539 = vrot.slane %v1534, 4
        %v1541 = vshrl.u32 %v1474, 16
        %v1543 = vrot.slane %v1541, 7
        %v1544 = vshll.u32 %v1474, 16
        %v1546 = vor.u32 %v1543, %v1544
        %v1547 = vsel %vm1477, %v1539, %v1546
        %v1548 = vrot.slane %v1543, 4
        %v1549 = vunpack.c.l.b16 %v1484
        %v1550 = vunpack.c.h.b16 %v1484
        %v1551 = vunpack.c.l.b16 0
        %v1552 = vunpack.c.h.b16 0
        %vm1553 = vcmp.ne.s32.totalorder %v1549, %v1551
        %vm1554 = vcmp.ne.s32.totalorder %v1550, %v1552
        %vm1555 = vmpackc.low %vm1554, %vm1553
        %v1556 = vunpack.c.l.b16 %v1493
        %v1557 = vunpack.c.h.b16 %v1493
        %v1558 = vunpack.c.l.b16 0
        %v1559 = vunpack.c.h.b16 0
        %vm1560 = vcmp.ne.s32.totalorder %v1556, %v1558
        %vm1561 = vcmp.ne.s32.totalorder %v1557, %v1559
        %vm1562 = vmpackc.low %vm1561, %vm1560
        %v1563 = vunpack.c.l.b16 %v1502
        %v1564 = vunpack.c.h.b16 %v1502
        %v1565 = vunpack.c.l.b16 0
        %v1566 = vunpack.c.h.b16 0
        %vm1567 = vcmp.ne.s32.totalorder %v1563, %v1565
        %vm1568 = vcmp.ne.s32.totalorder %v1564, %v1566
        %vm1569 = vmpackc.low %vm1568, %vm1567
        %v1570 = vunpack.c.l.b16 %v1511
        %v1571 = vunpack.c.h.b16 %v1511
        %v1572 = vunpack.c.l.b16 0
        %v1573 = vunpack.c.h.b16 0
        %vm1574 = vcmp.ne.s32.totalorder %v1570, %v1572
        %vm1575 = vcmp.ne.s32.totalorder %v1571, %v1573
        %vm1576 = vmpackc.low %vm1575, %vm1574
        %v1577 = vunpack.c.l.b16 %v1520
        %v1578 = vunpack.c.h.b16 %v1520
        %v1579 = vunpack.c.l.b16 0
        %v1580 = vunpack.c.h.b16 0
        %vm1581 = vcmp.ne.s32.totalorder %v1577, %v1579
        %vm1582 = vcmp.ne.s32.totalorder %v1578, %v1580
        %vm1583 = vmpackc.low %vm1582, %vm1581
        %v1584 = vunpack.c.l.b16 %v1529
        %v1585 = vunpack.c.h.b16 %v1529
        %v1586 = vunpack.c.l.b16 0
        %v1587 = vunpack.c.h.b16 0
        %vm1588 = vcmp.ne.s32.totalorder %v1584, %v1586
        %vm1589 = vcmp.ne.s32.totalorder %v1585, %v1587
        %vm1590 = vmpackc.low %vm1589, %vm1588
        %v1591 = vunpack.c.l.b16 %v1538
        %v1592 = vunpack.c.h.b16 %v1538
        %v1593 = vunpack.c.l.b16 0
        %v1594 = vunpack.c.h.b16 0
        %vm1595 = vcmp.ne.s32.totalorder %v1591, %v1593
        %vm1596 = vcmp.ne.s32.totalorder %v1592, %v1594
        %vm1597 = vmpackc.low %vm1596, %vm1595
        %v1598 = vunpack.c.l.b16 %v1547
        %v1599 = vunpack.c.h.b16 %v1547
        %v1600 = vunpack.c.l.b16 0
        %v1601 = vunpack.c.h.b16 0
        %vm1602 = vcmp.ne.s32.totalorder %v1598, %v1600
        %vm1603 = vcmp.ne.s32.totalorder %v1599, %v1601
        %vm1604 = vmpackc.low %vm1603, %vm1602
        %v1605 = vunpack.c.l.b16 %v1548
        %v1606 = vunpack.c.h.b16 %v1548
        %v1607 = vunpack.c.l.b16 0
        %v1608 = vunpack.c.h.b16 0
        %vm1609 = vcmp.ne.s32.totalorder %v1605, %v1607
        %vm1610 = vcmp.ne.s32.totalorder %v1606, %v1608
        %vm1611 = vmpackc.low %vm1610, %vm1609
        %v1612 = vsel %vm1555, %v1434, 0
        %v1613 = vsel %vm1562, %v1435, 0
        %v1614 = vsel %vm1569, %v1436, 0
        %v1615 = vsel %vm1576, %v1437, 0
        %v1616 = vsel %vm1583, %v1438, 0
        %v1617 = vsel %vm1590, %v1439, 0
        %v1618 = vsel %vm1597, %v1440, 0
        %v1619 = vsel %vm1604, %v1441, 0
        %v1620 = vsel %vm1611, %v1442, 0
        %s1621 = scalar_lea.vmem %s3, 128
        %v1622 = vld [vmem:[%s1621] sm:$0xf]
        %v1623 = vld [vmem:[%s1621 + $0x4] sm:$0xf]
        %v1624 = vld [vmem:[%s1621 + $0x8] sm:$0xf]
        %v1625 = vld [vmem:[%s1621 + $0xc] sm:$0xf]
        %v1626 = vld [vmem:[%s1621 + $0x10] sm:$0xf]
        %v1627 = vld [vmem:[%s1621 + $0x14] sm:$0xf]
        %v1628 = vld [vmem:[%s1621 + $0x18] sm:$0xf]
        %v1629 = vld [vmem:[%s1621 + $0x1c] sm:$0xf]
        %v1630 = vld [vmem:[%s1621 + $0x20] sm:$0xf]
        %v1631 = vld [vmem:[%s1621 + $0x24] sm:$0xf]
        %v1632 = vld [vmem:[%s1621 + $0x28] sm:$0xf]
        %v1633 = vld [vmem:[%s1621 + $0x2c] sm:$0xf]
        %v1634 = vld [vmem:[%s1621 + $0x30] sm:$0xf]
        %v1635 = vld [vmem:[%s1621 + $0x34] sm:$0xf]
        %v1636 = vld [vmem:[%s1621 + $0x38] sm:$0xf]
        %v1637 = vld [vmem:[%s1621 + $0x3c] sm:$0xf]
        %v1647 = vunpack.c.l.b16 %v1612
        %v1648 = vunpack.c.l.b16 %v1613
        %v1649 = vunpack.c.l.b16 %v1614
        %v1650 = vunpack.c.l.b16 %v1615
        %v1651 = vunpack.c.l.b16 %v1616
        %v1652 = vunpack.c.l.b16 %v1617
        %v1653 = vunpack.c.l.b16 %v1618
        %v1654 = vunpack.c.l.b16 %v1619
        %v1655 = vunpack.c.l.b16 %v1620
        %v1656 = vpack.c.b16 %v1648, %v1647
        %v1657 = vpack.c.b16 %v1650, %v1649
        %v1658 = vpack.c.b16 %v1652, %v1651
        %v1659 = vpack.c.b16 %v1654, %v1653
        %v1660 = vpack.c.b16 %v1655, %v1655
        %vm1661 = vsmask.f32 7424
        %v1663 = vshrl.u32 %v1656, 16
        %v1665 = vshll.u32 %v1656, 16
        %v1667 = vrot.slane %v1665, 1
        %v1668 = vor.u32 %v1663, %v1667
        %v1670 = vshll.u32 %v1657, 16
        %v1672 = vrot.slane %v1670, 1
        %v1673 = vsel %vm1661, %v1668, %v1672
        %v1674 = vshrl.u32 %v1657, 16
        %v1676 = vor.u32 %v1674, %v1672
        %v1678 = vshll.u32 %v1658, 16
        %v1680 = vrot.slane %v1678, 1
        %v1681 = vsel %vm1661, %v1676, %v1680
        %v1682 = vshrl.u32 %v1658, 16
        %v1684 = vor.u32 %v1682, %v1680
        %v1686 = vshll.u32 %v1659, 16
        %v1688 = vrot.slane %v1686, 1
        %v1689 = vsel %vm1661, %v1684, %v1688
        %v1690 = vshrl.u32 %v1659, 16
        %v1692 = vor.u32 %v1690, %v1688
        %v1694 = vshll.u32 %v1660, 16
        %v1696 = vrot.slane %v1694, 1
        %v1697 = vsel %vm1661, %v1692, %v1696
        %v1718 = vunpack.c.l.b16 %v1622
        %v1719 = vunpack.c.l.b16 %v1623
        %v1720 = vunpack.c.l.b16 %v1624
        %v1721 = vunpack.c.l.b16 %v1625
        %v1722 = vunpack.c.l.b16 %v1626
        %v1723 = vunpack.c.l.b16 %v1627
        %v1724 = vunpack.c.l.b16 %v1628
        %v1725 = vunpack.c.l.b16 %v1629
        %v1726 = vunpack.c.l.b16 %v1630
        %v1727 = vunpack.c.l.b16 %v1631
        %v1728 = vunpack.c.l.b16 %v1632
        %v1729 = vunpack.c.l.b16 %v1633
        %v1730 = vunpack.c.l.b16 %v1634
        %v1731 = vunpack.c.l.b16 %v1635
        %v1732 = vunpack.c.l.b16 %v1636
        %v1733 = vunpack.c.l.b16 %v1637
        %v1734 = vpack.c.b16 %v1719, %v1718
        %v1735 = vpack.c.b16 %v1721, %v1720
        %v1736 = vpack.c.b16 %v1723, %v1722
        %v1737 = vpack.c.b16 %v1725, %v1724
        %v1738 = vpack.c.b16 %v1727, %v1726
        %v1739 = vpack.c.b16 %v1729, %v1728
        %v1740 = vpack.c.b16 %v1731, %v1730
        %v1741 = vpack.c.b16 %v1733, %v1732
        %1750 = vmatpush.bf16.msra.mxu0 %v1741
        %1751 = vmatpush.bf16.msra.mxu0 %v1740
        %1752 = vmatpush.bf16.msra.mxu0 %v1739
        %1753 = vmatpush.bf16.msra.mxu0 %v1738
        %1754 = vmatpush.bf16.msra.mxu0 %v1737
        %1755 = vmatpush.bf16.msra.mxu0 %v1736
        %1756 = vmatpush.bf16.msra.mxu0 %v1735
        %1757 = vmatpush.bf16.msra.mxu0 %v1734
        %1758 = vmatmul.bf16.gmra.mxu0 %v1673
        %v1759 = vpop.f32.mrf.mxu0
        %v1760 = vadd.f32 0.0, %v1759
        %v1761 = vpop.f32.mrf.mxu0
        %v1762 = vadd.f32 0.0, %v1761
        %1763 = vmatmul.bf16.gmra.mxu0 %v1681
        %v1764 = vpop.f32.mrf.mxu0
        %v1765 = vadd.f32 0.0, %v1764
        %v1766 = vpop.f32.mrf.mxu0
        %v1767 = vadd.f32 0.0, %v1766
        %1768 = vmatmul.bf16.gmra.mxu0 %v1689
        %v1769 = vpop.f32.mrf.mxu0
        %v1770 = vadd.f32 0.0, %v1769
        %v1771 = vpop.f32.mrf.mxu0
        %v1772 = vadd.f32 0.0, %v1771
        %1773 = vmatmul.bf16.gmra.mxu0 %v1697
        %v1774 = vpop.f32.mrf.mxu0
        %v1775 = vadd.f32 0.0, %v1774
        %v1776 = vpop.f32.mrf.mxu0
        %v1777 = vadd.f32 0.0, %v1776
        %1778 = vdwg.mxu0
        %v1779 = vadd.f32 %v1415, %v1760
        %v1780 = vadd.f32 %v1417, %v1762
        %v1781 = vadd.f32 %v1420, %v1765
        %v1782 = vadd.f32 %v1422, %v1767
        %v1783 = vadd.f32 %v1425, %v1770
        %v1784 = vadd.f32 %v1427, %v1772
        %v1785 = vadd.f32 %v1430, %v1775
        %v1786 = vadd.f32 %v1432, %v1777
        %v1787 = vld [vmem:[#allocation2 + $0x4] sm:$0x8]
        %v1788 = vld [vmem:[#allocation2 + $0x24] sm:$0xf]
        %v1789 = vsel %vm1085, %v1787, 0
        %v1790 = vsel %vm1092, %v1435, 0
        %v1791 = vsel %vm1099, %v1436, 0
        %v1792 = vsel %vm1106, %v1437, 0
        %v1793 = vsel %vm1113, %v1438, 0
        %v1794 = vsel %vm1120, %v1439, 0
        %v1795 = vsel %vm1127, %v1440, 0
        %v1796 = vsel %vm1134, %v1441, 0
        %v1797 = vsel %vm1141, %v1788, 0
        %s1798 = scalar_lea.vmem %s3, 192
        %v1799 = vld [vmem:[%s1798] sm:$0xf]
        %v1800 = vld [vmem:[%s1798 + $0x4] sm:$0xf]
        %v1801 = vld [vmem:[%s1798 + $0x8] sm:$0xf]
        %v1802 = vld [vmem:[%s1798 + $0xc] sm:$0xf]
        %v1803 = vld [vmem:[%s1798 + $0x10] sm:$0xf]
        %v1804 = vld [vmem:[%s1798 + $0x14] sm:$0xf]
        %v1805 = vld [vmem:[%s1798 + $0x18] sm:$0xf]
        %v1806 = vld [vmem:[%s1798 + $0x1c] sm:$0xf]
        %v1807 = vld [vmem:[%s1798 + $0x20] sm:$0xf]
        %v1808 = vld [vmem:[%s1798 + $0x24] sm:$0xf]
        %v1809 = vld [vmem:[%s1798 + $0x28] sm:$0xf]
        %v1810 = vld [vmem:[%s1798 + $0x2c] sm:$0xf]
        %v1811 = vld [vmem:[%s1798 + $0x30] sm:$0xf]
        %v1812 = vld [vmem:[%s1798 + $0x34] sm:$0xf]
        %v1813 = vld [vmem:[%s1798 + $0x38] sm:$0xf]
        %v1814 = vld [vmem:[%s1798 + $0x3c] sm:$0xf]
        %v1824 = vunpack.c.l.b16 %v1789
        %v1825 = vunpack.c.l.b16 %v1790
        %v1826 = vunpack.c.l.b16 %v1791
        %v1827 = vunpack.c.l.b16 %v1792
        %v1828 = vunpack.c.l.b16 %v1793
        %v1829 = vunpack.c.l.b16 %v1794
        %v1830 = vunpack.c.l.b16 %v1795
        %v1831 = vunpack.c.l.b16 %v1796
        %v1832 = vunpack.c.l.b16 %v1797
        %v1833 = vpack.c.b16 %v1825, %v1824
        %v1834 = vpack.c.b16 %v1827, %v1826
        %v1835 = vpack.c.b16 %v1829, %v1828
        %v1836 = vpack.c.b16 %v1831, %v1830
        %v1837 = vpack.c.b16 %v1832, %v1832
        %v1839 = vshrl.u32 %v1833, 16
        %v1841 = vrot.slane %v1839, 3
        %v1842 = vshll.u32 %v1833, 16
        %v1844 = vrot.slane %v1842, 4
        %v1845 = vor.u32 %v1841, %v1844
        %v1847 = vshrl.u32 %v1834, 16
        %v1849 = vrot.slane %v1847, 3
        %v1850 = vshll.u32 %v1834, 16
        %v1852 = vrot.slane %v1850, 4
        %v1853 = vor.u32 %v1849, %v1852
        %v1854 = vsel %vm1308, %v1845, %v1853
        %v1856 = vshrl.u32 %v1835, 16
        %v1858 = vrot.slane %v1856, 3
        %v1859 = vshll.u32 %v1835, 16
        %v1861 = vrot.slane %v1859, 4
        %v1862 = vor.u32 %v1858, %v1861
        %v1863 = vsel %vm1308, %v1853, %v1862
        %v1865 = vshrl.u32 %v1836, 16
        %v1867 = vrot.slane %v1865, 3
        %v1868 = vshll.u32 %v1836, 16
        %v1870 = vrot.slane %v1868, 4
        %v1871 = vor.u32 %v1867, %v1870
        %v1872 = vsel %vm1308, %v1862, %v1871
        %v1874 = vshrl.u32 %v1837, 16
        %v1876 = vrot.slane %v1874, 3
        %v1877 = vshll.u32 %v1837, 16
        %v1879 = vrot.slane %v1877, 4
        %v1880 = vor.u32 %v1876, %v1879
        %v1881 = vsel %vm1308, %v1871, %v1880
        %v1902 = vunpack.c.l.b16 %v1799
        %v1903 = vunpack.c.l.b16 %v1800
        %v1904 = vunpack.c.l.b16 %v1801
        %v1905 = vunpack.c.l.b16 %v1802
        %v1906 = vunpack.c.l.b16 %v1803
        %v1907 = vunpack.c.l.b16 %v1804
        %v1908 = vunpack.c.l.b16 %v1805
        %v1909 = vunpack.c.l.b16 %v1806
        %v1910 = vunpack.c.l.b16 %v1807
        %v1911 = vunpack.c.l.b16 %v1808
        %v1912 = vunpack.c.l.b16 %v1809
        %v1913 = vunpack.c.l.b16 %v1810
        %v1914 = vunpack.c.l.b16 %v1811
        %v1915 = vunpack.c.l.b16 %v1812
        %v1916 = vunpack.c.l.b16 %v1813
        %v1917 = vunpack.c.l.b16 %v1814
        %v1918 = vpack.c.b16 %v1903, %v1902
        %v1919 = vpack.c.b16 %v1905, %v1904
        %v1920 = vpack.c.b16 %v1907, %v1906
        %v1921 = vpack.c.b16 %v1909, %v1908
        %v1922 = vpack.c.b16 %v1911, %v1910
        %v1923 = vpack.c.b16 %v1913, %v1912
        %v1924 = vpack.c.b16 %v1915, %v1914
        %v1925 = vpack.c.b16 %v1917, %v1916
        %1934 = vmatpush.bf16.msra.mxu0 %v1925
        %1935 = vmatpush.bf16.msra.mxu0 %v1924
        %1936 = vmatpush.bf16.msra.mxu0 %v1923
        %1937 = vmatpush.bf16.msra.mxu0 %v1922
        %1938 = vmatpush.bf16.msra.mxu0 %v1921
        %1939 = vmatpush.bf16.msra.mxu0 %v1920
        %1940 = vmatpush.bf16.msra.mxu0 %v1919
        %1941 = vmatpush.bf16.msra.mxu0 %v1918
        %1942 = vmatmul.bf16.gmra.mxu0 %v1854
        %v1943 = vpop.f32.mrf.mxu0
        %v1944 = vadd.f32 0.0, %v1943
        %v1945 = vpop.f32.mrf.mxu0
        %v1946 = vadd.f32 0.0, %v1945
        %1947 = vmatmul.bf16.gmra.mxu0 %v1863
        %v1948 = vpop.f32.mrf.mxu0
        %v1949 = vadd.f32 0.0, %v1948
        %v1950 = vpop.f32.mrf.mxu0
        %v1951 = vadd.f32 0.0, %v1950
        %1952 = vmatmul.bf16.gmra.mxu0 %v1872
        %v1953 = vpop.f32.mrf.mxu0
        %v1954 = vadd.f32 0.0, %v1953
        %v1955 = vpop.f32.mrf.mxu0
        %v1956 = vadd.f32 0.0, %v1955
        %1957 = vmatmul.bf16.gmra.mxu0 %v1881
        %v1958 = vpop.f32.mrf.mxu0
        %v1959 = vadd.f32 0.0, %v1958
        %v1960 = vpop.f32.mrf.mxu0
        %v1961 = vadd.f32 0.0, %v1960
        %1962 = vdwg.mxu0
        %v1963 = vadd.f32 %v1779, %v1944
        %v1964 = vadd.f32 %v1780, %v1946
        %v1965 = vadd.f32 %v1781, %v1949
        %v1966 = vadd.f32 %v1782, %v1951
        %v1967 = vadd.f32 %v1783, %v1954
        %v1968 = vadd.f32 %v1784, %v1956
        %v1969 = vadd.f32 %v1785, %v1959
        %v1970 = vadd.f32 %v1786, %v1961
        %s1971 = scalar_lea.vmem %s3, 256
        %v1972 = vld [vmem:[%s1971] sm:$0xf]
        %v1973 = vld [vmem:[%s1971 + $0x4] sm:$0xf]
        %v1974 = vld [vmem:[%s1971 + $0x8] sm:$0xf]
        %v1975 = vld [vmem:[%s1971 + $0xc] sm:$0xf]
        %v1976 = vld [vmem:[%s1971 + $0x10] sm:$0xf]
        %v1977 = vld [vmem:[%s1971 + $0x14] sm:$0xf]
        %v1978 = vld [vmem:[%s1971 + $0x18] sm:$0xf]
        %v1979 = vld [vmem:[%s1971 + $0x1c] sm:$0xf]
        %v1980 = vld [vmem:[%s1971 + $0x20] sm:$0xf]
        %v1981 = vld [vmem:[%s1971 + $0x24] sm:$0xf]
        %v1982 = vld [vmem:[%s1971 + $0x28] sm:$0xf]
        %v1983 = vld [vmem:[%s1971 + $0x2c] sm:$0xf]
        %v1984 = vld [vmem:[%s1971 + $0x30] sm:$0xf]
        %v1985 = vld [vmem:[%s1971 + $0x34] sm:$0xf]
        %v1986 = vld [vmem:[%s1971 + $0x38] sm:$0xf]
        %v1987 = vld [vmem:[%s1971 + $0x3c] sm:$0xf]
        %v1996 = vunpack.c.l.b16 %v1435
        %v1997 = vunpack.c.l.b16 %v1436
        %v1998 = vunpack.c.l.b16 %v1437
        %v1999 = vunpack.c.l.b16 %v1438
        %v2000 = vunpack.c.l.b16 %v1439
        %v2001 = vunpack.c.l.b16 %v1440
        %v2002 = vunpack.c.l.b16 %v1441
        %v2003 = vunpack.c.l.b16 %v1788
        %v2004 = vpack.c.b16 %v1997, %v1996
        %v2005 = vpack.c.b16 %v1999, %v1998
        %v2006 = vpack.c.b16 %v2001, %v2000
        %v2007 = vpack.c.b16 %v2003, %v2002
        %v2028 = vunpack.c.l.b16 %v1972
        %v2029 = vunpack.c.l.b16 %v1973
        %v2030 = vunpack.c.l.b16 %v1974
        %v2031 = vunpack.c.l.b16 %v1975
        %v2032 = vunpack.c.l.b16 %v1976
        %v2033 = vunpack.c.l.b16 %v1977
        %v2034 = vunpack.c.l.b16 %v1978
        %v2035 = vunpack.c.l.b16 %v1979
        %v2036 = vunpack.c.l.b16 %v1980
        %v2037 = vunpack.c.l.b16 %v1981
        %v2038 = vunpack.c.l.b16 %v1982
        %v2039 = vunpack.c.l.b16 %v1983
        %v2040 = vunpack.c.l.b16 %v1984
        %v2041 = vunpack.c.l.b16 %v1985
        %v2042 = vunpack.c.l.b16 %v1986
        %v2043 = vunpack.c.l.b16 %v1987
        %v2044 = vpack.c.b16 %v2029, %v2028
        %v2045 = vpack.c.b16 %v2031, %v2030
        %v2046 = vpack.c.b16 %v2033, %v2032
        %v2047 = vpack.c.b16 %v2035, %v2034
        %v2048 = vpack.c.b16 %v2037, %v2036
        %v2049 = vpack.c.b16 %v2039, %v2038
        %v2050 = vpack.c.b16 %v2041, %v2040
        %v2051 = vpack.c.b16 %v2043, %v2042
        %2060 = vmatpush.bf16.msra.mxu0 %v2051
        %2061 = vmatpush.bf16.msra.mxu0 %v2050
        %2062 = vmatpush.bf16.msra.mxu0 %v2049
        %2063 = vmatpush.bf16.msra.mxu0 %v2048
        %2064 = vmatpush.bf16.msra.mxu0 %v2047
        %2065 = vmatpush.bf16.msra.mxu0 %v2046
        %2066 = vmatpush.bf16.msra.mxu0 %v2045
        %2067 = vmatpush.bf16.msra.mxu0 %v2044
        %2068 = vmatmul.bf16.gmra.mxu0 %v2004
        %v2069 = vpop.f32.mrf.mxu0
        %v2070 = vadd.f32 0.0, %v2069
        %v2071 = vpop.f32.mrf.mxu0
        %v2072 = vadd.f32 0.0, %v2071
        %2073 = vmatmul.bf16.gmra.mxu0 %v2005
        %v2074 = vpop.f32.mrf.mxu0
        %v2075 = vadd.f32 0.0, %v2074
        %v2076 = vpop.f32.mrf.mxu0
        %v2077 = vadd.f32 0.0, %v2076
        %2078 = vmatmul.bf16.gmra.mxu0 %v2006
        %v2079 = vpop.f32.mrf.mxu0
        %v2080 = vadd.f32 0.0, %v2079
        %v2081 = vpop.f32.mrf.mxu0
        %v2082 = vadd.f32 0.0, %v2081
        %2083 = vmatmul.bf16.gmra.mxu0 %v2007
        %v2084 = vpop.f32.mrf.mxu0
        %v2085 = vadd.f32 0.0, %v2084
        %v2086 = vpop.f32.mrf.mxu0
        %v2087 = vadd.f32 0.0, %v2086
        %2088 = vdwg.mxu0
        %v2089 = vadd.f32 %v1963, %v2070
        %v2090 = vadd.f32 %v1964, %v2072
        %v2091 = vadd.f32 %v1965, %v2075
        %v2092 = vadd.f32 %v1966, %v2077
        %v2093 = vadd.f32 %v1967, %v2080
        %v2094 = vadd.f32 %v1968, %v2082
        %v2095 = vadd.f32 %v1969, %v2085
        %v2096 = vadd.f32 %v1970, %v2087
        %v2097 = vld [vmem:[#allocation2 + $0x8] sm:$0xf]
        %v2098 = vld [vmem:[#allocation2 + $0xc] sm:$0xf]
        %v2099 = vld [vmem:[#allocation2 + $0x10] sm:$0xf]
        %v2100 = vld [vmem:[#allocation2 + $0x14] sm:$0xf]
        %v2101 = vld [vmem:[#allocation2 + $0x18] sm:$0xf]
        %v2102 = vld [vmem:[#allocation2 + $0x1c] sm:$0xf]
        %v2103 = vld [vmem:[#allocation2 + $0x20] sm:$0xf]
        %v2104 = vld [vmem:[#allocation2 + $0x24] sm:$0xf]
        %v2105 = vld [vmem:[#allocation2 + $0x28] sm:$0x1]
        %v2106 = vsel %vm1555, %v2097, 0
        %v2107 = vsel %vm1562, %v2098, 0
        %v2108 = vsel %vm1569, %v2099, 0
        %v2109 = vsel %vm1576, %v2100, 0
        %v2110 = vsel %vm1583, %v2101, 0
        %v2111 = vsel %vm1590, %v2102, 0
        %v2112 = vsel %vm1597, %v2103, 0
        %v2113 = vsel %vm1604, %v2104, 0
        %v2114 = vsel %vm1611, %v2105, 0
        %s2115 = scalar_lea.vmem %s3, 320
        %v2116 = vld [vmem:[%s2115] sm:$0xf]
        %v2117 = vld [vmem:[%s2115 + $0x4] sm:$0xf]
        %v2118 = vld [vmem:[%s2115 + $0x8] sm:$0xf]
        %v2119 = vld [vmem:[%s2115 + $0xc] sm:$0xf]
        %v2120 = vld [vmem:[%s2115 + $0x10] sm:$0xf]
        %v2121 = vld [vmem:[%s2115 + $0x14] sm:$0xf]
        %v2122 = vld [vmem:[%s2115 + $0x18] sm:$0xf]
        %v2123 = vld [vmem:[%s2115 + $0x1c] sm:$0xf]
        %v2124 = vld [vmem:[%s2115 + $0x20] sm:$0xf]
        %v2125 = vld [vmem:[%s2115 + $0x24] sm:$0xf]
        %v2126 = vld [vmem:[%s2115 + $0x28] sm:$0xf]
        %v2127 = vld [vmem:[%s2115 + $0x2c] sm:$0xf]
        %v2128 = vld [vmem:[%s2115 + $0x30] sm:$0xf]
        %v2129 = vld [vmem:[%s2115 + $0x34] sm:$0xf]
        %v2130 = vld [vmem:[%s2115 + $0x38] sm:$0xf]
        %v2131 = vld [vmem:[%s2115 + $0x3c] sm:$0xf]
        %v2141 = vunpack.c.l.b16 %v2106
        %v2142 = vunpack.c.l.b16 %v2107
        %v2143 = vunpack.c.l.b16 %v2108
        %v2144 = vunpack.c.l.b16 %v2109
        %v2145 = vunpack.c.l.b16 %v2110
        %v2146 = vunpack.c.l.b16 %v2111
        %v2147 = vunpack.c.l.b16 %v2112
        %v2148 = vunpack.c.l.b16 %v2113
        %v2149 = vunpack.c.l.b16 %v2114
        %v2150 = vpack.c.b16 %v2142, %v2141
        %v2151 = vpack.c.b16 %v2144, %v2143
        %v2152 = vpack.c.b16 %v2146, %v2145
        %v2153 = vpack.c.b16 %v2148, %v2147
        %v2154 = vpack.c.b16 %v2149, %v2149
        %v2156 = vshrl.u32 %v2150, 16
        %v2158 = vshll.u32 %v2150, 16
        %v2160 = vrot.slane %v2158, 1
        %v2161 = vor.u32 %v2156, %v2160
        %v2163 = vshll.u32 %v2151, 16
        %v2165 = vrot.slane %v2163, 1
        %v2166 = vsel %vm1661, %v2161, %v2165
        %v2167 = vshrl.u32 %v2151, 16
        %v2169 = vor.u32 %v2167, %v2165
        %v2171 = vshll.u32 %v2152, 16
        %v2173 = vrot.slane %v2171, 1
        %v2174 = vsel %vm1661, %v2169, %v2173
        %v2175 = vshrl.u32 %v2152, 16
        %v2177 = vor.u32 %v2175, %v2173
        %v2179 = vshll.u32 %v2153, 16
        %v2181 = vrot.slane %v2179, 1
        %v2182 = vsel %vm1661, %v2177, %v2181
        %v2183 = vshrl.u32 %v2153, 16
        %v2185 = vor.u32 %v2183, %v2181
        %v2187 = vshll.u32 %v2154, 16
        %v2189 = vrot.slane %v2187, 1
        %v2190 = vsel %vm1661, %v2185, %v2189
        %v2211 = vunpack.c.l.b16 %v2116
        %v2212 = vunpack.c.l.b16 %v2117
        %v2213 = vunpack.c.l.b16 %v2118
        %v2214 = vunpack.c.l.b16 %v2119
        %v2215 = vunpack.c.l.b16 %v2120
        %v2216 = vunpack.c.l.b16 %v2121
        %v2217 = vunpack.c.l.b16 %v2122
        %v2218 = vunpack.c.l.b16 %v2123
        %v2219 = vunpack.c.l.b16 %v2124
        %v2220 = vunpack.c.l.b16 %v2125
        %v2221 = vunpack.c.l.b16 %v2126
        %v2222 = vunpack.c.l.b16 %v2127
        %v2223 = vunpack.c.l.b16 %v2128
        %v2224 = vunpack.c.l.b16 %v2129
        %v2225 = vunpack.c.l.b16 %v2130
        %v2226 = vunpack.c.l.b16 %v2131
        %v2227 = vpack.c.b16 %v2212, %v2211
        %v2228 = vpack.c.b16 %v2214, %v2213
        %v2229 = vpack.c.b16 %v2216, %v2215
        %v2230 = vpack.c.b16 %v2218, %v2217
        %v2231 = vpack.c.b16 %v2220, %v2219
        %v2232 = vpack.c.b16 %v2222, %v2221
        %v2233 = vpack.c.b16 %v2224, %v2223
        %v2234 = vpack.c.b16 %v2226, %v2225
        %2243 = vmatpush.bf16.msra.mxu0 %v2234
        %2244 = vmatpush.bf16.msra.mxu0 %v2233
        %2245 = vmatpush.bf16.msra.mxu0 %v2232
        %2246 = vmatpush.bf16.msra.mxu0 %v2231
        %2247 = vmatpush.bf16.msra.mxu0 %v2230
        %2248 = vmatpush.bf16.msra.mxu0 %v2229
        %2249 = vmatpush.bf16.msra.mxu0 %v2228
        %2250 = vmatpush.bf16.msra.mxu0 %v2227
        %2251 = vmatmul.bf16.gmra.mxu0 %v2166
        %v2252 = vpop.f32.mrf.mxu0
        %v2253 = vadd.f32 0.0, %v2252
        %v2254 = vpop.f32.mrf.mxu0
        %v2255 = vadd.f32 0.0, %v2254
        %2256 = vmatmul.bf16.gmra.mxu0 %v2174
        %v2257 = vpop.f32.mrf.mxu0
        %v2258 = vadd.f32 0.0, %v2257
        %v2259 = vpop.f32.mrf.mxu0
        %v2260 = vadd.f32 0.0, %v2259
        %2261 = vmatmul.bf16.gmra.mxu0 %v2182
        %v2262 = vpop.f32.mrf.mxu0
        %v2263 = vadd.f32 0.0, %v2262
        %v2264 = vpop.f32.mrf.mxu0
        %v2265 = vadd.f32 0.0, %v2264
        %2266 = vmatmul.bf16.gmra.mxu0 %v2190
        %v2267 = vpop.f32.mrf.mxu0
        %v2268 = vadd.f32 0.0, %v2267
        %v2269 = vpop.f32.mrf.mxu0
        %v2270 = vadd.f32 0.0, %v2269
        %2271 = vdwg.mxu0
        %v2272 = vadd.f32 %v2089, %v2253
        %v2273 = vadd.f32 %v2090, %v2255
        %v2274 = vadd.f32 %v2091, %v2258
        %v2275 = vadd.f32 %v2092, %v2260
        %v2276 = vadd.f32 %v2093, %v2263
        %v2277 = vadd.f32 %v2094, %v2265
        %v2278 = vadd.f32 %v2095, %v2268
        %v2279 = vadd.f32 %v2096, %v2270
        %v2280 = vld [vmem:[#allocation2 + $0x8] sm:$0x8]
        %v2281 = vld [vmem:[#allocation2 + $0x28] sm:$0xf]
        %v2282 = vsel %vm1085, %v2280, 0
        %v2283 = vsel %vm1092, %v2098, 0
        %v2284 = vsel %vm1099, %v2099, 0
        %v2285 = vsel %vm1106, %v2100, 0
        %v2286 = vsel %vm1113, %v2101, 0
        %v2287 = vsel %vm1120, %v2102, 0
        %v2288 = vsel %vm1127, %v2103, 0
        %v2289 = vsel %vm1134, %v2104, 0
        %v2290 = vsel %vm1141, %v2281, 0
        %s2291 = scalar_lea.vmem %s3, 384
        %v2292 = vld [vmem:[%s2291] sm:$0xf]
        %v2293 = vld [vmem:[%s2291 + $0x4] sm:$0xf]
        %v2294 = vld [vmem:[%s2291 + $0x8] sm:$0xf]
        %v2295 = vld [vmem:[%s2291 + $0xc] sm:$0xf]
        %v2296 = vld [vmem:[%s2291 + $0x10] sm:$0xf]
        %v2297 = vld [vmem:[%s2291 + $0x14] sm:$0xf]
        %v2298 = vld [vmem:[%s2291 + $0x18] sm:$0xf]
        %v2299 = vld [vmem:[%s2291 + $0x1c] sm:$0xf]
        %v2300 = vld [vmem:[%s2291 + $0x20] sm:$0xf]
        %v2301 = vld [vmem:[%s2291 + $0x24] sm:$0xf]
        %v2302 = vld [vmem:[%s2291 + $0x28] sm:$0xf]
        %v2303 = vld [vmem:[%s2291 + $0x2c] sm:$0xf]
        %v2304 = vld [vmem:[%s2291 + $0x30] sm:$0xf]
        %v2305 = vld [vmem:[%s2291 + $0x34] sm:$0xf]
        %v2306 = vld [vmem:[%s2291 + $0x38] sm:$0xf]
        %v2307 = vld [vmem:[%s2291 + $0x3c] sm:$0xf]
        %v2317 = vunpack.c.l.b16 %v2282
        %v2318 = vunpack.c.l.b16 %v2283
        %v2319 = vunpack.c.l.b16 %v2284
        %v2320 = vunpack.c.l.b16 %v2285
        %v2321 = vunpack.c.l.b16 %v2286
        %v2322 = vunpack.c.l.b16 %v2287
        %v2323 = vunpack.c.l.b16 %v2288
        %v2324 = vunpack.c.l.b16 %v2289
        %v2325 = vunpack.c.l.b16 %v2290
        %v2326 = vpack.c.b16 %v2318, %v2317
        %v2327 = vpack.c.b16 %v2320, %v2319
        %v2328 = vpack.c.b16 %v2322, %v2321
        %v2329 = vpack.c.b16 %v2324, %v2323
        %v2330 = vpack.c.b16 %v2325, %v2325
        %v2332 = vshrl.u32 %v2326, 16
        %v2334 = vrot.slane %v2332, 3
        %v2335 = vshll.u32 %v2326, 16
        %v2337 = vrot.slane %v2335, 4
        %v2338 = vor.u32 %v2334, %v2337
        %v2340 = vshrl.u32 %v2327, 16
        %v2342 = vrot.slane %v2340, 3
        %v2343 = vshll.u32 %v2327, 16
        %v2345 = vrot.slane %v2343, 4
        %v2346 = vor.u32 %v2342, %v2345
        %v2347 = vsel %vm1308, %v2338, %v2346
        %v2349 = vshrl.u32 %v2328, 16
        %v2351 = vrot.slane %v2349, 3
        %v2352 = vshll.u32 %v2328, 16
        %v2354 = vrot.slane %v2352, 4
        %v2355 = vor.u32 %v2351, %v2354
        %v2356 = vsel %vm1308, %v2346, %v2355
        %v2358 = vshrl.u32 %v2329, 16
        %v2360 = vrot.slane %v2358, 3
        %v2361 = vshll.u32 %v2329, 16
        %v2363 = vrot.slane %v2361, 4
        %v2364 = vor.u32 %v2360, %v2363
        %v2365 = vsel %vm1308, %v2355, %v2364
        %v2367 = vshrl.u32 %v2330, 16
        %v2369 = vrot.slane %v2367, 3
        %v2370 = vshll.u32 %v2330, 16
        %v2372 = vrot.slane %v2370, 4
        %v2373 = vor.u32 %v2369, %v2372
        %v2374 = vsel %vm1308, %v2364, %v2373
        %v2395 = vunpack.c.l.b16 %v2292
        %v2396 = vunpack.c.l.b16 %v2293
        %v2397 = vunpack.c.l.b16 %v2294
        %v2398 = vunpack.c.l.b16 %v2295
        %v2399 = vunpack.c.l.b16 %v2296
        %v2400 = vunpack.c.l.b16 %v2297
        %v2401 = vunpack.c.l.b16 %v2298
        %v2402 = vunpack.c.l.b16 %v2299
        %v2403 = vunpack.c.l.b16 %v2300
        %v2404 = vunpack.c.l.b16 %v2301
        %v2405 = vunpack.c.l.b16 %v2302
        %v2406 = vunpack.c.l.b16 %v2303
        %v2407 = vunpack.c.l.b16 %v2304
        %v2408 = vunpack.c.l.b16 %v2305
        %v2409 = vunpack.c.l.b16 %v2306
        %v2410 = vunpack.c.l.b16 %v2307
        %v2411 = vpack.c.b16 %v2396, %v2395
        %v2412 = vpack.c.b16 %v2398, %v2397
        %v2413 = vpack.c.b16 %v2400, %v2399
        %v2414 = vpack.c.b16 %v2402, %v2401
        %v2415 = vpack.c.b16 %v2404, %v2403
        %v2416 = vpack.c.b16 %v2406, %v2405
        %v2417 = vpack.c.b16 %v2408, %v2407
        %v2418 = vpack.c.b16 %v2410, %v2409
        %2427 = vmatpush.bf16.msra.mxu0 %v2418
        %2428 = vmatpush.bf16.msra.mxu0 %v2417
        %2429 = vmatpush.bf16.msra.mxu0 %v2416
        %2430 = vmatpush.bf16.msra.mxu0 %v2415
        %2431 = vmatpush.bf16.msra.mxu0 %v2414
        %2432 = vmatpush.bf16.msra.mxu0 %v2413
        %2433 = vmatpush.bf16.msra.mxu0 %v2412
        %2434 = vmatpush.bf16.msra.mxu0 %v2411
        %2435 = vmatmul.bf16.gmra.mxu0 %v2347
        %v2436 = vpop.f32.mrf.mxu0
        %v2437 = vadd.f32 0.0, %v2436
        %v2438 = vpop.f32.mrf.mxu0
        %v2439 = vadd.f32 0.0, %v2438
        %2440 = vmatmul.bf16.gmra.mxu0 %v2356
        %v2441 = vpop.f32.mrf.mxu0
        %v2442 = vadd.f32 0.0, %v2441
        %v2443 = vpop.f32.mrf.mxu0
        %v2444 = vadd.f32 0.0, %v2443
        %2445 = vmatmul.bf16.gmra.mxu0 %v2365
        %v2446 = vpop.f32.mrf.mxu0
        %v2447 = vadd.f32 0.0, %v2446
        %v2448 = vpop.f32.mrf.mxu0
        %v2449 = vadd.f32 0.0, %v2448
        %2450 = vmatmul.bf16.gmra.mxu0 %v2374
        %v2451 = vpop.f32.mrf.mxu0
        %v2452 = vadd.f32 0.0, %v2451
        %v2453 = vpop.f32.mrf.mxu0
        %v2454 = vadd.f32 0.0, %v2453
        %2455 = vdwg.mxu0
        %v2456 = vadd.f32 %v2272, %v2437
        %v2457 = vadd.f32 %v2273, %v2439
        %v2458 = vadd.f32 %v2274, %v2442
        %v2459 = vadd.f32 %v2275, %v2444
        %v2460 = vadd.f32 %v2276, %v2447
        %v2461 = vadd.f32 %v2277, %v2449
        %v2462 = vadd.f32 %v2278, %v2452
        %v2463 = vadd.f32 %v2279, %v2454
        %s2464 = scalar_lea.vmem %s3, 448
        %v2465 = vld [vmem:[%s2464] sm:$0xf]
        %v2466 = vld [vmem:[%s2464 + $0x4] sm:$0xf]
        %v2467 = vld [vmem:[%s2464 + $0x8] sm:$0xf]
        %v2468 = vld [vmem:[%s2464 + $0xc] sm:$0xf]
        %v2469 = vld [vmem:[%s2464 + $0x10] sm:$0xf]
        %v2470 = vld [vmem:[%s2464 + $0x14] sm:$0xf]
        %v2471 = vld [vmem:[%s2464 + $0x18] sm:$0xf]
        %v2472 = vld [vmem:[%s2464 + $0x1c] sm:$0xf]
        %v2473 = vld [vmem:[%s2464 + $0x20] sm:$0xf]
        %v2474 = vld [vmem:[%s2464 + $0x24] sm:$0xf]
        %v2475 = vld [vmem:[%s2464 + $0x28] sm:$0xf]
        %v2476 = vld [vmem:[%s2464 + $0x2c] sm:$0xf]
        %v2477 = vld [vmem:[%s2464 + $0x30] sm:$0xf]
        %v2478 = vld [vmem:[%s2464 + $0x34] sm:$0xf]
        %v2479 = vld [vmem:[%s2464 + $0x38] sm:$0xf]
        %v2480 = vld [vmem:[%s2464 + $0x3c] sm:$0xf]
        %v2489 = vunpack.c.l.b16 %v2098
        %v2490 = vunpack.c.l.b16 %v2099
        %v2491 = vunpack.c.l.b16 %v2100
        %v2492 = vunpack.c.l.b16 %v2101
        %v2493 = vunpack.c.l.b16 %v2102
        %v2494 = vunpack.c.l.b16 %v2103
        %v2495 = vunpack.c.l.b16 %v2104
        %v2496 = vunpack.c.l.b16 %v2281
        %v2497 = vpack.c.b16 %v2490, %v2489
        %v2498 = vpack.c.b16 %v2492, %v2491
        %v2499 = vpack.c.b16 %v2494, %v2493
        %v2500 = vpack.c.b16 %v2496, %v2495
        %v2521 = vunpack.c.l.b16 %v2465
        %v2522 = vunpack.c.l.b16 %v2466
        %v2523 = vunpack.c.l.b16 %v2467
        %v2524 = vunpack.c.l.b16 %v2468
        %v2525 = vunpack.c.l.b16 %v2469
        %v2526 = vunpack.c.l.b16 %v2470
        %v2527 = vunpack.c.l.b16 %v2471
        %v2528 = vunpack.c.l.b16 %v2472
        %v2529 = vunpack.c.l.b16 %v2473
        %v2530 = vunpack.c.l.b16 %v2474
        %v2531 = vunpack.c.l.b16 %v2475
        %v2532 = vunpack.c.l.b16 %v2476
        %v2533 = vunpack.c.l.b16 %v2477
        %v2534 = vunpack.c.l.b16 %v2478
        %v2535 = vunpack.c.l.b16 %v2479
        %v2536 = vunpack.c.l.b16 %v2480
        %v2537 = vpack.c.b16 %v2522, %v2521
        %v2538 = vpack.c.b16 %v2524, %v2523
        %v2539 = vpack.c.b16 %v2526, %v2525
        %v2540 = vpack.c.b16 %v2528, %v2527
        %v2541 = vpack.c.b16 %v2530, %v2529
        %v2542 = vpack.c.b16 %v2532, %v2531
        %v2543 = vpack.c.b16 %v2534, %v2533
        %v2544 = vpack.c.b16 %v2536, %v2535
        %2553 = vmatpush.bf16.msra.mxu0 %v2544
        %2554 = vmatpush.bf16.msra.mxu0 %v2543
        %2555 = vmatpush.bf16.msra.mxu0 %v2542
        %2556 = vmatpush.bf16.msra.mxu0 %v2541
        %2557 = vmatpush.bf16.msra.mxu0 %v2540
        %2558 = vmatpush.bf16.msra.mxu0 %v2539
        %2559 = vmatpush.bf16.msra.mxu0 %v2538
        %2560 = vmatpush.bf16.msra.mxu0 %v2537
        %2561 = vmatmul.bf16.gmra.mxu0 %v2497
        %v2562 = vpop.f32.mrf.mxu0
        %v2563 = vadd.f32 0.0, %v2562
        %v2564 = vpop.f32.mrf.mxu0
        %v2565 = vadd.f32 0.0, %v2564
        %2566 = vmatmul.bf16.gmra.mxu0 %v2498
        %v2567 = vpop.f32.mrf.mxu0
        %v2568 = vadd.f32 0.0, %v2567
        %v2569 = vpop.f32.mrf.mxu0
        %v2570 = vadd.f32 0.0, %v2569
        %2571 = vmatmul.bf16.gmra.mxu0 %v2499
        %v2572 = vpop.f32.mrf.mxu0
        %v2573 = vadd.f32 0.0, %v2572
        %v2574 = vpop.f32.mrf.mxu0
        %v2575 = vadd.f32 0.0, %v2574
        %2576 = vmatmul.bf16.gmra.mxu0 %v2500
        %v2577 = vpop.f32.mrf.mxu0
        %v2578 = vadd.f32 0.0, %v2577
        %v2579 = vpop.f32.mrf.mxu0
        %v2580 = vadd.f32 0.0, %v2579
        %2581 = vdwg.mxu0
        %v2582 = vadd.f32 %v2456, %v2563
        %v2583 = vadd.f32 %v2457, %v2565
        %v2584 = vadd.f32 %v2458, %v2568
        %v2585 = vadd.f32 %v2459, %v2570
        %v2586 = vadd.f32 %v2460, %v2573
        %v2587 = vadd.f32 %v2461, %v2575
        %v2588 = vadd.f32 %v2462, %v2578
        %v2589 = vadd.f32 %v2463, %v2580
        %v2590 = vld [vmem:[#allocation2 + $0xc] sm:$0xf]
        %v2591 = vld [vmem:[#allocation2 + $0x10] sm:$0xf]
        %v2592 = vld [vmem:[#allocation2 + $0x14] sm:$0xf]
        %v2593 = vld [vmem:[#allocation2 + $0x18] sm:$0xf]
        %v2594 = vld [vmem:[#allocation2 + $0x1c] sm:$0xf]
        %v2595 = vld [vmem:[#allocation2 + $0x20] sm:$0xf]
        %v2596 = vld [vmem:[#allocation2 + $0x24] sm:$0xf]
        %v2597 = vld [vmem:[#allocation2 + $0x28] sm:$0xf]
        %v2598 = vld [vmem:[#allocation2 + $0x2c] sm:$0x1]
        %v2599 = vsel %vm1555, %v2590, 0
        %v2600 = vsel %vm1562, %v2591, 0
        %v2601 = vsel %vm1569, %v2592, 0
        %v2602 = vsel %vm1576, %v2593, 0
        %v2603 = vsel %vm1583, %v2594, 0
        %v2604 = vsel %vm1590, %v2595, 0
        %v2605 = vsel %vm1597, %v2596, 0
        %v2606 = vsel %vm1604, %v2597, 0
        %v2607 = vsel %vm1611, %v2598, 0
        %s2608 = scalar_lea.vmem %s3, 512
        %v2609 = vld [vmem:[%s2608] sm:$0xf]
        %v2610 = vld [vmem:[%s2608 + $0x4] sm:$0xf]
        %v2611 = vld [vmem:[%s2608 + $0x8] sm:$0xf]
        %v2612 = vld [vmem:[%s2608 + $0xc] sm:$0xf]
        %v2613 = vld [vmem:[%s2608 + $0x10] sm:$0xf]
        %v2614 = vld [vmem:[%s2608 + $0x14] sm:$0xf]
        %v2615 = vld [vmem:[%s2608 + $0x18] sm:$0xf]
        %v2616 = vld [vmem:[%s2608 + $0x1c] sm:$0xf]
        %v2617 = vld [vmem:[%s2608 + $0x20] sm:$0xf]
        %v2618 = vld [vmem:[%s2608 + $0x24] sm:$0xf]
        %v2619 = vld [vmem:[%s2608 + $0x28] sm:$0xf]
        %v2620 = vld [vmem:[%s2608 + $0x2c] sm:$0xf]
        %v2621 = vld [vmem:[%s2608 + $0x30] sm:$0xf]
        %v2622 = vld [vmem:[%s2608 + $0x34] sm:$0xf]
        %v2623 = vld [vmem:[%s2608 + $0x38] sm:$0xf]
        %v2624 = vld [vmem:[%s2608 + $0x3c] sm:$0xf]
        %v2634 = vunpack.c.l.b16 %v2599
        %v2635 = vunpack.c.l.b16 %v2600
        %v2636 = vunpack.c.l.b16 %v2601
        %v2637 = vunpack.c.l.b16 %v2602
        %v2638 = vunpack.c.l.b16 %v2603
        %v2639 = vunpack.c.l.b16 %v2604
        %v2640 = vunpack.c.l.b16 %v2605
        %v2641 = vunpack.c.l.b16 %v2606
        %v2642 = vunpack.c.l.b16 %v2607
        %v2643 = vpack.c.b16 %v2635, %v2634
        %v2644 = vpack.c.b16 %v2637, %v2636
        %v2645 = vpack.c.b16 %v2639, %v2638
        %v2646 = vpack.c.b16 %v2641, %v2640
        %v2647 = vpack.c.b16 %v2642, %v2642
        %v2649 = vshrl.u32 %v2643, 16
        %v2651 = vshll.u32 %v2643, 16
        %v2653 = vrot.slane %v2651, 1
        %v2654 = vor.u32 %v2649, %v2653
        %v2656 = vshll.u32 %v2644, 16
        %v2658 = vrot.slane %v2656, 1
        %v2659 = vsel %vm1661, %v2654, %v2658
        %v2660 = vshrl.u32 %v2644, 16
        %v2662 = vor.u32 %v2660, %v2658
        %v2664 = vshll.u32 %v2645, 16
        %v2666 = vrot.slane %v2664, 1
        %v2667 = vsel %vm1661, %v2662, %v2666
        %v2668 = vshrl.u32 %v2645, 16
        %v2670 = vor.u32 %v2668, %v2666
        %v2672 = vshll.u32 %v2646, 16
        %v2674 = vrot.slane %v2672, 1
        %v2675 = vsel %vm1661, %v2670, %v2674
        %v2676 = vshrl.u32 %v2646, 16
        %v2678 = vor.u32 %v2676, %v2674
        %v2680 = vshll.u32 %v2647, 16
        %v2682 = vrot.slane %v2680, 1
        %v2683 = vsel %vm1661, %v2678, %v2682
        %v2704 = vunpack.c.l.b16 %v2609
        %v2705 = vunpack.c.l.b16 %v2610
        %v2706 = vunpack.c.l.b16 %v2611
        %v2707 = vunpack.c.l.b16 %v2612
        %v2708 = vunpack.c.l.b16 %v2613
        %v2709 = vunpack.c.l.b16 %v2614
        %v2710 = vunpack.c.l.b16 %v2615
        %v2711 = vunpack.c.l.b16 %v2616
        %v2712 = vunpack.c.l.b16 %v2617
        %v2713 = vunpack.c.l.b16 %v2618
        %v2714 = vunpack.c.l.b16 %v2619
        %v2715 = vunpack.c.l.b16 %v2620
        %v2716 = vunpack.c.l.b16 %v2621
        %v2717 = vunpack.c.l.b16 %v2622
        %v2718 = vunpack.c.l.b16 %v2623
        %v2719 = vunpack.c.l.b16 %v2624
        %v2720 = vpack.c.b16 %v2705, %v2704
        %v2721 = vpack.c.b16 %v2707, %v2706
        %v2722 = vpack.c.b16 %v2709, %v2708
        %v2723 = vpack.c.b16 %v2711, %v2710
        %v2724 = vpack.c.b16 %v2713, %v2712
        %v2725 = vpack.c.b16 %v2715, %v2714
        %v2726 = vpack.c.b16 %v2717, %v2716
        %v2727 = vpack.c.b16 %v2719, %v2718
        %2736 = vmatpush.bf16.msra.mxu0 %v2727
        %2737 = vmatpush.bf16.msra.mxu0 %v2726
        %2738 = vmatpush.bf16.msra.mxu0 %v2725
        %2739 = vmatpush.bf16.msra.mxu0 %v2724
        %2740 = vmatpush.bf16.msra.mxu0 %v2723
        %2741 = vmatpush.bf16.msra.mxu0 %v2722
        %2742 = vmatpush.bf16.msra.mxu0 %v2721
        %2743 = vmatpush.bf16.msra.mxu0 %v2720
        %2744 = vmatmul.bf16.gmra.mxu0 %v2659
        %v2745 = vpop.f32.mrf.mxu0
        %v2746 = vadd.f32 0.0, %v2745
        %v2747 = vpop.f32.mrf.mxu0
        %v2748 = vadd.f32 0.0, %v2747
        %2749 = vmatmul.bf16.gmra.mxu0 %v2667
        %v2750 = vpop.f32.mrf.mxu0
        %v2751 = vadd.f32 0.0, %v2750
        %v2752 = vpop.f32.mrf.mxu0
        %v2753 = vadd.f32 0.0, %v2752
        %2754 = vmatmul.bf16.gmra.mxu0 %v2675
        %v2755 = vpop.f32.mrf.mxu0
        %v2756 = vadd.f32 0.0, %v2755
        %v2757 = vpop.f32.mrf.mxu0
        %v2758 = vadd.f32 0.0, %v2757
        %2759 = vmatmul.bf16.gmra.mxu0 %v2683
        %v2760 = vpop.f32.mrf.mxu0
        %v2761 = vadd.f32 0.0, %v2760
        %v2762 = vpop.f32.mrf.mxu0
        %v2763 = vadd.f32 0.0, %v2762
        %2764 = vdwg.mxu0
        %v2765 = vadd.f32 %v2582, %v2746
        %v2766 = vadd.f32 %v2583, %v2748
        %v2767 = vadd.f32 %v2584, %v2751
        %v2768 = vadd.f32 %v2585, %v2753
        %v2769 = vadd.f32 %v2586, %v2756
        %v2770 = vadd.f32 %v2587, %v2758
        %v2771 = vadd.f32 %v2588, %v2761
        %v2772 = vadd.f32 %v2589, %v2763
        %v2773 = vld [vmem:[%s4] sm:$0x1]
        %v2775 = vperm.slane %v2773, 0
        %v2777 = vadd.f32 %v2765, %v2775
        %v2778 = vadd.f32 %v2766, %v2775
        %v2779 = vadd.f32 %v2767, %v2775
        %v2780 = vadd.f32 %v2768, %v2775
        %v2781 = vadd.f32 %v2769, %v2775
        %v2782 = vadd.f32 %v2770, %v2775
        %v2783 = vadd.f32 %v2771, %v2775
        %v2784 = vadd.f32 %v2772, %v2775
        %v2785 = vmax.f32 %v2777, 0.0
        %v2786 = vmax.f32 %v2778, 0.0
        %v2787 = vmax.f32 %v2779, 0.0
        %v2788 = vmax.f32 %v2780, 0.0
        %v2789 = vmax.f32 %v2781, 0.0
        %v2790 = vmax.f32 %v2782, 0.0
        %v2791 = vmax.f32 %v2783, 0.0
        %v2792 = vmax.f32 %v2784, 0.0
        %v2793 = vpack.c.bf16 %v2786, %v2785
        %v2794 = vpack.c.bf16 %v2788, %v2787
        %v2795 = vpack.c.bf16 %v2790, %v2789
        %v2796 = vpack.c.bf16 %v2792, %v2791
        %2797 = vrot.lane.b32.xlu0 %v907, 64
        %v2798 = vpop.permute.xlu0 %2797
        %2799 = vrot.lane.b32.xlu0 %v908, 64
        %v2800 = vpop.permute.xlu0 %2799
        %2801 = vrot.lane.b32.xlu0 %v909, 64
        %v2802 = vpop.permute.xlu0 %2801
        %2803 = vrot.lane.b32.xlu0 %v910, 64
        %v2804 = vpop.permute.xlu0 %2803
        %2805 = vrot.lane.b32.xlu0 %v911, 64
        %v2806 = vpop.permute.xlu0 %2805
        %2807 = vrot.lane.b32.xlu0 %v912, 64
        %v2808 = vpop.permute.xlu0 %2807
        %2809 = vrot.lane.b32.xlu0 %v913, 64
        %v2810 = vpop.permute.xlu0 %2809
        %2811 = vrot.lane.b32.xlu0 %v914, 64
        %v2812 = vpop.permute.xlu0 %2811
        %2821 = vst.msk [vmem:[#allocation3 + $0x8] sm:$0xf] %vm947, %v2798
        %2822 = vst.msk [vmem:[#allocation3 + $0xc] sm:$0xf] %vm947, %v2800
        %2823 = vst.msk [vmem:[#allocation3 + $0x10] sm:$0xf] %vm947, %v2802
        %2824 = vst.msk [vmem:[#allocation3 + $0x14] sm:$0xf] %vm947, %v2804
        %2825 = vst.msk [vmem:[#allocation3 + $0x18] sm:$0xf] %vm947, %v2806
        %2826 = vst.msk [vmem:[#allocation3 + $0x1c] sm:$0xf] %vm947, %v2808
        %2827 = vst.msk [vmem:[#allocation3 + $0x20] sm:$0xf] %vm947, %v2810
        %2828 = vst.msk [vmem:[#allocation3 + $0x24] sm:$0xf] %vm947, %v2812
        %v2829 = vld [vmem:[#allocation3] sm:$0x8]
        %v2830 = vld [vmem:[#allocation3 + $0x4] sm:$0xf]
        %v2831 = vld [vmem:[#allocation3 + $0x8] sm:$0xf]
        %v2832 = vld [vmem:[#allocation3 + $0xc] sm:$0xf]
        %v2833 = vld [vmem:[#allocation3 + $0x10] sm:$0xf]
        %v2834 = vld [vmem:[#allocation3 + $0x14] sm:$0xf]
        %v2835 = vld [vmem:[#allocation3 + $0x18] sm:$0xf]
        %v2836 = vld [vmem:[#allocation3 + $0x1c] sm:$0xf]
        %v2837 = vld [vmem:[#allocation3 + $0x20] sm:$0xf]
        %v2838 = vsel %vm1085, %v2829, 0
        %v2839 = vsel %vm1092, %v2830, 0
        %v2840 = vsel %vm1099, %v2831, 0
        %v2841 = vsel %vm1106, %v2832, 0
        %v2842 = vsel %vm1113, %v2833, 0
        %v2843 = vsel %vm1120, %v2834, 0
        %v2844 = vsel %vm1127, %v2835, 0
        %v2845 = vsel %vm1134, %v2836, 0
        %v2846 = vsel %vm1141, %v2837, 0
        %v2847 = vld [vmem:[%s5] sm:$0xf]
        %v2848 = vld [vmem:[%s5 + $0x4] sm:$0xf]
        %v2849 = vld [vmem:[%s5 + $0x8] sm:$0xf]
        %v2850 = vld [vmem:[%s5 + $0xc] sm:$0xf]
        %v2851 = vld [vmem:[%s5 + $0x10] sm:$0xf]
        %v2852 = vld [vmem:[%s5 + $0x14] sm:$0xf]
        %v2853 = vld [vmem:[%s5 + $0x18] sm:$0xf]
        %v2854 = vld [vmem:[%s5 + $0x1c] sm:$0xf]
        %v2855 = vld [vmem:[%s5 + $0x20] sm:$0xf]
        %v2856 = vld [vmem:[%s5 + $0x24] sm:$0xf]
        %v2857 = vld [vmem:[%s5 + $0x28] sm:$0xf]
        %v2858 = vld [vmem:[%s5 + $0x2c] sm:$0xf]
        %v2859 = vld [vmem:[%s5 + $0x30] sm:$0xf]
        %v2860 = vld [vmem:[%s5 + $0x34] sm:$0xf]
        %v2861 = vld [vmem:[%s5 + $0x38] sm:$0xf]
        %v2862 = vld [vmem:[%s5 + $0x3c] sm:$0xf]
        %s2863 = scalar_lea.vmem %s5, 64
        %v2864 = vld [vmem:[%s2863] sm:$0xf]
        %v2865 = vld [vmem:[%s2863 + $0x4] sm:$0xf]
        %v2866 = vld [vmem:[%s2863 + $0x8] sm:$0xf]
        %v2867 = vld [vmem:[%s2863 + $0xc] sm:$0xf]
        %v2868 = vld [vmem:[%s2863 + $0x10] sm:$0xf]
        %v2869 = vld [vmem:[%s2863 + $0x14] sm:$0xf]
        %v2870 = vld [vmem:[%s2863 + $0x18] sm:$0xf]
        %v2871 = vld [vmem:[%s2863 + $0x1c] sm:$0xf]
        %v2872 = vld [vmem:[%s2863 + $0x20] sm:$0xf]
        %v2873 = vld [vmem:[%s2863 + $0x24] sm:$0xf]
        %v2874 = vld [vmem:[%s2863 + $0x28] sm:$0xf]
        %v2875 = vld [vmem:[%s2863 + $0x2c] sm:$0xf]
        %v2876 = vld [vmem:[%s2863 + $0x30] sm:$0xf]
        %v2877 = vld [vmem:[%s2863 + $0x34] sm:$0xf]
        %v2878 = vld [vmem:[%s2863 + $0x38] sm:$0xf]
        %v2879 = vld [vmem:[%s2863 + $0x3c] sm:$0xf]
        %v2888 = vunpack.c.l.b16 %v2830
        %v2889 = vunpack.c.l.b16 %v2831
        %v2890 = vunpack.c.l.b16 %v2832
        %v2891 = vunpack.c.l.b16 %v2833
        %v2892 = vunpack.c.l.b16 %v2834
        %v2893 = vunpack.c.l.b16 %v2835
        %v2894 = vunpack.c.l.b16 %v2836
        %v2895 = vunpack.c.l.b16 %v2837
        %v2896 = vpack.c.b16 %v2889, %v2888
        %v2897 = vpack.c.b16 %v2891, %v2890
        %v2898 = vpack.c.b16 %v2893, %v2892
        %v2899 = vpack.c.b16 %v2895, %v2894
        %v2920 = vunpack.c.l.b16 %v2864
        %v2921 = vunpack.c.l.b16 %v2865
        %v2922 = vunpack.c.l.b16 %v2866
        %v2923 = vunpack.c.l.b16 %v2867
        %v2924 = vunpack.c.l.b16 %v2868
        %v2925 = vunpack.c.l.b16 %v2869
        %v2926 = vunpack.c.l.b16 %v2870
        %v2927 = vunpack.c.l.b16 %v2871
        %v2928 = vunpack.c.l.b16 %v2872
        %v2929 = vunpack.c.l.b16 %v2873
        %v2930 = vunpack.c.l.b16 %v2874
        %v2931 = vunpack.c.l.b16 %v2875
        %v2932 = vunpack.c.l.b16 %v2876
        %v2933 = vunpack.c.l.b16 %v2877
        %v2934 = vunpack.c.l.b16 %v2878
        %v2935 = vunpack.c.l.b16 %v2879
        %v2936 = vpack.c.b16 %v2921, %v2920
        %v2937 = vpack.c.b16 %v2923, %v2922
        %v2938 = vpack.c.b16 %v2925, %v2924
        %v2939 = vpack.c.b16 %v2927, %v2926
        %v2940 = vpack.c.b16 %v2929, %v2928
        %v2941 = vpack.c.b16 %v2931, %v2930
        %v2942 = vpack.c.b16 %v2933, %v2932
        %v2943 = vpack.c.b16 %v2935, %v2934
        %2952 = vmatpush.bf16.msra.mxu0 %v2943
        %2953 = vmatpush.bf16.msra.mxu0 %v2942
        %2954 = vmatpush.bf16.msra.mxu0 %v2941
        %2955 = vmatpush.bf16.msra.mxu0 %v2940
        %2956 = vmatpush.bf16.msra.mxu0 %v2939
        %2957 = vmatpush.bf16.msra.mxu0 %v2938
        %2958 = vmatpush.bf16.msra.mxu0 %v2937
        %2959 = vmatpush.bf16.msra.mxu0 %v2936
        %2960 = vmatmul.bf16.gmra.mxu0 %v2896
        %v2961 = vpop.f32.mrf.mxu0
        %v2962 = vadd.f32 0.0, %v2961
        %v2963 = vpop.f32.mrf.mxu0
        %v2964 = vadd.f32 0.0, %v2963
        %2965 = vmatmul.bf16.gmra.mxu0 %v2897
        %v2966 = vpop.f32.mrf.mxu0
        %v2967 = vadd.f32 0.0, %v2966
        %v2968 = vpop.f32.mrf.mxu0
        %v2969 = vadd.f32 0.0, %v2968
        %2970 = vmatmul.bf16.gmra.mxu0 %v2898
        %v2971 = vpop.f32.mrf.mxu0
        %v2972 = vadd.f32 0.0, %v2971
        %v2973 = vpop.f32.mrf.mxu0
        %v2974 = vadd.f32 0.0, %v2973
        %2975 = vmatmul.bf16.gmra.mxu0 %v2899
        %v2976 = vpop.f32.mrf.mxu0
        %v2977 = vadd.f32 0.0, %v2976
        %v2978 = vpop.f32.mrf.mxu0
        %v2979 = vadd.f32 0.0, %v2978
        %2980 = vdwg.mxu0
        %v2990 = vunpack.c.l.b16 %v2838
        %v2991 = vunpack.c.l.b16 %v2839
        %v2992 = vunpack.c.l.b16 %v2840
        %v2993 = vunpack.c.l.b16 %v2841
        %v2994 = vunpack.c.l.b16 %v2842
        %v2995 = vunpack.c.l.b16 %v2843
        %v2996 = vunpack.c.l.b16 %v2844
        %v2997 = vunpack.c.l.b16 %v2845
        %v2998 = vunpack.c.l.b16 %v2846
        %v2999 = vpack.c.b16 %v2991, %v2990
        %v3000 = vpack.c.b16 %v2993, %v2992
        %v3001 = vpack.c.b16 %v2995, %v2994
        %v3002 = vpack.c.b16 %v2997, %v2996
        %v3003 = vpack.c.b16 %v2998, %v2998
        %v3005 = vshrl.u32 %v2999, 16
        %v3007 = vrot.slane %v3005, 3
        %v3008 = vshll.u32 %v2999, 16
        %v3010 = vrot.slane %v3008, 4
        %v3011 = vor.u32 %v3007, %v3010
        %v3013 = vshrl.u32 %v3000, 16
        %v3015 = vrot.slane %v3013, 3
        %v3016 = vshll.u32 %v3000, 16
        %v3018 = vrot.slane %v3016, 4
        %v3019 = vor.u32 %v3015, %v3018
        %v3020 = vsel %vm1308, %v3011, %v3019
        %v3022 = vshrl.u32 %v3001, 16
        %v3024 = vrot.slane %v3022, 3
        %v3025 = vshll.u32 %v3001, 16
        %v3027 = vrot.slane %v3025, 4
        %v3028 = vor.u32 %v3024, %v3027
        %v3029 = vsel %vm1308, %v3019, %v3028
        %v3031 = vshrl.u32 %v3002, 16
        %v3033 = vrot.slane %v3031, 3
        %v3034 = vshll.u32 %v3002, 16
        %v3036 = vrot.slane %v3034, 4
        %v3037 = vor.u32 %v3033, %v3036
        %v3038 = vsel %vm1308, %v3028, %v3037
        %v3040 = vshrl.u32 %v3003, 16
        %v3042 = vrot.slane %v3040, 3
        %v3043 = vshll.u32 %v3003, 16
        %v3045 = vrot.slane %v3043, 4
        %v3046 = vor.u32 %v3042, %v3045
        %v3047 = vsel %vm1308, %v3037, %v3046
        %v3068 = vunpack.c.l.b16 %v2847
        %v3069 = vunpack.c.l.b16 %v2848
        %v3070 = vunpack.c.l.b16 %v2849
        %v3071 = vunpack.c.l.b16 %v2850
        %v3072 = vunpack.c.l.b16 %v2851
        %v3073 = vunpack.c.l.b16 %v2852
        %v3074 = vunpack.c.l.b16 %v2853
        %v3075 = vunpack.c.l.b16 %v2854
        %v3076 = vunpack.c.l.b16 %v2855
        %v3077 = vunpack.c.l.b16 %v2856
        %v3078 = vunpack.c.l.b16 %v2857
        %v3079 = vunpack.c.l.b16 %v2858
        %v3080 = vunpack.c.l.b16 %v2859
        %v3081 = vunpack.c.l.b16 %v2860
        %v3082 = vunpack.c.l.b16 %v2861
        %v3083 = vunpack.c.l.b16 %v2862
        %v3084 = vpack.c.b16 %v3069, %v3068
        %v3085 = vpack.c.b16 %v3071, %v3070
        %v3086 = vpack.c.b16 %v3073, %v3072
        %v3087 = vpack.c.b16 %v3075, %v3074
        %v3088 = vpack.c.b16 %v3077, %v3076
        %v3089 = vpack.c.b16 %v3079, %v3078
        %v3090 = vpack.c.b16 %v3081, %v3080
        %v3091 = vpack.c.b16 %v3083, %v3082
        %3100 = vmatpush.bf16.msra.mxu0 %v3091
        %3101 = vmatpush.bf16.msra.mxu0 %v3090
        %3102 = vmatpush.bf16.msra.mxu0 %v3089
        %3103 = vmatpush.bf16.msra.mxu0 %v3088
        %3104 = vmatpush.bf16.msra.mxu0 %v3087
        %3105 = vmatpush.bf16.msra.mxu0 %v3086
        %3106 = vmatpush.bf16.msra.mxu0 %v3085
        %3107 = vmatpush.bf16.msra.mxu0 %v3084
        %3108 = vmatmul.bf16.gmra.mxu0 %v3020
        %v3109 = vpop.f32.mrf.mxu0
        %v3110 = vadd.f32 %v2962, %v3109
        %v3111 = vpop.f32.mrf.mxu0
        %v3112 = vadd.f32 %v2964, %v3111
        %3113 = vmatmul.bf16.gmra.mxu0 %v3029
        %v3114 = vpop.f32.mrf.mxu0
        %v3115 = vadd.f32 %v2967, %v3114
        %v3116 = vpop.f32.mrf.mxu0
        %v3117 = vadd.f32 %v2969, %v3116
        %3118 = vmatmul.bf16.gmra.mxu0 %v3038
        %v3119 = vpop.f32.mrf.mxu0
        %v3120 = vadd.f32 %v2972, %v3119
        %v3121 = vpop.f32.mrf.mxu0
        %v3122 = vadd.f32 %v2974, %v3121
        %3123 = vmatmul.bf16.gmra.mxu0 %v3047
        %v3124 = vpop.f32.mrf.mxu0
        %v3125 = vadd.f32 %v2977, %v3124
        %v3126 = vpop.f32.mrf.mxu0
        %v3127 = vadd.f32 %v2979, %v3126
        %3128 = vdwg.mxu0
        %v3129 = vld [vmem:[#allocation3 + $0x4] sm:$0xf]
        %v3130 = vld [vmem:[#allocation3 + $0x8] sm:$0xf]
        %v3131 = vld [vmem:[#allocation3 + $0xc] sm:$0xf]
        %v3132 = vld [vmem:[#allocation3 + $0x10] sm:$0xf]
        %v3133 = vld [vmem:[#allocation3 + $0x14] sm:$0xf]
        %v3134 = vld [vmem:[#allocation3 + $0x18] sm:$0xf]
        %v3135 = vld [vmem:[#allocation3 + $0x1c] sm:$0xf]
        %v3136 = vld [vmem:[#allocation3 + $0x20] sm:$0xf]
        %v3137 = vld [vmem:[#allocation3 + $0x24] sm:$0x1]
        %v3138 = vsel %vm1555, %v3129, 0
        %v3139 = vsel %vm1562, %v3130, 0
        %v3140 = vsel %vm1569, %v3131, 0
        %v3141 = vsel %vm1576, %v3132, 0
        %v3142 = vsel %vm1583, %v3133, 0
        %v3143 = vsel %vm1590, %v3134, 0
        %v3144 = vsel %vm1597, %v3135, 0
        %v3145 = vsel %vm1604, %v3136, 0
        %v3146 = vsel %vm1611, %v3137, 0
        %s3147 = scalar_lea.vmem %s5, 128
        %v3148 = vld [vmem:[%s3147] sm:$0xf]
        %v3149 = vld [vmem:[%s3147 + $0x4] sm:$0xf]
        %v3150 = vld [vmem:[%s3147 + $0x8] sm:$0xf]
        %v3151 = vld [vmem:[%s3147 + $0xc] sm:$0xf]
        %v3152 = vld [vmem:[%s3147 + $0x10] sm:$0xf]
        %v3153 = vld [vmem:[%s3147 + $0x14] sm:$0xf]
        %v3154 = vld [vmem:[%s3147 + $0x18] sm:$0xf]
        %v3155 = vld [vmem:[%s3147 + $0x1c] sm:$0xf]
        %v3156 = vld [vmem:[%s3147 + $0x20] sm:$0xf]
        %v3157 = vld [vmem:[%s3147 + $0x24] sm:$0xf]
        %v3158 = vld [vmem:[%s3147 + $0x28] sm:$0xf]
        %v3159 = vld [vmem:[%s3147 + $0x2c] sm:$0xf]
        %v3160 = vld [vmem:[%s3147 + $0x30] sm:$0xf]
        %v3161 = vld [vmem:[%s3147 + $0x34] sm:$0xf]
        %v3162 = vld [vmem:[%s3147 + $0x38] sm:$0xf]
        %v3163 = vld [vmem:[%s3147 + $0x3c] sm:$0xf]
        %v3173 = vunpack.c.l.b16 %v3138
        %v3174 = vunpack.c.l.b16 %v3139
        %v3175 = vunpack.c.l.b16 %v3140
        %v3176 = vunpack.c.l.b16 %v3141
        %v3177 = vunpack.c.l.b16 %v3142
        %v3178 = vunpack.c.l.b16 %v3143
        %v3179 = vunpack.c.l.b16 %v3144
        %v3180 = vunpack.c.l.b16 %v3145
        %v3181 = vunpack.c.l.b16 %v3146
        %v3182 = vpack.c.b16 %v3174, %v3173
        %v3183 = vpack.c.b16 %v3176, %v3175
        %v3184 = vpack.c.b16 %v3178, %v3177
        %v3185 = vpack.c.b16 %v3180, %v3179
        %v3186 = vpack.c.b16 %v3181, %v3181
        %v3188 = vshrl.u32 %v3182, 16
        %v3190 = vshll.u32 %v3182, 16
        %v3192 = vrot.slane %v3190, 1
        %v3193 = vor.u32 %v3188, %v3192
        %v3195 = vshll.u32 %v3183, 16
        %v3197 = vrot.slane %v3195, 1
        %v3198 = vsel %vm1661, %v3193, %v3197
        %v3199 = vshrl.u32 %v3183, 16
        %v3201 = vor.u32 %v3199, %v3197
        %v3203 = vshll.u32 %v3184, 16
        %v3205 = vrot.slane %v3203, 1
        %v3206 = vsel %vm1661, %v3201, %v3205
        %v3207 = vshrl.u32 %v3184, 16
        %v3209 = vor.u32 %v3207, %v3205
        %v3211 = vshll.u32 %v3185, 16
        %v3213 = vrot.slane %v3211, 1
        %v3214 = vsel %vm1661, %v3209, %v3213
        %v3215 = vshrl.u32 %v3185, 16
        %v3217 = vor.u32 %v3215, %v3213
        %v3219 = vshll.u32 %v3186, 16
        %v3221 = vrot.slane %v3219, 1
        %v3222 = vsel %vm1661, %v3217, %v3221
        %v3243 = vunpack.c.l.b16 %v3148
        %v3244 = vunpack.c.l.b16 %v3149
        %v3245 = vunpack.c.l.b16 %v3150
        %v3246 = vunpack.c.l.b16 %v3151
        %v3247 = vunpack.c.l.b16 %v3152
        %v3248 = vunpack.c.l.b16 %v3153
        %v3249 = vunpack.c.l.b16 %v3154
        %v3250 = vunpack.c.l.b16 %v3155
        %v3251 = vunpack.c.l.b16 %v3156
        %v3252 = vunpack.c.l.b16 %v3157
        %v3253 = vunpack.c.l.b16 %v3158
        %v3254 = vunpack.c.l.b16 %v3159
        %v3255 = vunpack.c.l.b16 %v3160
        %v3256 = vunpack.c.l.b16 %v3161
        %v3257 = vunpack.c.l.b16 %v3162
        %v3258 = vunpack.c.l.b16 %v3163
        %v3259 = vpack.c.b16 %v3244, %v3243
        %v3260 = vpack.c.b16 %v3246, %v3245
        %v3261 = vpack.c.b16 %v3248, %v3247
        %v3262 = vpack.c.b16 %v3250, %v3249
        %v3263 = vpack.c.b16 %v3252, %v3251
        %v3264 = vpack.c.b16 %v3254, %v3253
        %v3265 = vpack.c.b16 %v3256, %v3255
        %v3266 = vpack.c.b16 %v3258, %v3257
        %3275 = vmatpush.bf16.msra.mxu0 %v3266
        %3276 = vmatpush.bf16.msra.mxu0 %v3265
        %3277 = vmatpush.bf16.msra.mxu0 %v3264
        %3278 = vmatpush.bf16.msra.mxu0 %v3263
        %3279 = vmatpush.bf16.msra.mxu0 %v3262
        %3280 = vmatpush.bf16.msra.mxu0 %v3261
        %3281 = vmatpush.bf16.msra.mxu0 %v3260
        %3282 = vmatpush.bf16.msra.mxu0 %v3259
        %3283 = vmatmul.bf16.gmra.mxu0 %v3198
        %v3284 = vpop.f32.mrf.mxu0
        %v3285 = vadd.f32 0.0, %v3284
        %v3286 = vpop.f32.mrf.mxu0
        %v3287 = vadd.f32 0.0, %v3286
        %3288 = vmatmul.bf16.gmra.mxu0 %v3206
        %v3289 = vpop.f32.mrf.mxu0
        %v3290 = vadd.f32 0.0, %v3289
        %v3291 = vpop.f32.mrf.mxu0
        %v3292 = vadd.f32 0.0, %v3291
        %3293 = vmatmul.bf16.gmra.mxu0 %v3214
        %v3294 = vpop.f32.mrf.mxu0
        %v3295 = vadd.f32 0.0, %v3294
        %v3296 = vpop.f32.mrf.mxu0
        %v3297 = vadd.f32 0.0, %v3296
        %3298 = vmatmul.bf16.gmra.mxu0 %v3222
        %v3299 = vpop.f32.mrf.mxu0
        %v3300 = vadd.f32 0.0, %v3299
        %v3301 = vpop.f32.mrf.mxu0
        %v3302 = vadd.f32 0.0, %v3301
        %3303 = vdwg.mxu0
        %v3304 = vadd.f32 %v3110, %v3285
        %v3305 = vadd.f32 %v3112, %v3287
        %v3306 = vadd.f32 %v3115, %v3290
        %v3307 = vadd.f32 %v3117, %v3292
        %v3308 = vadd.f32 %v3120, %v3295
        %v3309 = vadd.f32 %v3122, %v3297
        %v3310 = vadd.f32 %v3125, %v3300
        %v3311 = vadd.f32 %v3127, %v3302
        %v3312 = vld [vmem:[#allocation3 + $0x4] sm:$0x8]
        %v3313 = vld [vmem:[#allocation3 + $0x24] sm:$0xf]
        %v3314 = vsel %vm1085, %v3312, 0
        %v3315 = vsel %vm1092, %v3130, 0
        %v3316 = vsel %vm1099, %v3131, 0
        %v3317 = vsel %vm1106, %v3132, 0
        %v3318 = vsel %vm1113, %v3133, 0
        %v3319 = vsel %vm1120, %v3134, 0
        %v3320 = vsel %vm1127, %v3135, 0
        %v3321 = vsel %vm1134, %v3136, 0
        %v3322 = vsel %vm1141, %v3313, 0
        %s3323 = scalar_lea.vmem %s5, 192
        %v3324 = vld [vmem:[%s3323] sm:$0xf]
        %v3325 = vld [vmem:[%s3323 + $0x4] sm:$0xf]
        %v3326 = vld [vmem:[%s3323 + $0x8] sm:$0xf]
        %v3327 = vld [vmem:[%s3323 + $0xc] sm:$0xf]
        %v3328 = vld [vmem:[%s3323 + $0x10] sm:$0xf]
        %v3329 = vld [vmem:[%s3323 + $0x14] sm:$0xf]
        %v3330 = vld [vmem:[%s3323 + $0x18] sm:$0xf]
        %v3331 = vld [vmem:[%s3323 + $0x1c] sm:$0xf]
        %v3332 = vld [vmem:[%s3323 + $0x20] sm:$0xf]
        %v3333 = vld [vmem:[%s3323 + $0x24] sm:$0xf]
        %v3334 = vld [vmem:[%s3323 + $0x28] sm:$0xf]
        %v3335 = vld [vmem:[%s3323 + $0x2c] sm:$0xf]
        %v3336 = vld [vmem:[%s3323 + $0x30] sm:$0xf]
        %v3337 = vld [vmem:[%s3323 + $0x34] sm:$0xf]
        %v3338 = vld [vmem:[%s3323 + $0x38] sm:$0xf]
        %v3339 = vld [vmem:[%s3323 + $0x3c] sm:$0xf]
        %v3349 = vunpack.c.l.b16 %v3314
        %v3350 = vunpack.c.l.b16 %v3315
        %v3351 = vunpack.c.l.b16 %v3316
        %v3352 = vunpack.c.l.b16 %v3317
        %v3353 = vunpack.c.l.b16 %v3318
        %v3354 = vunpack.c.l.b16 %v3319
        %v3355 = vunpack.c.l.b16 %v3320
        %v3356 = vunpack.c.l.b16 %v3321
        %v3357 = vunpack.c.l.b16 %v3322
        %v3358 = vpack.c.b16 %v3350, %v3349
        %v3359 = vpack.c.b16 %v3352, %v3351
        %v3360 = vpack.c.b16 %v3354, %v3353
        %v3361 = vpack.c.b16 %v3356, %v3355
        %v3362 = vpack.c.b16 %v3357, %v3357
        %v3364 = vshrl.u32 %v3358, 16
        %v3366 = vrot.slane %v3364, 3
        %v3367 = vshll.u32 %v3358, 16
        %v3369 = vrot.slane %v3367, 4
        %v3370 = vor.u32 %v3366, %v3369
        %v3372 = vshrl.u32 %v3359, 16
        %v3374 = vrot.slane %v3372, 3
        %v3375 = vshll.u32 %v3359, 16
        %v3377 = vrot.slane %v3375, 4
        %v3378 = vor.u32 %v3374, %v3377
        %v3379 = vsel %vm1308, %v3370, %v3378
        %v3381 = vshrl.u32 %v3360, 16
        %v3383 = vrot.slane %v3381, 3
        %v3384 = vshll.u32 %v3360, 16
        %v3386 = vrot.slane %v3384, 4
        %v3387 = vor.u32 %v3383, %v3386
        %v3388 = vsel %vm1308, %v3378, %v3387
        %v3390 = vshrl.u32 %v3361, 16
        %v3392 = vrot.slane %v3390, 3
        %v3393 = vshll.u32 %v3361, 16
        %v3395 = vrot.slane %v3393, 4
        %v3396 = vor.u32 %v3392, %v3395
        %v3397 = vsel %vm1308, %v3387, %v3396
        %v3399 = vshrl.u32 %v3362, 16
        %v3401 = vrot.slane %v3399, 3
        %v3402 = vshll.u32 %v3362, 16
        %v3404 = vrot.slane %v3402, 4
        %v3405 = vor.u32 %v3401, %v3404
        %v3406 = vsel %vm1308, %v3396, %v3405
        %v3427 = vunpack.c.l.b16 %v3324
        %v3428 = vunpack.c.l.b16 %v3325
        %v3429 = vunpack.c.l.b16 %v3326
        %v3430 = vunpack.c.l.b16 %v3327
        %v3431 = vunpack.c.l.b16 %v3328
        %v3432 = vunpack.c.l.b16 %v3329
        %v3433 = vunpack.c.l.b16 %v3330
        %v3434 = vunpack.c.l.b16 %v3331
        %v3435 = vunpack.c.l.b16 %v3332
        %v3436 = vunpack.c.l.b16 %v3333
        %v3437 = vunpack.c.l.b16 %v3334
        %v3438 = vunpack.c.l.b16 %v3335
        %v3439 = vunpack.c.l.b16 %v3336
        %v3440 = vunpack.c.l.b16 %v3337
        %v3441 = vunpack.c.l.b16 %v3338
        %v3442 = vunpack.c.l.b16 %v3339
        %v3443 = vpack.c.b16 %v3428, %v3427
        %v3444 = vpack.c.b16 %v3430, %v3429
        %v3445 = vpack.c.b16 %v3432, %v3431
        %v3446 = vpack.c.b16 %v3434, %v3433
        %v3447 = vpack.c.b16 %v3436, %v3435
        %v3448 = vpack.c.b16 %v3438, %v3437
        %v3449 = vpack.c.b16 %v3440, %v3439
        %v3450 = vpack.c.b16 %v3442, %v3441
        %3459 = vmatpush.bf16.msra.mxu0 %v3450
        %3460 = vmatpush.bf16.msra.mxu0 %v3449
        %3461 = vmatpush.bf16.msra.mxu0 %v3448
        %3462 = vmatpush.bf16.msra.mxu0 %v3447
        %3463 = vmatpush.bf16.msra.mxu0 %v3446
        %3464 = vmatpush.bf16.msra.mxu0 %v3445
        %3465 = vmatpush.bf16.msra.mxu0 %v3444
        %3466 = vmatpush.bf16.msra.mxu0 %v3443
        %3467 = vmatmul.bf16.gmra.mxu0 %v3379
        %v3468 = vpop.f32.mrf.mxu0
        %v3469 = vadd.f32 0.0, %v3468
        %v3470 = vpop.f32.mrf.mxu0
        %v3471 = vadd.f32 0.0, %v3470
        %3472 = vmatmul.bf16.gmra.mxu0 %v3388
        %v3473 = vpop.f32.mrf.mxu0
        %v3474 = vadd.f32 0.0, %v3473
        %v3475 = vpop.f32.mrf.mxu0
        %v3476 = vadd.f32 0.0, %v3475
        %3477 = vmatmul.bf16.gmra.mxu0 %v3397
        %v3478 = vpop.f32.mrf.mxu0
        %v3479 = vadd.f32 0.0, %v3478
        %v3480 = vpop.f32.mrf.mxu0
        %v3481 = vadd.f32 0.0, %v3480
        %3482 = vmatmul.bf16.gmra.mxu0 %v3406
        %v3483 = vpop.f32.mrf.mxu0
        %v3484 = vadd.f32 0.0, %v3483
        %v3485 = vpop.f32.mrf.mxu0
        %v3486 = vadd.f32 0.0, %v3485
        %3487 = vdwg.mxu0
        %v3488 = vadd.f32 %v3304, %v3469
        %v3489 = vadd.f32 %v3305, %v3471
        %v3490 = vadd.f32 %v3306, %v3474
        %v3491 = vadd.f32 %v3307, %v3476
        %v3492 = vadd.f32 %v3308, %v3479
        %v3493 = vadd.f32 %v3309, %v3481
        %v3494 = vadd.f32 %v3310, %v3484
        %v3495 = vadd.f32 %v3311, %v3486
        %s3496 = scalar_lea.vmem %s5, 256
        %v3497 = vld [vmem:[%s3496] sm:$0xf]
        %v3498 = vld [vmem:[%s3496 + $0x4] sm:$0xf]
        %v3499 = vld [vmem:[%s3496 + $0x8] sm:$0xf]
        %v3500 = vld [vmem:[%s3496 + $0xc] sm:$0xf]
        %v3501 = vld [vmem:[%s3496 + $0x10] sm:$0xf]
        %v3502 = vld [vmem:[%s3496 + $0x14] sm:$0xf]
        %v3503 = vld [vmem:[%s3496 + $0x18] sm:$0xf]
        %v3504 = vld [vmem:[%s3496 + $0x1c] sm:$0xf]
        %v3505 = vld [vmem:[%s3496 + $0x20] sm:$0xf]
        %v3506 = vld [vmem:[%s3496 + $0x24] sm:$0xf]
        %v3507 = vld [vmem:[%s3496 + $0x28] sm:$0xf]
        %v3508 = vld [vmem:[%s3496 + $0x2c] sm:$0xf]
        %v3509 = vld [vmem:[%s3496 + $0x30] sm:$0xf]
        %v3510 = vld [vmem:[%s3496 + $0x34] sm:$0xf]
        %v3511 = vld [vmem:[%s3496 + $0x38] sm:$0xf]
        %v3512 = vld [vmem:[%s3496 + $0x3c] sm:$0xf]
        %v3521 = vunpack.c.l.b16 %v3130
        %v3522 = vunpack.c.l.b16 %v3131
        %v3523 = vunpack.c.l.b16 %v3132
        %v3524 = vunpack.c.l.b16 %v3133
        %v3525 = vunpack.c.l.b16 %v3134
        %v3526 = vunpack.c.l.b16 %v3135
        %v3527 = vunpack.c.l.b16 %v3136
        %v3528 = vunpack.c.l.b16 %v3313
        %v3529 = vpack.c.b16 %v3522, %v3521
        %v3530 = vpack.c.b16 %v3524, %v3523
        %v3531 = vpack.c.b16 %v3526, %v3525
        %v3532 = vpack.c.b16 %v3528, %v3527
        %v3553 = vunpack.c.l.b16 %v3497
        %v3554 = vunpack.c.l.b16 %v3498
        %v3555 = vunpack.c.l.b16 %v3499
        %v3556 = vunpack.c.l.b16 %v3500
        %v3557 = vunpack.c.l.b16 %v3501
        %v3558 = vunpack.c.l.b16 %v3502
        %v3559 = vunpack.c.l.b16 %v3503
        %v3560 = vunpack.c.l.b16 %v3504
        %v3561 = vunpack.c.l.b16 %v3505
        %v3562 = vunpack.c.l.b16 %v3506
        %v3563 = vunpack.c.l.b16 %v3507
        %v3564 = vunpack.c.l.b16 %v3508
        %v3565 = vunpack.c.l.b16 %v3509
        %v3566 = vunpack.c.l.b16 %v3510
        %v3567 = vunpack.c.l.b16 %v3511
        %v3568 = vunpack.c.l.b16 %v3512
        %v3569 = vpack.c.b16 %v3554, %v3553
        %v3570 = vpack.c.b16 %v3556, %v3555
        %v3571 = vpack.c.b16 %v3558, %v3557
        %v3572 = vpack.c.b16 %v3560, %v3559
        %v3573 = vpack.c.b16 %v3562, %v3561
        %v3574 = vpack.c.b16 %v3564, %v3563
        %v3575 = vpack.c.b16 %v3566, %v3565
        %v3576 = vpack.c.b16 %v3568, %v3567
        %3585 = vmatpush.bf16.msra.mxu0 %v3576
        %3586 = vmatpush.bf16.msra.mxu0 %v3575
        %3587 = vmatpush.bf16.msra.mxu0 %v3574
        %3588 = vmatpush.bf16.msra.mxu0 %v3573
        %3589 = vmatpush.bf16.msra.mxu0 %v3572
        %3590 = vmatpush.bf16.msra.mxu0 %v3571
        %3591 = vmatpush.bf16.msra.mxu0 %v3570
        %3592 = vmatpush.bf16.msra.mxu0 %v3569
        %3593 = vmatmul.bf16.gmra.mxu0 %v3529
        %v3594 = vpop.f32.mrf.mxu0
        %v3595 = vadd.f32 0.0, %v3594
        %v3596 = vpop.f32.mrf.mxu0
        %v3597 = vadd.f32 0.0, %v3596
        %3598 = vmatmul.bf16.gmra.mxu0 %v3530
        %v3599 = vpop.f32.mrf.mxu0
        %v3600 = vadd.f32 0.0, %v3599
        %v3601 = vpop.f32.mrf.mxu0
        %v3602 = vadd.f32 0.0, %v3601
        %3603 = vmatmul.bf16.gmra.mxu0 %v3531
        %v3604 = vpop.f32.mrf.mxu0
        %v3605 = vadd.f32 0.0, %v3604
        %v3606 = vpop.f32.mrf.mxu0
        %v3607 = vadd.f32 0.0, %v3606
        %3608 = vmatmul.bf16.gmra.mxu0 %v3532
        %v3609 = vpop.f32.mrf.mxu0
        %v3610 = vadd.f32 0.0, %v3609
        %v3611 = vpop.f32.mrf.mxu0
        %v3612 = vadd.f32 0.0, %v3611
        %3613 = vdwg.mxu0
        %v3614 = vadd.f32 %v3488, %v3595
        %v3615 = vadd.f32 %v3489, %v3597
        %v3616 = vadd.f32 %v3490, %v3600
        %v3617 = vadd.f32 %v3491, %v3602
        %v3618 = vadd.f32 %v3492, %v3605
        %v3619 = vadd.f32 %v3493, %v3607
        %v3620 = vadd.f32 %v3494, %v3610
        %v3621 = vadd.f32 %v3495, %v3612
        %v3622 = vld [vmem:[#allocation3 + $0x8] sm:$0xf]
        %v3623 = vld [vmem:[#allocation3 + $0xc] sm:$0xf]
        %v3624 = vld [vmem:[#allocation3 + $0x10] sm:$0xf]
        %v3625 = vld [vmem:[#allocation3 + $0x14] sm:$0xf]
        %v3626 = vld [vmem:[#allocation3 + $0x18] sm:$0xf]
        %v3627 = vld [vmem:[#allocation3 + $0x1c] sm:$0xf]
        %v3628 = vld [vmem:[#allocation3 + $0x20] sm:$0xf]
        %v3629 = vld [vmem:[#allocation3 + $0x24] sm:$0xf]
        %v3630 = vld [vmem:[#allocation3 + $0x28] sm:$0x1]
        %v3631 = vsel %vm1555, %v3622, 0
        %v3632 = vsel %vm1562, %v3623, 0
        %v3633 = vsel %vm1569, %v3624, 0
        %v3634 = vsel %vm1576, %v3625, 0
        %v3635 = vsel %vm1583, %v3626, 0
        %v3636 = vsel %vm1590, %v3627, 0
        %v3637 = vsel %vm1597, %v3628, 0
        %v3638 = vsel %vm1604, %v3629, 0
        %v3639 = vsel %vm1611, %v3630, 0
        %s3640 = scalar_lea.vmem %s5, 320
        %v3641 = vld [vmem:[%s3640] sm:$0xf]
        %v3642 = vld [vmem:[%s3640 + $0x4] sm:$0xf]
        %v3643 = vld [vmem:[%s3640 + $0x8] sm:$0xf]
        %v3644 = vld [vmem:[%s3640 + $0xc] sm:$0xf]
        %v3645 = vld [vmem:[%s3640 + $0x10] sm:$0xf]
        %v3646 = vld [vmem:[%s3640 + $0x14] sm:$0xf]
        %v3647 = vld [vmem:[%s3640 + $0x18] sm:$0xf]
        %v3648 = vld [vmem:[%s3640 + $0x1c] sm:$0xf]
        %v3649 = vld [vmem:[%s3640 + $0x20] sm:$0xf]
        %v3650 = vld [vmem:[%s3640 + $0x24] sm:$0xf]
        %v3651 = vld [vmem:[%s3640 + $0x28] sm:$0xf]
        %v3652 = vld [vmem:[%s3640 + $0x2c] sm:$0xf]
        %v3653 = vld [vmem:[%s3640 + $0x30] sm:$0xf]
        %v3654 = vld [vmem:[%s3640 + $0x34] sm:$0xf]
        %v3655 = vld [vmem:[%s3640 + $0x38] sm:$0xf]
        %v3656 = vld [vmem:[%s3640 + $0x3c] sm:$0xf]
        %v3666 = vunpack.c.l.b16 %v3631
        %v3667 = vunpack.c.l.b16 %v3632
        %v3668 = vunpack.c.l.b16 %v3633
        %v3669 = vunpack.c.l.b16 %v3634
        %v3670 = vunpack.c.l.b16 %v3635
        %v3671 = vunpack.c.l.b16 %v3636
        %v3672 = vunpack.c.l.b16 %v3637
        %v3673 = vunpack.c.l.b16 %v3638
        %v3674 = vunpack.c.l.b16 %v3639
        %v3675 = vpack.c.b16 %v3667, %v3666
        %v3676 = vpack.c.b16 %v3669, %v3668
        %v3677 = vpack.c.b16 %v3671, %v3670
        %v3678 = vpack.c.b16 %v3673, %v3672
        %v3679 = vpack.c.b16 %v3674, %v3674
        %v3681 = vshrl.u32 %v3675, 16
        %v3683 = vshll.u32 %v3675, 16
        %v3685 = vrot.slane %v3683, 1
        %v3686 = vor.u32 %v3681, %v3685
        %v3688 = vshll.u32 %v3676, 16
        %v3690 = vrot.slane %v3688, 1
        %v3691 = vsel %vm1661, %v3686, %v3690
        %v3692 = vshrl.u32 %v3676, 16
        %v3694 = vor.u32 %v3692, %v3690
        %v3696 = vshll.u32 %v3677, 16
        %v3698 = vrot.slane %v3696, 1
        %v3699 = vsel %vm1661, %v3694, %v3698
        %v3700 = vshrl.u32 %v3677, 16
        %v3702 = vor.u32 %v3700, %v3698
        %v3704 = vshll.u32 %v3678, 16
        %v3706 = vrot.slane %v3704, 1
        %v3707 = vsel %vm1661, %v3702, %v3706
        %v3708 = vshrl.u32 %v3678, 16
        %v3710 = vor.u32 %v3708, %v3706
        %v3712 = vshll.u32 %v3679, 16
        %v3714 = vrot.slane %v3712, 1
        %v3715 = vsel %vm1661, %v3710, %v3714
        %v3736 = vunpack.c.l.b16 %v3641
        %v3737 = vunpack.c.l.b16 %v3642
        %v3738 = vunpack.c.l.b16 %v3643
        %v3739 = vunpack.c.l.b16 %v3644
        %v3740 = vunpack.c.l.b16 %v3645
        %v3741 = vunpack.c.l.b16 %v3646
        %v3742 = vunpack.c.l.b16 %v3647
        %v3743 = vunpack.c.l.b16 %v3648
        %v3744 = vunpack.c.l.b16 %v3649
        %v3745 = vunpack.c.l.b16 %v3650
        %v3746 = vunpack.c.l.b16 %v3651
        %v3747 = vunpack.c.l.b16 %v3652
        %v3748 = vunpack.c.l.b16 %v3653
        %v3749 = vunpack.c.l.b16 %v3654
        %v3750 = vunpack.c.l.b16 %v3655
        %v3751 = vunpack.c.l.b16 %v3656
        %v3752 = vpack.c.b16 %v3737, %v3736
        %v3753 = vpack.c.b16 %v3739, %v3738
        %v3754 = vpack.c.b16 %v3741, %v3740
        %v3755 = vpack.c.b16 %v3743, %v3742
        %v3756 = vpack.c.b16 %v3745, %v3744
        %v3757 = vpack.c.b16 %v3747, %v3746
        %v3758 = vpack.c.b16 %v3749, %v3748
        %v3759 = vpack.c.b16 %v3751, %v3750
        %3768 = vmatpush.bf16.msra.mxu0 %v3759
        %3769 = vmatpush.bf16.msra.mxu0 %v3758
        %3770 = vmatpush.bf16.msra.mxu0 %v3757
        %3771 = vmatpush.bf16.msra.mxu0 %v3756
        %3772 = vmatpush.bf16.msra.mxu0 %v3755
        %3773 = vmatpush.bf16.msra.mxu0 %v3754
        %3774 = vmatpush.bf16.msra.mxu0 %v3753
        %3775 = vmatpush.bf16.msra.mxu0 %v3752
        %3776 = vmatmul.bf16.gmra.mxu0 %v3691
        %v3777 = vpop.f32.mrf.mxu0
        %v3778 = vadd.f32 0.0, %v3777
        %v3779 = vpop.f32.mrf.mxu0
        %v3780 = vadd.f32 0.0, %v3779
        %3781 = vmatmul.bf16.gmra.mxu0 %v3699
        %v3782 = vpop.f32.mrf.mxu0
        %v3783 = vadd.f32 0.0, %v3782
        %v3784 = vpop.f32.mrf.mxu0
        %v3785 = vadd.f32 0.0, %v3784
        %3786 = vmatmul.bf16.gmra.mxu0 %v3707
        %v3787 = vpop.f32.mrf.mxu0
        %v3788 = vadd.f32 0.0, %v3787
        %v3789 = vpop.f32.mrf.mxu0
        %v3790 = vadd.f32 0.0, %v3789
        %3791 = vmatmul.bf16.gmra.mxu0 %v3715
        %v3792 = vpop.f32.mrf.mxu0
        %v3793 = vadd.f32 0.0, %v3792
        %v3794 = vpop.f32.mrf.mxu0
        %v3795 = vadd.f32 0.0, %v3794
        %3796 = vdwg.mxu0
        %v3797 = vadd.f32 %v3614, %v3778
        %v3798 = vadd.f32 %v3615, %v3780
        %v3799 = vadd.f32 %v3616, %v3783
        %v3800 = vadd.f32 %v3617, %v3785
        %v3801 = vadd.f32 %v3618, %v3788
        %v3802 = vadd.f32 %v3619, %v3790
        %v3803 = vadd.f32 %v3620, %v3793
        %v3804 = vadd.f32 %v3621, %v3795
        %v3805 = vld [vmem:[#allocation3 + $0x8] sm:$0x8]
        %v3806 = vld [vmem:[#allocation3 + $0x28] sm:$0xf]
        %v3807 = vsel %vm1085, %v3805, 0
        %v3808 = vsel %vm1092, %v3623, 0
        %v3809 = vsel %vm1099, %v3624, 0
        %v3810 = vsel %vm1106, %v3625, 0
        %v3811 = vsel %vm1113, %v3626, 0
        %v3812 = vsel %vm1120, %v3627, 0
        %v3813 = vsel %vm1127, %v3628, 0
        %v3814 = vsel %vm1134, %v3629, 0
        %v3815 = vsel %vm1141, %v3806, 0
        %s3816 = scalar_lea.vmem %s5, 384
        %v3817 = vld [vmem:[%s3816] sm:$0xf]
        %v3818 = vld [vmem:[%s3816 + $0x4] sm:$0xf]
        %v3819 = vld [vmem:[%s3816 + $0x8] sm:$0xf]
        %v3820 = vld [vmem:[%s3816 + $0xc] sm:$0xf]
        %v3821 = vld [vmem:[%s3816 + $0x10] sm:$0xf]
        %v3822 = vld [vmem:[%s3816 + $0x14] sm:$0xf]
        %v3823 = vld [vmem:[%s3816 + $0x18] sm:$0xf]
        %v3824 = vld [vmem:[%s3816 + $0x1c] sm:$0xf]
        %v3825 = vld [vmem:[%s3816 + $0x20] sm:$0xf]
        %v3826 = vld [vmem:[%s3816 + $0x24] sm:$0xf]
        %v3827 = vld [vmem:[%s3816 + $0x28] sm:$0xf]
        %v3828 = vld [vmem:[%s3816 + $0x2c] sm:$0xf]
        %v3829 = vld [vmem:[%s3816 + $0x30] sm:$0xf]
        %v3830 = vld [vmem:[%s3816 + $0x34] sm:$0xf]
        %v3831 = vld [vmem:[%s3816 + $0x38] sm:$0xf]
        %v3832 = vld [vmem:[%s3816 + $0x3c] sm:$0xf]
        %v3842 = vunpack.c.l.b16 %v3807
        %v3843 = vunpack.c.l.b16 %v3808
        %v3844 = vunpack.c.l.b16 %v3809
        %v3845 = vunpack.c.l.b16 %v3810
        %v3846 = vunpack.c.l.b16 %v3811
        %v3847 = vunpack.c.l.b16 %v3812
        %v3848 = vunpack.c.l.b16 %v3813
        %v3849 = vunpack.c.l.b16 %v3814
        %v3850 = vunpack.c.l.b16 %v3815
        %v3851 = vpack.c.b16 %v3843, %v3842
        %v3852 = vpack.c.b16 %v3845, %v3844
        %v3853 = vpack.c.b16 %v3847, %v3846
        %v3854 = vpack.c.b16 %v3849, %v3848
        %v3855 = vpack.c.b16 %v3850, %v3850
        %v3857 = vshrl.u32 %v3851, 16
        %v3859 = vrot.slane %v3857, 3
        %v3860 = vshll.u32 %v3851, 16
        %v3862 = vrot.slane %v3860, 4
        %v3863 = vor.u32 %v3859, %v3862
        %v3865 = vshrl.u32 %v3852, 16
        %v3867 = vrot.slane %v3865, 3
        %v3868 = vshll.u32 %v3852, 16
        %v3870 = vrot.slane %v3868, 4
        %v3871 = vor.u32 %v3867, %v3870
        %v3872 = vsel %vm1308, %v3863, %v3871
        %v3874 = vshrl.u32 %v3853, 16
        %v3876 = vrot.slane %v3874, 3
        %v3877 = vshll.u32 %v3853, 16
        %v3879 = vrot.slane %v3877, 4
        %v3880 = vor.u32 %v3876, %v3879
        %v3881 = vsel %vm1308, %v3871, %v3880
        %v3883 = vshrl.u32 %v3854, 16
        %v3885 = vrot.slane %v3883, 3
        %v3886 = vshll.u32 %v3854, 16
        %v3888 = vrot.slane %v3886, 4
        %v3889 = vor.u32 %v3885, %v3888
        %v3890 = vsel %vm1308, %v3880, %v3889
        %v3892 = vshrl.u32 %v3855, 16
        %v3894 = vrot.slane %v3892, 3
        %v3895 = vshll.u32 %v3855, 16
        %v3897 = vrot.slane %v3895, 4
        %v3898 = vor.u32 %v3894, %v3897
        %v3899 = vsel %vm1308, %v3889, %v3898
        %v3920 = vunpack.c.l.b16 %v3817
        %v3921 = vunpack.c.l.b16 %v3818
        %v3922 = vunpack.c.l.b16 %v3819
        %v3923 = vunpack.c.l.b16 %v3820
        %v3924 = vunpack.c.l.b16 %v3821
        %v3925 = vunpack.c.l.b16 %v3822
        %v3926 = vunpack.c.l.b16 %v3823
        %v3927 = vunpack.c.l.b16 %v3824
        %v3928 = vunpack.c.l.b16 %v3825
        %v3929 = vunpack.c.l.b16 %v3826
        %v3930 = vunpack.c.l.b16 %v3827
        %v3931 = vunpack.c.l.b16 %v3828
        %v3932 = vunpack.c.l.b16 %v3829
        %v3933 = vunpack.c.l.b16 %v3830
        %v3934 = vunpack.c.l.b16 %v3831
        %v3935 = vunpack.c.l.b16 %v3832
        %v3936 = vpack.c.b16 %v3921, %v3920
        %v3937 = vpack.c.b16 %v3923, %v3922
        %v3938 = vpack.c.b16 %v3925, %v3924
        %v3939 = vpack.c.b16 %v3927, %v3926
        %v3940 = vpack.c.b16 %v3929, %v3928
        %v3941 = vpack.c.b16 %v3931, %v3930
        %v3942 = vpack.c.b16 %v3933, %v3932
        %v3943 = vpack.c.b16 %v3935, %v3934
        %3952 = vmatpush.bf16.msra.mxu0 %v3943
        %3953 = vmatpush.bf16.msra.mxu0 %v3942
        %3954 = vmatpush.bf16.msra.mxu0 %v3941
        %3955 = vmatpush.bf16.msra.mxu0 %v3940
        %3956 = vmatpush.bf16.msra.mxu0 %v3939
        %3957 = vmatpush.bf16.msra.mxu0 %v3938
        %3958 = vmatpush.bf16.msra.mxu0 %v3937
        %3959 = vmatpush.bf16.msra.mxu0 %v3936
        %3960 = vmatmul.bf16.gmra.mxu0 %v3872
        %v3961 = vpop.f32.mrf.mxu0
        %v3962 = vadd.f32 0.0, %v3961
        %v3963 = vpop.f32.mrf.mxu0
        %v3964 = vadd.f32 0.0, %v3963
        %3965 = vmatmul.bf16.gmra.mxu0 %v3881
        %v3966 = vpop.f32.mrf.mxu0
        %v3967 = vadd.f32 0.0, %v3966
        %v3968 = vpop.f32.mrf.mxu0
        %v3969 = vadd.f32 0.0, %v3968
        %3970 = vmatmul.bf16.gmra.mxu0 %v3890
        %v3971 = vpop.f32.mrf.mxu0
        %v3972 = vadd.f32 0.0, %v3971
        %v3973 = vpop.f32.mrf.mxu0
        %v3974 = vadd.f32 0.0, %v3973
        %3975 = vmatmul.bf16.gmra.mxu0 %v3899
        %v3976 = vpop.f32.mrf.mxu0
        %v3977 = vadd.f32 0.0, %v3976
        %v3978 = vpop.f32.mrf.mxu0
        %v3979 = vadd.f32 0.0, %v3978
        %3980 = vdwg.mxu0
        %v3981 = vadd.f32 %v3797, %v3962
        %v3982 = vadd.f32 %v3798, %v3964
        %v3983 = vadd.f32 %v3799, %v3967
        %v3984 = vadd.f32 %v3800, %v3969
        %v3985 = vadd.f32 %v3801, %v3972
        %v3986 = vadd.f32 %v3802, %v3974
        %v3987 = vadd.f32 %v3803, %v3977
        %v3988 = vadd.f32 %v3804, %v3979
        %s3989 = scalar_lea.vmem %s5, 448
        %v3990 = vld [vmem:[%s3989] sm:$0xf]
        %v3991 = vld [vmem:[%s3989 + $0x4] sm:$0xf]
        %v3992 = vld [vmem:[%s3989 + $0x8] sm:$0xf]
        %v3993 = vld [vmem:[%s3989 + $0xc] sm:$0xf]
        %v3994 = vld [vmem:[%s3989 + $0x10] sm:$0xf]
        %v3995 = vld [vmem:[%s3989 + $0x14] sm:$0xf]
        %v3996 = vld [vmem:[%s3989 + $0x18] sm:$0xf]
        %v3997 = vld [vmem:[%s3989 + $0x1c] sm:$0xf]
        %v3998 = vld [vmem:[%s3989 + $0x20] sm:$0xf]
        %v3999 = vld [vmem:[%s3989 + $0x24] sm:$0xf]
        %v4000 = vld [vmem:[%s3989 + $0x28] sm:$0xf]
        %v4001 = vld [vmem:[%s3989 + $0x2c] sm:$0xf]
        %v4002 = vld [vmem:[%s3989 + $0x30] sm:$0xf]
        %v4003 = vld [vmem:[%s3989 + $0x34] sm:$0xf]
        %v4004 = vld [vmem:[%s3989 + $0x38] sm:$0xf]
        %v4005 = vld [vmem:[%s3989 + $0x3c] sm:$0xf]
        %v4014 = vunpack.c.l.b16 %v3623
        %v4015 = vunpack.c.l.b16 %v3624
        %v4016 = vunpack.c.l.b16 %v3625
        %v4017 = vunpack.c.l.b16 %v3626
        %v4018 = vunpack.c.l.b16 %v3627
        %v4019 = vunpack.c.l.b16 %v3628
        %v4020 = vunpack.c.l.b16 %v3629
        %v4021 = vunpack.c.l.b16 %v3806
        %v4022 = vpack.c.b16 %v4015, %v4014
        %v4023 = vpack.c.b16 %v4017, %v4016
        %v4024 = vpack.c.b16 %v4019, %v4018
        %v4025 = vpack.c.b16 %v4021, %v4020
        %v4046 = vunpack.c.l.b16 %v3990
        %v4047 = vunpack.c.l.b16 %v3991
        %v4048 = vunpack.c.l.b16 %v3992
        %v4049 = vunpack.c.l.b16 %v3993
        %v4050 = vunpack.c.l.b16 %v3994
        %v4051 = vunpack.c.l.b16 %v3995
        %v4052 = vunpack.c.l.b16 %v3996
        %v4053 = vunpack.c.l.b16 %v3997
        %v4054 = vunpack.c.l.b16 %v3998
        %v4055 = vunpack.c.l.b16 %v3999
        %v4056 = vunpack.c.l.b16 %v4000
        %v4057 = vunpack.c.l.b16 %v4001
        %v4058 = vunpack.c.l.b16 %v4002
        %v4059 = vunpack.c.l.b16 %v4003
        %v4060 = vunpack.c.l.b16 %v4004
        %v4061 = vunpack.c.l.b16 %v4005
        %v4062 = vpack.c.b16 %v4047, %v4046
        %v4063 = vpack.c.b16 %v4049, %v4048
        %v4064 = vpack.c.b16 %v4051, %v4050
        %v4065 = vpack.c.b16 %v4053, %v4052
        %v4066 = vpack.c.b16 %v4055, %v4054
        %v4067 = vpack.c.b16 %v4057, %v4056
        %v4068 = vpack.c.b16 %v4059, %v4058
        %v4069 = vpack.c.b16 %v4061, %v4060
        %4078 = vmatpush.bf16.msra.mxu0 %v4069
        %4079 = vmatpush.bf16.msra.mxu0 %v4068
        %4080 = vmatpush.bf16.msra.mxu0 %v4067
        %4081 = vmatpush.bf16.msra.mxu0 %v4066
        %4082 = vmatpush.bf16.msra.mxu0 %v4065
        %4083 = vmatpush.bf16.msra.mxu0 %v4064
        %4084 = vmatpush.bf16.msra.mxu0 %v4063
        %4085 = vmatpush.bf16.msra.mxu0 %v4062
        %4086 = vmatmul.bf16.gmra.mxu0 %v4022
        %v4087 = vpop.f32.mrf.mxu0
        %v4088 = vadd.f32 0.0, %v4087
        %v4089 = vpop.f32.mrf.mxu0
        %v4090 = vadd.f32 0.0, %v4089
        %4091 = vmatmul.bf16.gmra.mxu0 %v4023
        %v4092 = vpop.f32.mrf.mxu0
        %v4093 = vadd.f32 0.0, %v4092
        %v4094 = vpop.f32.mrf.mxu0
        %v4095 = vadd.f32 0.0, %v4094
        %4096 = vmatmul.bf16.gmra.mxu0 %v4024
        %v4097 = vpop.f32.mrf.mxu0
        %v4098 = vadd.f32 0.0, %v4097
        %v4099 = vpop.f32.mrf.mxu0
        %v4100 = vadd.f32 0.0, %v4099
        %4101 = vmatmul.bf16.gmra.mxu0 %v4025
        %v4102 = vpop.f32.mrf.mxu0
        %v4103 = vadd.f32 0.0, %v4102
        %v4104 = vpop.f32.mrf.mxu0
        %v4105 = vadd.f32 0.0, %v4104
        %4106 = vdwg.mxu0
        %v4107 = vadd.f32 %v3981, %v4088
        %v4108 = vadd.f32 %v3982, %v4090
        %v4109 = vadd.f32 %v3983, %v4093
        %v4110 = vadd.f32 %v3984, %v4095
        %v4111 = vadd.f32 %v3985, %v4098
        %v4112 = vadd.f32 %v3986, %v4100
        %v4113 = vadd.f32 %v3987, %v4103
        %v4114 = vadd.f32 %v3988, %v4105
        %v4115 = vld [vmem:[#allocation3 + $0xc] sm:$0xf]
        %v4116 = vld [vmem:[#allocation3 + $0x10] sm:$0xf]
        %v4117 = vld [vmem:[#allocation3 + $0x14] sm:$0xf]
        %v4118 = vld [vmem:[#allocation3 + $0x18] sm:$0xf]
        %v4119 = vld [vmem:[#allocation3 + $0x1c] sm:$0xf]
        %v4120 = vld [vmem:[#allocation3 + $0x20] sm:$0xf]
        %v4121 = vld [vmem:[#allocation3 + $0x24] sm:$0xf]
        %v4122 = vld [vmem:[#allocation3 + $0x28] sm:$0xf]
        %v4123 = vld [vmem:[#allocation3 + $0x2c] sm:$0x1]
        %v4124 = vsel %vm1555, %v4115, 0
        %v4125 = vsel %vm1562, %v4116, 0
        %v4126 = vsel %vm1569, %v4117, 0
        %v4127 = vsel %vm1576, %v4118, 0
        %v4128 = vsel %vm1583, %v4119, 0
        %v4129 = vsel %vm1590, %v4120, 0
        %v4130 = vsel %vm1597, %v4121, 0
        %v4131 = vsel %vm1604, %v4122, 0
        %v4132 = vsel %vm1611, %v4123, 0
        %s4133 = scalar_lea.vmem %s5, 512
        %v4134 = vld [vmem:[%s4133] sm:$0xf]
        %v4135 = vld [vmem:[%s4133 + $0x4] sm:$0xf]
        %v4136 = vld [vmem:[%s4133 + $0x8] sm:$0xf]
        %v4137 = vld [vmem:[%s4133 + $0xc] sm:$0xf]
        %v4138 = vld [vmem:[%s4133 + $0x10] sm:$0xf]
        %v4139 = vld [vmem:[%s4133 + $0x14] sm:$0xf]
        %v4140 = vld [vmem:[%s4133 + $0x18] sm:$0xf]
        %v4141 = vld [vmem:[%s4133 + $0x1c] sm:$0xf]
        %v4142 = vld [vmem:[%s4133 + $0x20] sm:$0xf]
        %v4143 = vld [vmem:[%s4133 + $0x24] sm:$0xf]
        %v4144 = vld [vmem:[%s4133 + $0x28] sm:$0xf]
        %v4145 = vld [vmem:[%s4133 + $0x2c] sm:$0xf]
        %v4146 = vld [vmem:[%s4133 + $0x30] sm:$0xf]
        %v4147 = vld [vmem:[%s4133 + $0x34] sm:$0xf]
        %v4148 = vld [vmem:[%s4133 + $0x38] sm:$0xf]
        %v4149 = vld [vmem:[%s4133 + $0x3c] sm:$0xf]
        %v4159 = vunpack.c.l.b16 %v4124
        %v4160 = vunpack.c.l.b16 %v4125
        %v4161 = vunpack.c.l.b16 %v4126
        %v4162 = vunpack.c.l.b16 %v4127
        %v4163 = vunpack.c.l.b16 %v4128
        %v4164 = vunpack.c.l.b16 %v4129
        %v4165 = vunpack.c.l.b16 %v4130
        %v4166 = vunpack.c.l.b16 %v4131
        %v4167 = vunpack.c.l.b16 %v4132
        %v4168 = vpack.c.b16 %v4160, %v4159
        %v4169 = vpack.c.b16 %v4162, %v4161
        %v4170 = vpack.c.b16 %v4164, %v4163
        %v4171 = vpack.c.b16 %v4166, %v4165
        %v4172 = vpack.c.b16 %v4167, %v4167
        %v4174 = vshrl.u32 %v4168, 16
        %v4176 = vshll.u32 %v4168, 16
        %v4178 = vrot.slane %v4176, 1
        %v4179 = vor.u32 %v4174, %v4178
        %v4181 = vshll.u32 %v4169, 16
        %v4183 = vrot.slane %v4181, 1
        %v4184 = vsel %vm1661, %v4179, %v4183
        %v4185 = vshrl.u32 %v4169, 16
        %v4187 = vor.u32 %v4185, %v4183
        %v4189 = vshll.u32 %v4170, 16
        %v4191 = vrot.slane %v4189, 1
        %v4192 = vsel %vm1661, %v4187, %v4191
        %v4193 = vshrl.u32 %v4170, 16
        %v4195 = vor.u32 %v4193, %v4191
        %v4197 = vshll.u32 %v4171, 16
        %v4199 = vrot.slane %v4197, 1
        %v4200 = vsel %vm1661, %v4195, %v4199
        %v4201 = vshrl.u32 %v4171, 16
        %v4203 = vor.u32 %v4201, %v4199
        %v4205 = vshll.u32 %v4172, 16
        %v4207 = vrot.slane %v4205, 1
        %v4208 = vsel %vm1661, %v4203, %v4207
        %v4229 = vunpack.c.l.b16 %v4134
        %v4230 = vunpack.c.l.b16 %v4135
        %v4231 = vunpack.c.l.b16 %v4136
        %v4232 = vunpack.c.l.b16 %v4137
        %v4233 = vunpack.c.l.b16 %v4138
        %v4234 = vunpack.c.l.b16 %v4139
        %v4235 = vunpack.c.l.b16 %v4140
        %v4236 = vunpack.c.l.b16 %v4141
        %v4237 = vunpack.c.l.b16 %v4142
        %v4238 = vunpack.c.l.b16 %v4143
        %v4239 = vunpack.c.l.b16 %v4144
        %v4240 = vunpack.c.l.b16 %v4145
        %v4241 = vunpack.c.l.b16 %v4146
        %v4242 = vunpack.c.l.b16 %v4147
        %v4243 = vunpack.c.l.b16 %v4148
        %v4244 = vunpack.c.l.b16 %v4149
        %v4245 = vpack.c.b16 %v4230, %v4229
        %v4246 = vpack.c.b16 %v4232, %v4231
        %v4247 = vpack.c.b16 %v4234, %v4233
        %v4248 = vpack.c.b16 %v4236, %v4235
        %v4249 = vpack.c.b16 %v4238, %v4237
        %v4250 = vpack.c.b16 %v4240, %v4239
        %v4251 = vpack.c.b16 %v4242, %v4241
        %v4252 = vpack.c.b16 %v4244, %v4243
        %4261 = vmatpush.bf16.msra.mxu0 %v4252
        %4262 = vmatpush.bf16.msra.mxu0 %v4251
        %4263 = vmatpush.bf16.msra.mxu0 %v4250
        %4264 = vmatpush.bf16.msra.mxu0 %v4249
        %4265 = vmatpush.bf16.msra.mxu0 %v4248
        %4266 = vmatpush.bf16.msra.mxu0 %v4247
        %4267 = vmatpush.bf16.msra.mxu0 %v4246
        %4268 = vmatpush.bf16.msra.mxu0 %v4245
        %4269 = vmatmul.bf16.gmra.mxu0 %v4184
        %v4270 = vpop.f32.mrf.mxu0
        %v4271 = vadd.f32 0.0, %v4270
        %v4272 = vpop.f32.mrf.mxu0
        %v4273 = vadd.f32 0.0, %v4272
        %4274 = vmatmul.bf16.gmra.mxu0 %v4192
        %v4275 = vpop.f32.mrf.mxu0
        %v4276 = vadd.f32 0.0, %v4275
        %v4277 = vpop.f32.mrf.mxu0
        %v4278 = vadd.f32 0.0, %v4277
        %4279 = vmatmul.bf16.gmra.mxu0 %v4200
        %v4280 = vpop.f32.mrf.mxu0
        %v4281 = vadd.f32 0.0, %v4280
        %v4282 = vpop.f32.mrf.mxu0
        %v4283 = vadd.f32 0.0, %v4282
        %4284 = vmatmul.bf16.gmra.mxu0 %v4208
        %v4285 = vpop.f32.mrf.mxu0
        %v4286 = vadd.f32 0.0, %v4285
        %v4287 = vpop.f32.mrf.mxu0
        %v4288 = vadd.f32 0.0, %v4287
        %4289 = vdwg.mxu0
        %v4290 = vadd.f32 %v4107, %v4271
        %v4291 = vadd.f32 %v4108, %v4273
        %v4292 = vadd.f32 %v4109, %v4276
        %v4293 = vadd.f32 %v4110, %v4278
        %v4294 = vadd.f32 %v4111, %v4281
        %v4295 = vadd.f32 %v4112, %v4283
        %v4296 = vadd.f32 %v4113, %v4286
        %v4297 = vadd.f32 %v4114, %v4288
        %v4298 = vld [vmem:[%s6] sm:$0x1]
        %v4300 = vperm.slane %v4298, 0
        %v4302 = vadd.f32 %v4290, %v4300
        %v4303 = vadd.f32 %v4291, %v4300
        %v4304 = vadd.f32 %v4292, %v4300
        %v4305 = vadd.f32 %v4293, %v4300
        %v4306 = vadd.f32 %v4294, %v4300
        %v4307 = vadd.f32 %v4295, %v4300
        %v4308 = vadd.f32 %v4296, %v4300
        %v4309 = vadd.f32 %v4297, %v4300
        %v4310 = vmax.f32 %v4302, 0.0
        %v4311 = vmax.f32 %v4303, 0.0
        %v4312 = vmax.f32 %v4304, 0.0
        %v4313 = vmax.f32 %v4305, 0.0
        %v4314 = vmax.f32 %v4306, 0.0
        %v4315 = vmax.f32 %v4307, 0.0
        %v4316 = vmax.f32 %v4308, 0.0
        %v4317 = vmax.f32 %v4309, 0.0
        %v4318 = vpack.c.bf16 %v4310, %v4310
        %v4319 = vpack.c.bf16 %v4311, %v4311
        %v4320 = vpack.c.bf16 %v4312, %v4312
        %v4321 = vpack.c.bf16 %v4313, %v4313
        %v4322 = vpack.c.bf16 %v4314, %v4314
        %v4323 = vpack.c.bf16 %v4315, %v4315
        %v4324 = vpack.c.bf16 %v4316, %v4316
        %v4325 = vpack.c.bf16 %v4317, %v4317
        %vm4326 = vcmask 388096
        %4327 = vst.msk [vmem:[#allocation4 + $0x8] sm:$0xf] %vm4326, %v4318
        %4328 = vst.msk [vmem:[#allocation4 + $0xc] sm:$0xf] %vm4326, %v4319
        %4329 = vst.msk [vmem:[#allocation4 + $0x10] sm:$0xf] %vm4326, %v4320
        %4330 = vst.msk [vmem:[#allocation4 + $0x14] sm:$0xf] %vm4326, %v4321
        %4331 = vst.msk [vmem:[#allocation4 + $0x18] sm:$0xf] %vm4326, %v4322
        %4332 = vst.msk [vmem:[#allocation4 + $0x1c] sm:$0xf] %vm4326, %v4323
        %4333 = vst.msk [vmem:[#allocation4 + $0x20] sm:$0xf] %vm4326, %v4324
        %4334 = vst.msk [vmem:[#allocation4 + $0x24] sm:$0xf] %vm4326, %v4325
        %v4335 = vld [vmem:[#allocation4] sm:$0x8]
        %v4336 = vld [vmem:[#allocation4 + $0x4] sm:$0xf]
        %v4337 = vld [vmem:[#allocation4 + $0x8] sm:$0xf]
        %v4338 = vld [vmem:[#allocation4 + $0xc] sm:$0xf]
        %v4339 = vld [vmem:[#allocation4 + $0x10] sm:$0xf]
        %v4340 = vld [vmem:[#allocation4 + $0x14] sm:$0xf]
        %v4341 = vld [vmem:[#allocation4 + $0x18] sm:$0xf]
        %v4342 = vld [vmem:[#allocation4 + $0x1c] sm:$0xf]
        %v4343 = vld [vmem:[#allocation4 + $0x20] sm:$0xf]
        %v4344 = vsel %vm1085, %v4335, 0
        %v4345 = vsel %vm1092, %v4336, 0
        %v4346 = vsel %vm1099, %v4337, 0
        %v4347 = vsel %vm1106, %v4338, 0
        %v4348 = vsel %vm1113, %v4339, 0
        %v4349 = vsel %vm1120, %v4340, 0
        %v4350 = vsel %vm1127, %v4341, 0
        %v4351 = vsel %vm1134, %v4342, 0
        %v4352 = vsel %vm1141, %v4343, 0
        %v4353 = vld [vmem:[%s7] sm:$0xf]
        %v4354 = vld [vmem:[%s7 + $0x4] sm:$0xf]
        %v4355 = vld [vmem:[%s7 + $0x8] sm:$0xf]
        %v4356 = vld [vmem:[%s7 + $0xc] sm:$0xf]
        %v4357 = vld [vmem:[%s7 + $0x10] sm:$0xf]
        %v4358 = vld [vmem:[%s7 + $0x14] sm:$0xf]
        %v4359 = vld [vmem:[%s7 + $0x18] sm:$0xf]
        %v4360 = vld [vmem:[%s7 + $0x1c] sm:$0xf]
        %v4361 = vld [vmem:[%s7 + $0x20] sm:$0xf]
        %v4362 = vld [vmem:[%s7 + $0x24] sm:$0xf]
        %v4363 = vld [vmem:[%s7 + $0x28] sm:$0xf]
        %v4364 = vld [vmem:[%s7 + $0x2c] sm:$0xf]
        %v4365 = vld [vmem:[%s7 + $0x30] sm:$0xf]
        %v4366 = vld [vmem:[%s7 + $0x34] sm:$0xf]
        %v4367 = vld [vmem:[%s7 + $0x38] sm:$0xf]
        %v4368 = vld [vmem:[%s7 + $0x3c] sm:$0xf]
        %s4369 = scalar_lea.vmem %s7, 64
        %v4370 = vld [vmem:[%s4369] sm:$0xf]
        %v4371 = vld [vmem:[%s4369 + $0x4] sm:$0xf]
        %v4372 = vld [vmem:[%s4369 + $0x8] sm:$0xf]
        %v4373 = vld [vmem:[%s4369 + $0xc] sm:$0xf]
        %v4374 = vld [vmem:[%s4369 + $0x10] sm:$0xf]
        %v4375 = vld [vmem:[%s4369 + $0x14] sm:$0xf]
        %v4376 = vld [vmem:[%s4369 + $0x18] sm:$0xf]
        %v4377 = vld [vmem:[%s4369 + $0x1c] sm:$0xf]
        %v4378 = vld [vmem:[%s4369 + $0x20] sm:$0xf]
        %v4379 = vld [vmem:[%s4369 + $0x24] sm:$0xf]
        %v4380 = vld [vmem:[%s4369 + $0x28] sm:$0xf]
        %v4381 = vld [vmem:[%s4369 + $0x2c] sm:$0xf]
        %v4382 = vld [vmem:[%s4369 + $0x30] sm:$0xf]
        %v4383 = vld [vmem:[%s4369 + $0x34] sm:$0xf]
        %v4384 = vld [vmem:[%s4369 + $0x38] sm:$0xf]
        %v4385 = vld [vmem:[%s4369 + $0x3c] sm:$0xf]
        %v4394 = vunpack.c.l.b16 %v4336
        %v4395 = vunpack.c.l.b16 %v4337
        %v4396 = vunpack.c.l.b16 %v4338
        %v4397 = vunpack.c.l.b16 %v4339
        %v4398 = vunpack.c.l.b16 %v4340
        %v4399 = vunpack.c.l.b16 %v4341
        %v4400 = vunpack.c.l.b16 %v4342
        %v4401 = vunpack.c.l.b16 %v4343
        %v4402 = vpack.c.b16 %v4395, %v4394
        %v4403 = vpack.c.b16 %v4397, %v4396
        %v4404 = vpack.c.b16 %v4399, %v4398
        %v4405 = vpack.c.b16 %v4401, %v4400
        %v4426 = vunpack.c.l.b16 %v4370
        %v4427 = vunpack.c.l.b16 %v4371
        %v4428 = vunpack.c.l.b16 %v4372
        %v4429 = vunpack.c.l.b16 %v4373
        %v4430 = vunpack.c.l.b16 %v4374
        %v4431 = vunpack.c.l.b16 %v4375
        %v4432 = vunpack.c.l.b16 %v4376
        %v4433 = vunpack.c.l.b16 %v4377
        %v4434 = vunpack.c.l.b16 %v4378
        %v4435 = vunpack.c.l.b16 %v4379
        %v4436 = vunpack.c.l.b16 %v4380
        %v4437 = vunpack.c.l.b16 %v4381
        %v4438 = vunpack.c.l.b16 %v4382
        %v4439 = vunpack.c.l.b16 %v4383
        %v4440 = vunpack.c.l.b16 %v4384
        %v4441 = vunpack.c.l.b16 %v4385
        %v4442 = vpack.c.b16 %v4427, %v4426
        %v4443 = vpack.c.b16 %v4429, %v4428
        %v4444 = vpack.c.b16 %v4431, %v4430
        %v4445 = vpack.c.b16 %v4433, %v4432
        %v4446 = vpack.c.b16 %v4435, %v4434
        %v4447 = vpack.c.b16 %v4437, %v4436
        %v4448 = vpack.c.b16 %v4439, %v4438
        %v4449 = vpack.c.b16 %v4441, %v4440
        %4458 = vmatpush.bf16.msra.mxu0 %v4449
        %4459 = vmatpush.bf16.msra.mxu0 %v4448
        %4460 = vmatpush.bf16.msra.mxu0 %v4447
        %4461 = vmatpush.bf16.msra.mxu0 %v4446
        %4462 = vmatpush.bf16.msra.mxu0 %v4445
        %4463 = vmatpush.bf16.msra.mxu0 %v4444
        %4464 = vmatpush.bf16.msra.mxu0 %v4443
        %4465 = vmatpush.bf16.msra.mxu0 %v4442
        %4466 = vmatmul.bf16.gmra.mxu0 %v4402
        %v4467 = vpop.f32.mrf.mxu0
        %v4468 = vadd.f32 0.0, %v4467
        %v4469 = vpop.f32.mrf.mxu0
        %v4470 = vadd.f32 0.0, %v4469
        %4471 = vmatmul.bf16.gmra.mxu0 %v4403
        %v4472 = vpop.f32.mrf.mxu0
        %v4473 = vadd.f32 0.0, %v4472
        %v4474 = vpop.f32.mrf.mxu0
        %v4475 = vadd.f32 0.0, %v4474
        %4476 = vmatmul.bf16.gmra.mxu0 %v4404
        %v4477 = vpop.f32.mrf.mxu0
        %v4478 = vadd.f32 0.0, %v4477
        %v4479 = vpop.f32.mrf.mxu0
        %v4480 = vadd.f32 0.0, %v4479
        %4481 = vmatmul.bf16.gmra.mxu0 %v4405
        %v4482 = vpop.f32.mrf.mxu0
        %v4483 = vadd.f32 0.0, %v4482
        %v4484 = vpop.f32.mrf.mxu0
        %v4485 = vadd.f32 0.0, %v4484
        %4486 = vdwg.mxu0
        %v4496 = vunpack.c.l.b16 %v4344
        %v4497 = vunpack.c.l.b16 %v4345
        %v4498 = vunpack.c.l.b16 %v4346
        %v4499 = vunpack.c.l.b16 %v4347
        %v4500 = vunpack.c.l.b16 %v4348
        %v4501 = vunpack.c.l.b16 %v4349
        %v4502 = vunpack.c.l.b16 %v4350
        %v4503 = vunpack.c.l.b16 %v4351
        %v4504 = vunpack.c.l.b16 %v4352
        %v4505 = vpack.c.b16 %v4497, %v4496
        %v4506 = vpack.c.b16 %v4499, %v4498
        %v4507 = vpack.c.b16 %v4501, %v4500
        %v4508 = vpack.c.b16 %v4503, %v4502
        %v4509 = vpack.c.b16 %v4504, %v4504
        %v4511 = vshrl.u32 %v4505, 16
        %v4513 = vrot.slane %v4511, 3
        %v4514 = vshll.u32 %v4505, 16
        %v4516 = vrot.slane %v4514, 4
        %v4517 = vor.u32 %v4513, %v4516
        %v4519 = vshrl.u32 %v4506, 16
        %v4521 = vrot.slane %v4519, 3
        %v4522 = vshll.u32 %v4506, 16
        %v4524 = vrot.slane %v4522, 4
        %v4525 = vor.u32 %v4521, %v4524
        %v4526 = vsel %vm1308, %v4517, %v4525
        %v4528 = vshrl.u32 %v4507, 16
        %v4530 = vrot.slane %v4528, 3
        %v4531 = vshll.u32 %v4507, 16
        %v4533 = vrot.slane %v4531, 4
        %v4534 = vor.u32 %v4530, %v4533
        %v4535 = vsel %vm1308, %v4525, %v4534
        %v4537 = vshrl.u32 %v4508, 16
        %v4539 = vrot.slane %v4537, 3
        %v4540 = vshll.u32 %v4508, 16
        %v4542 = vrot.slane %v4540, 4
        %v4543 = vor.u32 %v4539, %v4542
        %v4544 = vsel %vm1308, %v4534, %v4543
        %v4546 = vshrl.u32 %v4509, 16
        %v4548 = vrot.slane %v4546, 3
        %v4549 = vshll.u32 %v4509, 16
        %v4551 = vrot.slane %v4549, 4
        %v4552 = vor.u32 %v4548, %v4551
        %v4553 = vsel %vm1308, %v4543, %v4552
        %v4574 = vunpack.c.l.b16 %v4353
        %v4575 = vunpack.c.l.b16 %v4354
        %v4576 = vunpack.c.l.b16 %v4355
        %v4577 = vunpack.c.l.b16 %v4356
        %v4578 = vunpack.c.l.b16 %v4357
        %v4579 = vunpack.c.l.b16 %v4358
        %v4580 = vunpack.c.l.b16 %v4359
        %v4581 = vunpack.c.l.b16 %v4360
        %v4582 = vunpack.c.l.b16 %v4361
        %v4583 = vunpack.c.l.b16 %v4362
        %v4584 = vunpack.c.l.b16 %v4363
        %v4585 = vunpack.c.l.b16 %v4364
        %v4586 = vunpack.c.l.b16 %v4365
        %v4587 = vunpack.c.l.b16 %v4366
        %v4588 = vunpack.c.l.b16 %v4367
        %v4589 = vunpack.c.l.b16 %v4368
        %v4590 = vpack.c.b16 %v4575, %v4574
        %v4591 = vpack.c.b16 %v4577, %v4576
        %v4592 = vpack.c.b16 %v4579, %v4578
        %v4593 = vpack.c.b16 %v4581, %v4580
        %v4594 = vpack.c.b16 %v4583, %v4582
        %v4595 = vpack.c.b16 %v4585, %v4584
        %v4596 = vpack.c.b16 %v4587, %v4586
        %v4597 = vpack.c.b16 %v4589, %v4588
        %4606 = vmatpush.bf16.msra.mxu0 %v4597
        %4607 = vmatpush.bf16.msra.mxu0 %v4596
        %4608 = vmatpush.bf16.msra.mxu0 %v4595
        %4609 = vmatpush.bf16.msra.mxu0 %v4594
        %4610 = vmatpush.bf16.msra.mxu0 %v4593
        %4611 = vmatpush.bf16.msra.mxu0 %v4592
        %4612 = vmatpush.bf16.msra.mxu0 %v4591
        %4613 = vmatpush.bf16.msra.mxu0 %v4590
        %4614 = vmatmul.bf16.gmra.mxu0 %v4526
        %v4615 = vpop.f32.mrf.mxu0
        %v4616 = vadd.f32 %v4468, %v4615
        %v4617 = vpop.f32.mrf.mxu0
        %v4618 = vadd.f32 %v4470, %v4617
        %4619 = vmatmul.bf16.gmra.mxu0 %v4535
        %v4620 = vpop.f32.mrf.mxu0
        %v4621 = vadd.f32 %v4473, %v4620
        %v4622 = vpop.f32.mrf.mxu0
        %v4623 = vadd.f32 %v4475, %v4622
        %4624 = vmatmul.bf16.gmra.mxu0 %v4544
        %v4625 = vpop.f32.mrf.mxu0
        %v4626 = vadd.f32 %v4478, %v4625
        %v4627 = vpop.f32.mrf.mxu0
        %v4628 = vadd.f32 %v4480, %v4627
        %4629 = vmatmul.bf16.gmra.mxu0 %v4553
        %v4630 = vpop.f32.mrf.mxu0
        %v4631 = vadd.f32 %v4483, %v4630
        %v4632 = vpop.f32.mrf.mxu0
        %v4633 = vadd.f32 %v4485, %v4632
        %4634 = vdwg.mxu0
        %v4635 = vld [vmem:[#allocation4 + $0x4] sm:$0xf]
        %v4636 = vld [vmem:[#allocation4 + $0x8] sm:$0xf]
        %v4637 = vld [vmem:[#allocation4 + $0xc] sm:$0xf]
        %v4638 = vld [vmem:[#allocation4 + $0x10] sm:$0xf]
        %v4639 = vld [vmem:[#allocation4 + $0x14] sm:$0xf]
        %v4640 = vld [vmem:[#allocation4 + $0x18] sm:$0xf]
        %v4641 = vld [vmem:[#allocation4 + $0x1c] sm:$0xf]
        %v4642 = vld [vmem:[#allocation4 + $0x20] sm:$0xf]
        %v4643 = vld [vmem:[#allocation4 + $0x24] sm:$0x1]
        %v4644 = vsel %vm1555, %v4635, 0
        %v4645 = vsel %vm1562, %v4636, 0
        %v4646 = vsel %vm1569, %v4637, 0
        %v4647 = vsel %vm1576, %v4638, 0
        %v4648 = vsel %vm1583, %v4639, 0
        %v4649 = vsel %vm1590, %v4640, 0
        %v4650 = vsel %vm1597, %v4641, 0
        %v4651 = vsel %vm1604, %v4642, 0
        %v4652 = vsel %vm1611, %v4643, 0
        %s4653 = scalar_lea.vmem %s7, 128
        %v4654 = vld [vmem:[%s4653] sm:$0xf]
        %v4655 = vld [vmem:[%s4653 + $0x4] sm:$0xf]
        %v4656 = vld [vmem:[%s4653 + $0x8] sm:$0xf]
        %v4657 = vld [vmem:[%s4653 + $0xc] sm:$0xf]
        %v4658 = vld [vmem:[%s4653 + $0x10] sm:$0xf]
        %v4659 = vld [vmem:[%s4653 + $0x14] sm:$0xf]
        %v4660 = vld [vmem:[%s4653 + $0x18] sm:$0xf]
        %v4661 = vld [vmem:[%s4653 + $0x1c] sm:$0xf]
        %v4662 = vld [vmem:[%s4653 + $0x20] sm:$0xf]
        %v4663 = vld [vmem:[%s4653 + $0x24] sm:$0xf]
        %v4664 = vld [vmem:[%s4653 + $0x28] sm:$0xf]
        %v4665 = vld [vmem:[%s4653 + $0x2c] sm:$0xf]
        %v4666 = vld [vmem:[%s4653 + $0x30] sm:$0xf]
        %v4667 = vld [vmem:[%s4653 + $0x34] sm:$0xf]
        %v4668 = vld [vmem:[%s4653 + $0x38] sm:$0xf]
        %v4669 = vld [vmem:[%s4653 + $0x3c] sm:$0xf]
        %v4679 = vunpack.c.l.b16 %v4644
        %v4680 = vunpack.c.l.b16 %v4645
        %v4681 = vunpack.c.l.b16 %v4646
        %v4682 = vunpack.c.l.b16 %v4647
        %v4683 = vunpack.c.l.b16 %v4648
        %v4684 = vunpack.c.l.b16 %v4649
        %v4685 = vunpack.c.l.b16 %v4650
        %v4686 = vunpack.c.l.b16 %v4651
        %v4687 = vunpack.c.l.b16 %v4652
        %v4688 = vpack.c.b16 %v4680, %v4679
        %v4689 = vpack.c.b16 %v4682, %v4681
        %v4690 = vpack.c.b16 %v4684, %v4683
        %v4691 = vpack.c.b16 %v4686, %v4685
        %v4692 = vpack.c.b16 %v4687, %v4687
        %v4694 = vshrl.u32 %v4688, 16
        %v4696 = vshll.u32 %v4688, 16
        %v4698 = vrot.slane %v4696, 1
        %v4699 = vor.u32 %v4694, %v4698
        %v4701 = vshll.u32 %v4689, 16
        %v4703 = vrot.slane %v4701, 1
        %v4704 = vsel %vm1661, %v4699, %v4703
        %v4705 = vshrl.u32 %v4689, 16
        %v4707 = vor.u32 %v4705, %v4703
        %v4709 = vshll.u32 %v4690, 16
        %v4711 = vrot.slane %v4709, 1
        %v4712 = vsel %vm1661, %v4707, %v4711
        %v4713 = vshrl.u32 %v4690, 16
        %v4715 = vor.u32 %v4713, %v4711
        %v4717 = vshll.u32 %v4691, 16
        %v4719 = vrot.slane %v4717, 1
        %v4720 = vsel %vm1661, %v4715, %v4719
        %v4721 = vshrl.u32 %v4691, 16
        %v4723 = vor.u32 %v4721, %v4719
        %v4725 = vshll.u32 %v4692, 16
        %v4727 = vrot.slane %v4725, 1
        %v4728 = vsel %vm1661, %v4723, %v4727
        %v4749 = vunpack.c.l.b16 %v4654
        %v4750 = vunpack.c.l.b16 %v4655
        %v4751 = vunpack.c.l.b16 %v4656
        %v4752 = vunpack.c.l.b16 %v4657
        %v4753 = vunpack.c.l.b16 %v4658
        %v4754 = vunpack.c.l.b16 %v4659
        %v4755 = vunpack.c.l.b16 %v4660
        %v4756 = vunpack.c.l.b16 %v4661
        %v4757 = vunpack.c.l.b16 %v4662
        %v4758 = vunpack.c.l.b16 %v4663
        %v4759 = vunpack.c.l.b16 %v4664
        %v4760 = vunpack.c.l.b16 %v4665
        %v4761 = vunpack.c.l.b16 %v4666
        %v4762 = vunpack.c.l.b16 %v4667
        %v4763 = vunpack.c.l.b16 %v4668
        %v4764 = vunpack.c.l.b16 %v4669
        %v4765 = vpack.c.b16 %v4750, %v4749
        %v4766 = vpack.c.b16 %v4752, %v4751
        %v4767 = vpack.c.b16 %v4754, %v4753
        %v4768 = vpack.c.b16 %v4756, %v4755
        %v4769 = vpack.c.b16 %v4758, %v4757
        %v4770 = vpack.c.b16 %v4760, %v4759
        %v4771 = vpack.c.b16 %v4762, %v4761
        %v4772 = vpack.c.b16 %v4764, %v4763
        %4781 = vmatpush.bf16.msra.mxu0 %v4772
        %4782 = vmatpush.bf16.msra.mxu0 %v4771
        %4783 = vmatpush.bf16.msra.mxu0 %v4770
        %4784 = vmatpush.bf16.msra.mxu0 %v4769
        %4785 = vmatpush.bf16.msra.mxu0 %v4768
        %4786 = vmatpush.bf16.msra.mxu0 %v4767
        %4787 = vmatpush.bf16.msra.mxu0 %v4766
        %4788 = vmatpush.bf16.msra.mxu0 %v4765
        %4789 = vmatmul.bf16.gmra.mxu0 %v4704
        %v4790 = vpop.f32.mrf.mxu0
        %v4791 = vadd.f32 0.0, %v4790
        %v4792 = vpop.f32.mrf.mxu0
        %v4793 = vadd.f32 0.0, %v4792
        %4794 = vmatmul.bf16.gmra.mxu0 %v4712
        %v4795 = vpop.f32.mrf.mxu0
        %v4796 = vadd.f32 0.0, %v4795
        %v4797 = vpop.f32.mrf.mxu0
        %v4798 = vadd.f32 0.0, %v4797
        %4799 = vmatmul.bf16.gmra.mxu0 %v4720
        %v4800 = vpop.f32.mrf.mxu0
        %v4801 = vadd.f32 0.0, %v4800
        %v4802 = vpop.f32.mrf.mxu0
        %v4803 = vadd.f32 0.0, %v4802
        %4804 = vmatmul.bf16.gmra.mxu0 %v4728
        %v4805 = vpop.f32.mrf.mxu0
        %v4806 = vadd.f32 0.0, %v4805
        %v4807 = vpop.f32.mrf.mxu0
        %v4808 = vadd.f32 0.0, %v4807
        %4809 = vdwg.mxu0
        %v4810 = vadd.f32 %v4616, %v4791
        %v4811 = vadd.f32 %v4618, %v4793
        %v4812 = vadd.f32 %v4621, %v4796
        %v4813 = vadd.f32 %v4623, %v4798
        %v4814 = vadd.f32 %v4626, %v4801
        %v4815 = vadd.f32 %v4628, %v4803
        %v4816 = vadd.f32 %v4631, %v4806
        %v4817 = vadd.f32 %v4633, %v4808
        %v4818 = vld [vmem:[#allocation4 + $0x4] sm:$0x8]
        %v4819 = vld [vmem:[#allocation4 + $0x24] sm:$0xf]
        %v4820 = vsel %vm1085, %v4818, 0
        %v4821 = vsel %vm1092, %v4636, 0
        %v4822 = vsel %vm1099, %v4637, 0
        %v4823 = vsel %vm1106, %v4638, 0
        %v4824 = vsel %vm1113, %v4639, 0
        %v4825 = vsel %vm1120, %v4640, 0
        %v4826 = vsel %vm1127, %v4641, 0
        %v4827 = vsel %vm1134, %v4642, 0
        %v4828 = vsel %vm1141, %v4819, 0
        %s4829 = scalar_lea.vmem %s7, 192
        %v4830 = vld [vmem:[%s4829] sm:$0xf]
        %v4831 = vld [vmem:[%s4829 + $0x4] sm:$0xf]
        %v4832 = vld [vmem:[%s4829 + $0x8] sm:$0xf]
        %v4833 = vld [vmem:[%s4829 + $0xc] sm:$0xf]
        %v4834 = vld [vmem:[%s4829 + $0x10] sm:$0xf]
        %v4835 = vld [vmem:[%s4829 + $0x14] sm:$0xf]
        %v4836 = vld [vmem:[%s4829 + $0x18] sm:$0xf]
        %v4837 = vld [vmem:[%s4829 + $0x1c] sm:$0xf]
        %v4838 = vld [vmem:[%s4829 + $0x20] sm:$0xf]
        %v4839 = vld [vmem:[%s4829 + $0x24] sm:$0xf]
        %v4840 = vld [vmem:[%s4829 + $0x28] sm:$0xf]
        %v4841 = vld [vmem:[%s4829 + $0x2c] sm:$0xf]
        %v4842 = vld [vmem:[%s4829 + $0x30] sm:$0xf]
        %v4843 = vld [vmem:[%s4829 + $0x34] sm:$0xf]
        %v4844 = vld [vmem:[%s4829 + $0x38] sm:$0xf]
        %v4845 = vld [vmem:[%s4829 + $0x3c] sm:$0xf]
        %v4855 = vunpack.c.l.b16 %v4820
        %v4856 = vunpack.c.l.b16 %v4821
        %v4857 = vunpack.c.l.b16 %v4822
        %v4858 = vunpack.c.l.b16 %v4823
        %v4859 = vunpack.c.l.b16 %v4824
        %v4860 = vunpack.c.l.b16 %v4825
        %v4861 = vunpack.c.l.b16 %v4826
        %v4862 = vunpack.c.l.b16 %v4827
        %v4863 = vunpack.c.l.b16 %v4828
        %v4864 = vpack.c.b16 %v4856, %v4855
        %v4865 = vpack.c.b16 %v4858, %v4857
        %v4866 = vpack.c.b16 %v4860, %v4859
        %v4867 = vpack.c.b16 %v4862, %v4861
        %v4868 = vpack.c.b16 %v4863, %v4863
        %v4870 = vshrl.u32 %v4864, 16
        %v4872 = vrot.slane %v4870, 3
        %v4873 = vshll.u32 %v4864, 16
        %v4875 = vrot.slane %v4873, 4
        %v4876 = vor.u32 %v4872, %v4875
        %v4878 = vshrl.u32 %v4865, 16
        %v4880 = vrot.slane %v4878, 3
        %v4881 = vshll.u32 %v4865, 16
        %v4883 = vrot.slane %v4881, 4
        %v4884 = vor.u32 %v4880, %v4883
        %v4885 = vsel %vm1308, %v4876, %v4884
        %v4887 = vshrl.u32 %v4866, 16
        %v4889 = vrot.slane %v4887, 3
        %v4890 = vshll.u32 %v4866, 16
        %v4892 = vrot.slane %v4890, 4
        %v4893 = vor.u32 %v4889, %v4892
        %v4894 = vsel %vm1308, %v4884, %v4893
        %v4896 = vshrl.u32 %v4867, 16
        %v4898 = vrot.slane %v4896, 3
        %v4899 = vshll.u32 %v4867, 16
        %v4901 = vrot.slane %v4899, 4
        %v4902 = vor.u32 %v4898, %v4901
        %v4903 = vsel %vm1308, %v4893, %v4902
        %v4905 = vshrl.u32 %v4868, 16
        %v4907 = vrot.slane %v4905, 3
        %v4908 = vshll.u32 %v4868, 16
        %v4910 = vrot.slane %v4908, 4
        %v4911 = vor.u32 %v4907, %v4910
        %v4912 = vsel %vm1308, %v4902, %v4911
        %v4933 = vunpack.c.l.b16 %v4830
        %v4934 = vunpack.c.l.b16 %v4831
        %v4935 = vunpack.c.l.b16 %v4832
        %v4936 = vunpack.c.l.b16 %v4833
        %v4937 = vunpack.c.l.b16 %v4834
        %v4938 = vunpack.c.l.b16 %v4835
        %v4939 = vunpack.c.l.b16 %v4836
        %v4940 = vunpack.c.l.b16 %v4837
        %v4941 = vunpack.c.l.b16 %v4838
        %v4942 = vunpack.c.l.b16 %v4839
        %v4943 = vunpack.c.l.b16 %v4840
        %v4944 = vunpack.c.l.b16 %v4841
        %v4945 = vunpack.c.l.b16 %v4842
        %v4946 = vunpack.c.l.b16 %v4843
        %v4947 = vunpack.c.l.b16 %v4844
        %v4948 = vunpack.c.l.b16 %v4845
        %v4949 = vpack.c.b16 %v4934, %v4933
        %v4950 = vpack.c.b16 %v4936, %v4935
        %v4951 = vpack.c.b16 %v4938, %v4937
        %v4952 = vpack.c.b16 %v4940, %v4939
        %v4953 = vpack.c.b16 %v4942, %v4941
        %v4954 = vpack.c.b16 %v4944, %v4943
        %v4955 = vpack.c.b16 %v4946, %v4945
        %v4956 = vpack.c.b16 %v4948, %v4947
        %4965 = vmatpush.bf16.msra.mxu0 %v4956
        %4966 = vmatpush.bf16.msra.mxu0 %v4955
        %4967 = vmatpush.bf16.msra.mxu0 %v4954
        %4968 = vmatpush.bf16.msra.mxu0 %v4953
        %4969 = vmatpush.bf16.msra.mxu0 %v4952
        %4970 = vmatpush.bf16.msra.mxu0 %v4951
        %4971 = vmatpush.bf16.msra.mxu0 %v4950
        %4972 = vmatpush.bf16.msra.mxu0 %v4949
        %4973 = vmatmul.bf16.gmra.mxu0 %v4885
        %v4974 = vpop.f32.mrf.mxu0
        %v4975 = vadd.f32 0.0, %v4974
        %v4976 = vpop.f32.mrf.mxu0
        %v4977 = vadd.f32 0.0, %v4976
        %4978 = vmatmul.bf16.gmra.mxu0 %v4894
        %v4979 = vpop.f32.mrf.mxu0
        %v4980 = vadd.f32 0.0, %v4979
        %v4981 = vpop.f32.mrf.mxu0
        %v4982 = vadd.f32 0.0, %v4981
        %4983 = vmatmul.bf16.gmra.mxu0 %v4903
        %v4984 = vpop.f32.mrf.mxu0
        %v4985 = vadd.f32 0.0, %v4984
        %v4986 = vpop.f32.mrf.mxu0
        %v4987 = vadd.f32 0.0, %v4986
        %4988 = vmatmul.bf16.gmra.mxu0 %v4912
        %v4989 = vpop.f32.mrf.mxu0
        %v4990 = vadd.f32 0.0, %v4989
        %v4991 = vpop.f32.mrf.mxu0
        %v4992 = vadd.f32 0.0, %v4991
        %4993 = vdwg.mxu0
        %v4994 = vadd.f32 %v4810, %v4975
        %v4995 = vadd.f32 %v4811, %v4977
        %v4996 = vadd.f32 %v4812, %v4980
        %v4997 = vadd.f32 %v4813, %v4982
        %v4998 = vadd.f32 %v4814, %v4985
        %v4999 = vadd.f32 %v4815, %v4987
        %v5000 = vadd.f32 %v4816, %v4990
        %v5001 = vadd.f32 %v4817, %v4992
        %s5002 = scalar_lea.vmem %s7, 256
        %v5003 = vld [vmem:[%s5002] sm:$0xf]
        %v5004 = vld [vmem:[%s5002 + $0x4] sm:$0xf]
        %v5005 = vld [vmem:[%s5002 + $0x8] sm:$0xf]
        %v5006 = vld [vmem:[%s5002 + $0xc] sm:$0xf]
        %v5007 = vld [vmem:[%s5002 + $0x10] sm:$0xf]
        %v5008 = vld [vmem:[%s5002 + $0x14] sm:$0xf]
        %v5009 = vld [vmem:[%s5002 + $0x18] sm:$0xf]
        %v5010 = vld [vmem:[%s5002 + $0x1c] sm:$0xf]
        %v5011 = vld [vmem:[%s5002 + $0x20] sm:$0xf]
        %v5012 = vld [vmem:[%s5002 + $0x24] sm:$0xf]
        %v5013 = vld [vmem:[%s5002 + $0x28] sm:$0xf]
        %v5014 = vld [vmem:[%s5002 + $0x2c] sm:$0xf]
        %v5015 = vld [vmem:[%s5002 + $0x30] sm:$0xf]
        %v5016 = vld [vmem:[%s5002 + $0x34] sm:$0xf]
        %v5017 = vld [vmem:[%s5002 + $0x38] sm:$0xf]
        %v5018 = vld [vmem:[%s5002 + $0x3c] sm:$0xf]
        %v5027 = vunpack.c.l.b16 %v4636
        %v5028 = vunpack.c.l.b16 %v4637
        %v5029 = vunpack.c.l.b16 %v4638
        %v5030 = vunpack.c.l.b16 %v4639
        %v5031 = vunpack.c.l.b16 %v4640
        %v5032 = vunpack.c.l.b16 %v4641
        %v5033 = vunpack.c.l.b16 %v4642
        %v5034 = vunpack.c.l.b16 %v4819
        %v5035 = vpack.c.b16 %v5028, %v5027
        %v5036 = vpack.c.b16 %v5030, %v5029
        %v5037 = vpack.c.b16 %v5032, %v5031
        %v5038 = vpack.c.b16 %v5034, %v5033
        %v5059 = vunpack.c.l.b16 %v5003
        %v5060 = vunpack.c.l.b16 %v5004
        %v5061 = vunpack.c.l.b16 %v5005
        %v5062 = vunpack.c.l.b16 %v5006
        %v5063 = vunpack.c.l.b16 %v5007
        %v5064 = vunpack.c.l.b16 %v5008
        %v5065 = vunpack.c.l.b16 %v5009
        %v5066 = vunpack.c.l.b16 %v5010
        %v5067 = vunpack.c.l.b16 %v5011
        %v5068 = vunpack.c.l.b16 %v5012
        %v5069 = vunpack.c.l.b16 %v5013
        %v5070 = vunpack.c.l.b16 %v5014
        %v5071 = vunpack.c.l.b16 %v5015
        %v5072 = vunpack.c.l.b16 %v5016
        %v5073 = vunpack.c.l.b16 %v5017
        %v5074 = vunpack.c.l.b16 %v5018
        %v5075 = vpack.c.b16 %v5060, %v5059
        %v5076 = vpack.c.b16 %v5062, %v5061
        %v5077 = vpack.c.b16 %v5064, %v5063
        %v5078 = vpack.c.b16 %v5066, %v5065
        %v5079 = vpack.c.b16 %v5068, %v5067
        %v5080 = vpack.c.b16 %v5070, %v5069
        %v5081 = vpack.c.b16 %v5072, %v5071
        %v5082 = vpack.c.b16 %v5074, %v5073
        %5091 = vmatpush.bf16.msra.mxu0 %v5082
        %5092 = vmatpush.bf16.msra.mxu0 %v5081
        %5093 = vmatpush.bf16.msra.mxu0 %v5080
        %5094 = vmatpush.bf16.msra.mxu0 %v5079
        %5095 = vmatpush.bf16.msra.mxu0 %v5078
        %5096 = vmatpush.bf16.msra.mxu0 %v5077
        %5097 = vmatpush.bf16.msra.mxu0 %v5076
        %5098 = vmatpush.bf16.msra.mxu0 %v5075
        %5099 = vmatmul.bf16.gmra.mxu0 %v5035
        %v5100 = vpop.f32.mrf.mxu0
        %v5101 = vadd.f32 0.0, %v5100
        %v5102 = vpop.f32.mrf.mxu0
        %v5103 = vadd.f32 0.0, %v5102
        %5104 = vmatmul.bf16.gmra.mxu0 %v5036
        %v5105 = vpop.f32.mrf.mxu0
        %v5106 = vadd.f32 0.0, %v5105
        %v5107 = vpop.f32.mrf.mxu0
        %v5108 = vadd.f32 0.0, %v5107
        %5109 = vmatmul.bf16.gmra.mxu0 %v5037
        %v5110 = vpop.f32.mrf.mxu0
        %v5111 = vadd.f32 0.0, %v5110
        %v5112 = vpop.f32.mrf.mxu0
        %v5113 = vadd.f32 0.0, %v5112
        %5114 = vmatmul.bf16.gmra.mxu0 %v5038
        %v5115 = vpop.f32.mrf.mxu0
        %v5116 = vadd.f32 0.0, %v5115
        %v5117 = vpop.f32.mrf.mxu0
        %v5118 = vadd.f32 0.0, %v5117
        %5119 = vdwg.mxu0
        %v5120 = vadd.f32 %v4994, %v5101
        %v5121 = vadd.f32 %v4995, %v5103
        %v5122 = vadd.f32 %v4996, %v5106
        %v5123 = vadd.f32 %v4997, %v5108
        %v5124 = vadd.f32 %v4998, %v5111
        %v5125 = vadd.f32 %v4999, %v5113
        %v5126 = vadd.f32 %v5000, %v5116
        %v5127 = vadd.f32 %v5001, %v5118
        %v5128 = vld [vmem:[#allocation4 + $0x8] sm:$0xf]
        %v5129 = vld [vmem:[#allocation4 + $0xc] sm:$0xf]
        %v5130 = vld [vmem:[#allocation4 + $0x10] sm:$0xf]
        %v5131 = vld [vmem:[#allocation4 + $0x14] sm:$0xf]
        %v5132 = vld [vmem:[#allocation4 + $0x18] sm:$0xf]
        %v5133 = vld [vmem:[#allocation4 + $0x1c] sm:$0xf]
        %v5134 = vld [vmem:[#allocation4 + $0x20] sm:$0xf]
        %v5135 = vld [vmem:[#allocation4 + $0x24] sm:$0xf]
        %v5136 = vld [vmem:[#allocation4 + $0x28] sm:$0x1]
        %v5137 = vsel %vm1555, %v5128, 0
        %v5138 = vsel %vm1562, %v5129, 0
        %v5139 = vsel %vm1569, %v5130, 0
        %v5140 = vsel %vm1576, %v5131, 0
        %v5141 = vsel %vm1583, %v5132, 0
        %v5142 = vsel %vm1590, %v5133, 0
        %v5143 = vsel %vm1597, %v5134, 0
        %v5144 = vsel %vm1604, %v5135, 0
        %v5145 = vsel %vm1611, %v5136, 0
        %s5146 = scalar_lea.vmem %s7, 320
        %v5147 = vld [vmem:[%s5146] sm:$0xf]
        %v5148 = vld [vmem:[%s5146 + $0x4] sm:$0xf]
        %v5149 = vld [vmem:[%s5146 + $0x8] sm:$0xf]
        %v5150 = vld [vmem:[%s5146 + $0xc] sm:$0xf]
        %v5151 = vld [vmem:[%s5146 + $0x10] sm:$0xf]
        %v5152 = vld [vmem:[%s5146 + $0x14] sm:$0xf]
        %v5153 = vld [vmem:[%s5146 + $0x18] sm:$0xf]
        %v5154 = vld [vmem:[%s5146 + $0x1c] sm:$0xf]
        %v5155 = vld [vmem:[%s5146 + $0x20] sm:$0xf]
        %v5156 = vld [vmem:[%s5146 + $0x24] sm:$0xf]
        %v5157 = vld [vmem:[%s5146 + $0x28] sm:$0xf]
        %v5158 = vld [vmem:[%s5146 + $0x2c] sm:$0xf]
        %v5159 = vld [vmem:[%s5146 + $0x30] sm:$0xf]
        %v5160 = vld [vmem:[%s5146 + $0x34] sm:$0xf]
        %v5161 = vld [vmem:[%s5146 + $0x38] sm:$0xf]
        %v5162 = vld [vmem:[%s5146 + $0x3c] sm:$0xf]
        %v5172 = vunpack.c.l.b16 %v5137
        %v5173 = vunpack.c.l.b16 %v5138
        %v5174 = vunpack.c.l.b16 %v5139
        %v5175 = vunpack.c.l.b16 %v5140
        %v5176 = vunpack.c.l.b16 %v5141
        %v5177 = vunpack.c.l.b16 %v5142
        %v5178 = vunpack.c.l.b16 %v5143
        %v5179 = vunpack.c.l.b16 %v5144
        %v5180 = vunpack.c.l.b16 %v5145
        %v5181 = vpack.c.b16 %v5173, %v5172
        %v5182 = vpack.c.b16 %v5175, %v5174
        %v5183 = vpack.c.b16 %v5177, %v5176
        %v5184 = vpack.c.b16 %v5179, %v5178
        %v5185 = vpack.c.b16 %v5180, %v5180
        %v5187 = vshrl.u32 %v5181, 16
        %v5189 = vshll.u32 %v5181, 16
        %v5191 = vrot.slane %v5189, 1
        %v5192 = vor.u32 %v5187, %v5191
        %v5194 = vshll.u32 %v5182, 16
        %v5196 = vrot.slane %v5194, 1
        %v5197 = vsel %vm1661, %v5192, %v5196
        %v5198 = vshrl.u32 %v5182, 16
        %v5200 = vor.u32 %v5198, %v5196
        %v5202 = vshll.u32 %v5183, 16
        %v5204 = vrot.slane %v5202, 1
        %v5205 = vsel %vm1661, %v5200, %v5204
        %v5206 = vshrl.u32 %v5183, 16
        %v5208 = vor.u32 %v5206, %v5204
        %v5210 = vshll.u32 %v5184, 16
        %v5212 = vrot.slane %v5210, 1
        %v5213 = vsel %vm1661, %v5208, %v5212
        %v5214 = vshrl.u32 %v5184, 16
        %v5216 = vor.u32 %v5214, %v5212
        %v5218 = vshll.u32 %v5185, 16
        %v5220 = vrot.slane %v5218, 1
        %v5221 = vsel %vm1661, %v5216, %v5220
        %v5242 = vunpack.c.l.b16 %v5147
        %v5243 = vunpack.c.l.b16 %v5148
        %v5244 = vunpack.c.l.b16 %v5149
        %v5245 = vunpack.c.l.b16 %v5150
        %v5246 = vunpack.c.l.b16 %v5151
        %v5247 = vunpack.c.l.b16 %v5152
        %v5248 = vunpack.c.l.b16 %v5153
        %v5249 = vunpack.c.l.b16 %v5154
        %v5250 = vunpack.c.l.b16 %v5155
        %v5251 = vunpack.c.l.b16 %v5156
        %v5252 = vunpack.c.l.b16 %v5157
        %v5253 = vunpack.c.l.b16 %v5158
        %v5254 = vunpack.c.l.b16 %v5159
        %v5255 = vunpack.c.l.b16 %v5160
        %v5256 = vunpack.c.l.b16 %v5161
        %v5257 = vunpack.c.l.b16 %v5162
        %v5258 = vpack.c.b16 %v5243, %v5242
        %v5259 = vpack.c.b16 %v5245, %v5244
        %v5260 = vpack.c.b16 %v5247, %v5246
        %v5261 = vpack.c.b16 %v5249, %v5248
        %v5262 = vpack.c.b16 %v5251, %v5250
        %v5263 = vpack.c.b16 %v5253, %v5252
        %v5264 = vpack.c.b16 %v5255, %v5254
        %v5265 = vpack.c.b16 %v5257, %v5256
        %5274 = vmatpush.bf16.msra.mxu0 %v5265
        %5275 = vmatpush.bf16.msra.mxu0 %v5264
        %5276 = vmatpush.bf16.msra.mxu0 %v5263
        %5277 = vmatpush.bf16.msra.mxu0 %v5262
        %5278 = vmatpush.bf16.msra.mxu0 %v5261
        %5279 = vmatpush.bf16.msra.mxu0 %v5260
        %5280 = vmatpush.bf16.msra.mxu0 %v5259
        %5281 = vmatpush.bf16.msra.mxu0 %v5258
        %5282 = vmatmul.bf16.gmra.mxu0 %v5197
        %v5283 = vpop.f32.mrf.mxu0
        %v5284 = vadd.f32 0.0, %v5283
        %v5285 = vpop.f32.mrf.mxu0
        %v5286 = vadd.f32 0.0, %v5285
        %5287 = vmatmul.bf16.gmra.mxu0 %v5205
        %v5288 = vpop.f32.mrf.mxu0
        %v5289 = vadd.f32 0.0, %v5288
        %v5290 = vpop.f32.mrf.mxu0
        %v5291 = vadd.f32 0.0, %v5290
        %5292 = vmatmul.bf16.gmra.mxu0 %v5213
        %v5293 = vpop.f32.mrf.mxu0
        %v5294 = vadd.f32 0.0, %v5293
        %v5295 = vpop.f32.mrf.mxu0
        %v5296 = vadd.f32 0.0, %v5295
        %5297 = vmatmul.bf16.gmra.mxu0 %v5221
        %v5298 = vpop.f32.mrf.mxu0
        %v5299 = vadd.f32 0.0, %v5298
        %v5300 = vpop.f32.mrf.mxu0
        %v5301 = vadd.f32 0.0, %v5300
        %5302 = vdwg.mxu0
        %v5303 = vadd.f32 %v5120, %v5284
        %v5304 = vadd.f32 %v5121, %v5286
        %v5305 = vadd.f32 %v5122, %v5289
        %v5306 = vadd.f32 %v5123, %v5291
        %v5307 = vadd.f32 %v5124, %v5294
        %v5308 = vadd.f32 %v5125, %v5296
        %v5309 = vadd.f32 %v5126, %v5299
        %v5310 = vadd.f32 %v5127, %v5301
        %v5311 = vld [vmem:[#allocation4 + $0x8] sm:$0x8]
        %v5312 = vld [vmem:[#allocation4 + $0x28] sm:$0xf]
        %v5313 = vsel %vm1085, %v5311, 0
        %v5314 = vsel %vm1092, %v5129, 0
        %v5315 = vsel %vm1099, %v5130, 0
        %v5316 = vsel %vm1106, %v5131, 0
        %v5317 = vsel %vm1113, %v5132, 0
        %v5318 = vsel %vm1120, %v5133, 0
        %v5319 = vsel %vm1127, %v5134, 0
        %v5320 = vsel %vm1134, %v5135, 0
        %v5321 = vsel %vm1141, %v5312, 0
        %s5322 = scalar_lea.vmem %s7, 384
        %v5323 = vld [vmem:[%s5322] sm:$0xf]
        %v5324 = vld [vmem:[%s5322 + $0x4] sm:$0xf]
        %v5325 = vld [vmem:[%s5322 + $0x8] sm:$0xf]
        %v5326 = vld [vmem:[%s5322 + $0xc] sm:$0xf]
        %v5327 = vld [vmem:[%s5322 + $0x10] sm:$0xf]
        %v5328 = vld [vmem:[%s5322 + $0x14] sm:$0xf]
        %v5329 = vld [vmem:[%s5322 + $0x18] sm:$0xf]
        %v5330 = vld [vmem:[%s5322 + $0x1c] sm:$0xf]
        %v5331 = vld [vmem:[%s5322 + $0x20] sm:$0xf]
        %v5332 = vld [vmem:[%s5322 + $0x24] sm:$0xf]
        %v5333 = vld [vmem:[%s5322 + $0x28] sm:$0xf]
        %v5334 = vld [vmem:[%s5322 + $0x2c] sm:$0xf]
        %v5335 = vld [vmem:[%s5322 + $0x30] sm:$0xf]
        %v5336 = vld [vmem:[%s5322 + $0x34] sm:$0xf]
        %v5337 = vld [vmem:[%s5322 + $0x38] sm:$0xf]
        %v5338 = vld [vmem:[%s5322 + $0x3c] sm:$0xf]
        %v5348 = vunpack.c.l.b16 %v5313
        %v5349 = vunpack.c.l.b16 %v5314
        %v5350 = vunpack.c.l.b16 %v5315
        %v5351 = vunpack.c.l.b16 %v5316
        %v5352 = vunpack.c.l.b16 %v5317
        %v5353 = vunpack.c.l.b16 %v5318
        %v5354 = vunpack.c.l.b16 %v5319
        %v5355 = vunpack.c.l.b16 %v5320
        %v5356 = vunpack.c.l.b16 %v5321
        %v5357 = vpack.c.b16 %v5349, %v5348
        %v5358 = vpack.c.b16 %v5351, %v5350
        %v5359 = vpack.c.b16 %v5353, %v5352
        %v5360 = vpack.c.b16 %v5355, %v5354
        %v5361 = vpack.c.b16 %v5356, %v5356
        %v5363 = vshrl.u32 %v5357, 16
        %v5365 = vrot.slane %v5363, 3
        %v5366 = vshll.u32 %v5357, 16
        %v5368 = vrot.slane %v5366, 4
        %v5369 = vor.u32 %v5365, %v5368
        %v5371 = vshrl.u32 %v5358, 16
        %v5373 = vrot.slane %v5371, 3
        %v5374 = vshll.u32 %v5358, 16
        %v5376 = vrot.slane %v5374, 4
        %v5377 = vor.u32 %v5373, %v5376
        %v5378 = vsel %vm1308, %v5369, %v5377
        %v5380 = vshrl.u32 %v5359, 16
        %v5382 = vrot.slane %v5380, 3
        %v5383 = vshll.u32 %v5359, 16
        %v5385 = vrot.slane %v5383, 4
        %v5386 = vor.u32 %v5382, %v5385
        %v5387 = vsel %vm1308, %v5377, %v5386
        %v5389 = vshrl.u32 %v5360, 16
        %v5391 = vrot.slane %v5389, 3
        %v5392 = vshll.u32 %v5360, 16
        %v5394 = vrot.slane %v5392, 4
        %v5395 = vor.u32 %v5391, %v5394
        %v5396 = vsel %vm1308, %v5386, %v5395
        %v5398 = vshrl.u32 %v5361, 16
        %v5400 = vrot.slane %v5398, 3
        %v5401 = vshll.u32 %v5361, 16
        %v5403 = vrot.slane %v5401, 4
        %v5404 = vor.u32 %v5400, %v5403
        %v5405 = vsel %vm1308, %v5395, %v5404
        %v5426 = vunpack.c.l.b16 %v5323
        %v5427 = vunpack.c.l.b16 %v5324
        %v5428 = vunpack.c.l.b16 %v5325
        %v5429 = vunpack.c.l.b16 %v5326
        %v5430 = vunpack.c.l.b16 %v5327
        %v5431 = vunpack.c.l.b16 %v5328
        %v5432 = vunpack.c.l.b16 %v5329
        %v5433 = vunpack.c.l.b16 %v5330
        %v5434 = vunpack.c.l.b16 %v5331
        %v5435 = vunpack.c.l.b16 %v5332
        %v5436 = vunpack.c.l.b16 %v5333
        %v5437 = vunpack.c.l.b16 %v5334
        %v5438 = vunpack.c.l.b16 %v5335
        %v5439 = vunpack.c.l.b16 %v5336
        %v5440 = vunpack.c.l.b16 %v5337
        %v5441 = vunpack.c.l.b16 %v5338
        %v5442 = vpack.c.b16 %v5427, %v5426
        %v5443 = vpack.c.b16 %v5429, %v5428
        %v5444 = vpack.c.b16 %v5431, %v5430
        %v5445 = vpack.c.b16 %v5433, %v5432
        %v5446 = vpack.c.b16 %v5435, %v5434
        %v5447 = vpack.c.b16 %v5437, %v5436
        %v5448 = vpack.c.b16 %v5439, %v5438
        %v5449 = vpack.c.b16 %v5441, %v5440
        %5458 = vmatpush.bf16.msra.mxu0 %v5449
        %5459 = vmatpush.bf16.msra.mxu0 %v5448
        %5460 = vmatpush.bf16.msra.mxu0 %v5447
        %5461 = vmatpush.bf16.msra.mxu0 %v5446
        %5462 = vmatpush.bf16.msra.mxu0 %v5445
        %5463 = vmatpush.bf16.msra.mxu0 %v5444
        %5464 = vmatpush.bf16.msra.mxu0 %v5443
        %5465 = vmatpush.bf16.msra.mxu0 %v5442
        %5466 = vmatmul.bf16.gmra.mxu0 %v5378
        %v5467 = vpop.f32.mrf.mxu0
        %v5468 = vadd.f32 0.0, %v5467
        %v5469 = vpop.f32.mrf.mxu0
        %v5470 = vadd.f32 0.0, %v5469
        %5471 = vmatmul.bf16.gmra.mxu0 %v5387
        %v5472 = vpop.f32.mrf.mxu0
        %v5473 = vadd.f32 0.0, %v5472
        %v5474 = vpop.f32.mrf.mxu0
        %v5475 = vadd.f32 0.0, %v5474
        %5476 = vmatmul.bf16.gmra.mxu0 %v5396
        %v5477 = vpop.f32.mrf.mxu0
        %v5478 = vadd.f32 0.0, %v5477
        %v5479 = vpop.f32.mrf.mxu0
        %v5480 = vadd.f32 0.0, %v5479
        %5481 = vmatmul.bf16.gmra.mxu0 %v5405
        %v5482 = vpop.f32.mrf.mxu0
        %v5483 = vadd.f32 0.0, %v5482
        %v5484 = vpop.f32.mrf.mxu0
        %v5485 = vadd.f32 0.0, %v5484
        %5486 = vdwg.mxu0
        %v5487 = vadd.f32 %v5303, %v5468
        %v5488 = vadd.f32 %v5304, %v5470
        %v5489 = vadd.f32 %v5305, %v5473
        %v5490 = vadd.f32 %v5306, %v5475
        %v5491 = vadd.f32 %v5307, %v5478
        %v5492 = vadd.f32 %v5308, %v5480
        %v5493 = vadd.f32 %v5309, %v5483
        %v5494 = vadd.f32 %v5310, %v5485
        %s5495 = scalar_lea.vmem %s7, 448
        %v5496 = vld [vmem:[%s5495] sm:$0xf]
        %v5497 = vld [vmem:[%s5495 + $0x4] sm:$0xf]
        %v5498 = vld [vmem:[%s5495 + $0x8] sm:$0xf]
        %v5499 = vld [vmem:[%s5495 + $0xc] sm:$0xf]
        %v5500 = vld [vmem:[%s5495 + $0x10] sm:$0xf]
        %v5501 = vld [vmem:[%s5495 + $0x14] sm:$0xf]
        %v5502 = vld [vmem:[%s5495 + $0x18] sm:$0xf]
        %v5503 = vld [vmem:[%s5495 + $0x1c] sm:$0xf]
        %v5504 = vld [vmem:[%s5495 + $0x20] sm:$0xf]
        %v5505 = vld [vmem:[%s5495 + $0x24] sm:$0xf]
        %v5506 = vld [vmem:[%s5495 + $0x28] sm:$0xf]
        %v5507 = vld [vmem:[%s5495 + $0x2c] sm:$0xf]
        %v5508 = vld [vmem:[%s5495 + $0x30] sm:$0xf]
        %v5509 = vld [vmem:[%s5495 + $0x34] sm:$0xf]
        %v5510 = vld [vmem:[%s5495 + $0x38] sm:$0xf]
        %v5511 = vld [vmem:[%s5495 + $0x3c] sm:$0xf]
        %v5520 = vunpack.c.l.b16 %v5129
        %v5521 = vunpack.c.l.b16 %v5130
        %v5522 = vunpack.c.l.b16 %v5131
        %v5523 = vunpack.c.l.b16 %v5132
        %v5524 = vunpack.c.l.b16 %v5133
        %v5525 = vunpack.c.l.b16 %v5134
        %v5526 = vunpack.c.l.b16 %v5135
        %v5527 = vunpack.c.l.b16 %v5312
        %v5528 = vpack.c.b16 %v5521, %v5520
        %v5529 = vpack.c.b16 %v5523, %v5522
        %v5530 = vpack.c.b16 %v5525, %v5524
        %v5531 = vpack.c.b16 %v5527, %v5526
        %v5552 = vunpack.c.l.b16 %v5496
        %v5553 = vunpack.c.l.b16 %v5497
        %v5554 = vunpack.c.l.b16 %v5498
        %v5555 = vunpack.c.l.b16 %v5499
        %v5556 = vunpack.c.l.b16 %v5500
        %v5557 = vunpack.c.l.b16 %v5501
        %v5558 = vunpack.c.l.b16 %v5502
        %v5559 = vunpack.c.l.b16 %v5503
        %v5560 = vunpack.c.l.b16 %v5504
        %v5561 = vunpack.c.l.b16 %v5505
        %v5562 = vunpack.c.l.b16 %v5506
        %v5563 = vunpack.c.l.b16 %v5507
        %v5564 = vunpack.c.l.b16 %v5508
        %v5565 = vunpack.c.l.b16 %v5509
        %v5566 = vunpack.c.l.b16 %v5510
        %v5567 = vunpack.c.l.b16 %v5511
        %v5568 = vpack.c.b16 %v5553, %v5552
        %v5569 = vpack.c.b16 %v5555, %v5554
        %v5570 = vpack.c.b16 %v5557, %v5556
        %v5571 = vpack.c.b16 %v5559, %v5558
        %v5572 = vpack.c.b16 %v5561, %v5560
        %v5573 = vpack.c.b16 %v5563, %v5562
        %v5574 = vpack.c.b16 %v5565, %v5564
        %v5575 = vpack.c.b16 %v5567, %v5566
        %5584 = vmatpush.bf16.msra.mxu0 %v5575
        %5585 = vmatpush.bf16.msra.mxu0 %v5574
        %5586 = vmatpush.bf16.msra.mxu0 %v5573
        %5587 = vmatpush.bf16.msra.mxu0 %v5572
        %5588 = vmatpush.bf16.msra.mxu0 %v5571
        %5589 = vmatpush.bf16.msra.mxu0 %v5570
        %5590 = vmatpush.bf16.msra.mxu0 %v5569
        %5591 = vmatpush.bf16.msra.mxu0 %v5568
        %5592 = vmatmul.bf16.gmra.mxu0 %v5528
        %v5593 = vpop.f32.mrf.mxu0
        %v5594 = vadd.f32 0.0, %v5593
        %v5595 = vpop.f32.mrf.mxu0
        %v5596 = vadd.f32 0.0, %v5595
        %5597 = vmatmul.bf16.gmra.mxu0 %v5529
        %v5598 = vpop.f32.mrf.mxu0
        %v5599 = vadd.f32 0.0, %v5598
        %v5600 = vpop.f32.mrf.mxu0
        %v5601 = vadd.f32 0.0, %v5600
        %5602 = vmatmul.bf16.gmra.mxu0 %v5530
        %v5603 = vpop.f32.mrf.mxu0
        %v5604 = vadd.f32 0.0, %v5603
        %v5605 = vpop.f32.mrf.mxu0
        %v5606 = vadd.f32 0.0, %v5605
        %5607 = vmatmul.bf16.gmra.mxu0 %v5531
        %v5608 = vpop.f32.mrf.mxu0
        %v5609 = vadd.f32 0.0, %v5608
        %v5610 = vpop.f32.mrf.mxu0
        %v5611 = vadd.f32 0.0, %v5610
        %5612 = vdwg.mxu0
        %v5613 = vadd.f32 %v5487, %v5594
        %v5614 = vadd.f32 %v5488, %v5596
        %v5615 = vadd.f32 %v5489, %v5599
        %v5616 = vadd.f32 %v5490, %v5601
        %v5617 = vadd.f32 %v5491, %v5604
        %v5618 = vadd.f32 %v5492, %v5606
        %v5619 = vadd.f32 %v5493, %v5609
        %v5620 = vadd.f32 %v5494, %v5611
        %v5621 = vld [vmem:[#allocation4 + $0xc] sm:$0xf]
        %v5622 = vld [vmem:[#allocation4 + $0x10] sm:$0xf]
        %v5623 = vld [vmem:[#allocation4 + $0x14] sm:$0xf]
        %v5624 = vld [vmem:[#allocation4 + $0x18] sm:$0xf]
        %v5625 = vld [vmem:[#allocation4 + $0x1c] sm:$0xf]
        %v5626 = vld [vmem:[#allocation4 + $0x20] sm:$0xf]
        %v5627 = vld [vmem:[#allocation4 + $0x24] sm:$0xf]
        %v5628 = vld [vmem:[#allocation4 + $0x28] sm:$0xf]
        %v5629 = vld [vmem:[#allocation4 + $0x2c] sm:$0x1]
        %v5630 = vsel %vm1555, %v5621, 0
        %v5631 = vsel %vm1562, %v5622, 0
        %v5632 = vsel %vm1569, %v5623, 0
        %v5633 = vsel %vm1576, %v5624, 0
        %v5634 = vsel %vm1583, %v5625, 0
        %v5635 = vsel %vm1590, %v5626, 0
        %v5636 = vsel %vm1597, %v5627, 0
        %v5637 = vsel %vm1604, %v5628, 0
        %v5638 = vsel %vm1611, %v5629, 0
        %s5639 = scalar_lea.vmem %s7, 512
        %v5640 = vld [vmem:[%s5639] sm:$0xf]
        %v5641 = vld [vmem:[%s5639 + $0x4] sm:$0xf]
        %v5642 = vld [vmem:[%s5639 + $0x8] sm:$0xf]
        %v5643 = vld [vmem:[%s5639 + $0xc] sm:$0xf]
        %v5644 = vld [vmem:[%s5639 + $0x10] sm:$0xf]
        %v5645 = vld [vmem:[%s5639 + $0x14] sm:$0xf]
        %v5646 = vld [vmem:[%s5639 + $0x18] sm:$0xf]
        %v5647 = vld [vmem:[%s5639 + $0x1c] sm:$0xf]
        %v5648 = vld [vmem:[%s5639 + $0x20] sm:$0xf]
        %v5649 = vld [vmem:[%s5639 + $0x24] sm:$0xf]
        %v5650 = vld [vmem:[%s5639 + $0x28] sm:$0xf]
        %v5651 = vld [vmem:[%s5639 + $0x2c] sm:$0xf]
        %v5652 = vld [vmem:[%s5639 + $0x30] sm:$0xf]
        %v5653 = vld [vmem:[%s5639 + $0x34] sm:$0xf]
        %v5654 = vld [vmem:[%s5639 + $0x38] sm:$0xf]
        %v5655 = vld [vmem:[%s5639 + $0x3c] sm:$0xf]
        %v5665 = vunpack.c.l.b16 %v5630
        %v5666 = vunpack.c.l.b16 %v5631
        %v5667 = vunpack.c.l.b16 %v5632
        %v5668 = vunpack.c.l.b16 %v5633
        %v5669 = vunpack.c.l.b16 %v5634
        %v5670 = vunpack.c.l.b16 %v5635
        %v5671 = vunpack.c.l.b16 %v5636
        %v5672 = vunpack.c.l.b16 %v5637
        %v5673 = vunpack.c.l.b16 %v5638
        %v5674 = vpack.c.b16 %v5666, %v5665
        %v5675 = vpack.c.b16 %v5668, %v5667
        %v5676 = vpack.c.b16 %v5670, %v5669
        %v5677 = vpack.c.b16 %v5672, %v5671
        %v5678 = vpack.c.b16 %v5673, %v5673
        %v5680 = vshrl.u32 %v5674, 16
        %v5682 = vshll.u32 %v5674, 16
        %v5684 = vrot.slane %v5682, 1
        %v5685 = vor.u32 %v5680, %v5684
        %v5687 = vshll.u32 %v5675, 16
        %v5689 = vrot.slane %v5687, 1
        %v5690 = vsel %vm1661, %v5685, %v5689
        %v5691 = vshrl.u32 %v5675, 16
        %v5693 = vor.u32 %v5691, %v5689
        %v5695 = vshll.u32 %v5676, 16
        %v5697 = vrot.slane %v5695, 1
        %v5698 = vsel %vm1661, %v5693, %v5697
        %v5699 = vshrl.u32 %v5676, 16
        %v5701 = vor.u32 %v5699, %v5697
        %v5703 = vshll.u32 %v5677, 16
        %v5705 = vrot.slane %v5703, 1
        %v5706 = vsel %vm1661, %v5701, %v5705
        %v5707 = vshrl.u32 %v5677, 16
        %v5709 = vor.u32 %v5707, %v5705
        %v5711 = vshll.u32 %v5678, 16
        %v5713 = vrot.slane %v5711, 1
        %v5714 = vsel %vm1661, %v5709, %v5713
        %v5735 = vunpack.c.l.b16 %v5640
        %v5736 = vunpack.c.l.b16 %v5641
        %v5737 = vunpack.c.l.b16 %v5642
        %v5738 = vunpack.c.l.b16 %v5643
        %v5739 = vunpack.c.l.b16 %v5644
        %v5740 = vunpack.c.l.b16 %v5645
        %v5741 = vunpack.c.l.b16 %v5646
        %v5742 = vunpack.c.l.b16 %v5647
        %v5743 = vunpack.c.l.b16 %v5648
        %v5744 = vunpack.c.l.b16 %v5649
        %v5745 = vunpack.c.l.b16 %v5650
        %v5746 = vunpack.c.l.b16 %v5651
        %v5747 = vunpack.c.l.b16 %v5652
        %v5748 = vunpack.c.l.b16 %v5653
        %v5749 = vunpack.c.l.b16 %v5654
        %v5750 = vunpack.c.l.b16 %v5655
        %v5751 = vpack.c.b16 %v5736, %v5735
        %v5752 = vpack.c.b16 %v5738, %v5737
        %v5753 = vpack.c.b16 %v5740, %v5739
        %v5754 = vpack.c.b16 %v5742, %v5741
        %v5755 = vpack.c.b16 %v5744, %v5743
        %v5756 = vpack.c.b16 %v5746, %v5745
        %v5757 = vpack.c.b16 %v5748, %v5747
        %v5758 = vpack.c.b16 %v5750, %v5749
        %5767 = vmatpush.bf16.msra.mxu0 %v5758
        %5768 = vmatpush.bf16.msra.mxu0 %v5757
        %5769 = vmatpush.bf16.msra.mxu0 %v5756
        %5770 = vmatpush.bf16.msra.mxu0 %v5755
        %5771 = vmatpush.bf16.msra.mxu0 %v5754
        %5772 = vmatpush.bf16.msra.mxu0 %v5753
        %5773 = vmatpush.bf16.msra.mxu0 %v5752
        %5774 = vmatpush.bf16.msra.mxu0 %v5751
        %5775 = vmatmul.bf16.gmra.mxu0 %v5690
        %v5776 = vpop.f32.mrf.mxu0
        %v5777 = vadd.f32 0.0, %v5776
        %v5778 = vpop.f32.mrf.mxu0
        %v5779 = vadd.f32 0.0, %v5778
        %5780 = vmatmul.bf16.gmra.mxu0 %v5698
        %v5781 = vpop.f32.mrf.mxu0
        %v5782 = vadd.f32 0.0, %v5781
        %v5783 = vpop.f32.mrf.mxu0
        %v5784 = vadd.f32 0.0, %v5783
        %5785 = vmatmul.bf16.gmra.mxu0 %v5706
        %v5786 = vpop.f32.mrf.mxu0
        %v5787 = vadd.f32 0.0, %v5786
        %v5788 = vpop.f32.mrf.mxu0
        %v5789 = vadd.f32 0.0, %v5788
        %5790 = vmatmul.bf16.gmra.mxu0 %v5714
        %v5791 = vpop.f32.mrf.mxu0
        %v5792 = vadd.f32 0.0, %v5791
        %v5793 = vpop.f32.mrf.mxu0
        %v5794 = vadd.f32 0.0, %v5793
        %5795 = vdwg.mxu0
        %v5796 = vadd.f32 %v5613, %v5777
        %v5797 = vadd.f32 %v5614, %v5779
        %v5798 = vadd.f32 %v5615, %v5782
        %v5799 = vadd.f32 %v5616, %v5784
        %v5800 = vadd.f32 %v5617, %v5787
        %v5801 = vadd.f32 %v5618, %v5789
        %v5802 = vadd.f32 %v5619, %v5792
        %v5803 = vadd.f32 %v5620, %v5794
        %v5804 = vld [vmem:[%s8] sm:$0x1]
        %v5806 = vperm.slane %v5804, 0
        %v5808 = vadd.f32 %v5796, %v5806
        %v5809 = vadd.f32 %v5797, %v5806
        %v5810 = vadd.f32 %v5798, %v5806
        %v5811 = vadd.f32 %v5799, %v5806
        %v5812 = vadd.f32 %v5800, %v5806
        %v5813 = vadd.f32 %v5801, %v5806
        %v5814 = vadd.f32 %v5802, %v5806
        %v5815 = vadd.f32 %v5803, %v5806
        %v5816 = vmax.f32 %v5808, 0.0
        %v5817 = vmax.f32 %v5809, 0.0
        %v5818 = vmax.f32 %v5810, 0.0
        %v5819 = vmax.f32 %v5811, 0.0
        %v5820 = vmax.f32 %v5812, 0.0
        %v5821 = vmax.f32 %v5813, 0.0
        %v5822 = vmax.f32 %v5814, 0.0
        %v5823 = vmax.f32 %v5815, 0.0
        %v5824 = vpack.c.bf16 %v5817, %v5816
        %v5825 = vpack.c.bf16 %v5819, %v5818
        %v5826 = vpack.c.bf16 %v5821, %v5820
        %v5827 = vpack.c.bf16 %v5823, %v5822
        %v5828 = vld [vmem:[%s9] sm:$0xff]
        %v5829 = vld [vmem:[%s9 + $0x8] sm:$0xf]
        %v5830 = vld [vmem:[%s9 + $0xc] sm:$0xff]
        %v5831 = vld [vmem:[%s9 + $0x14] sm:$0xf]
        %v5832 = vld [vmem:[%s9 + $0x18] sm:$0xff]
        %v5833 = vld [vmem:[%s9 + $0x20] sm:$0xf]
        %v5834 = vld [vmem:[%s9 + $0x24] sm:$0xff]
        %v5835 = vld [vmem:[%s9 + $0x2c] sm:$0xf]
        %v5836 = vld [vmem:[%s10] sm:$0xff]
        %v5837 = vld [vmem:[%s10 + $0x8] sm:$0xf]
        %v5838 = vld [vmem:[%s10 + $0xc] sm:$0xff]
        %v5839 = vld [vmem:[%s10 + $0x14] sm:$0xf]
        %v5840 = vld [vmem:[%s10 + $0x18] sm:$0xff]
        %v5841 = vld [vmem:[%s10 + $0x20] sm:$0xf]
        %v5842 = vld [vmem:[%s10 + $0x24] sm:$0xff]
        %v5843 = vld [vmem:[%s10 + $0x2c] sm:$0xf]
        %v5852 = vunpack.c.l.b16 %v5836
        %v5853 = vunpack.c.h.b16 %v5836
        %v5854 = vunpack.c.l.b16 %v5837
        %v5855 = vunpack.c.l.b16 %v5838
        %v5856 = vunpack.c.h.b16 %v5838
        %v5857 = vunpack.c.l.b16 %v5839
        %v5858 = vunpack.c.l.b16 %v5840
        %v5859 = vunpack.c.h.b16 %v5840
        %v5860 = vunpack.c.l.b16 %v5841
        %v5861 = vunpack.c.l.b16 %v5842
        %v5862 = vunpack.c.h.b16 %v5842
        %v5863 = vunpack.c.l.b16 %v5843
        %v5864 = vpack.c.b16 %v5855, %v5852
        %v5865 = vpack.c.b16 %v5856, %v5853
        %v5866 = vpack.c.b16 %v5857, %v5854
        %v5867 = vpack.c.b16 %v5861, %v5858
        %v5868 = vpack.c.b16 %v5862, %v5859
        %v5869 = vpack.c.b16 %v5863, %v5860
        %vm5876 = vcmask 261120
        %v5878 = vsel %vm5876, %v2793, 0
        %v5881 = vsel %vm5876, %v2794, 0
        %v5884 = vsel %vm5876, %v2795, 0
        %v5887 = vsel %vm5876, %v2796, 0
        %5889 = vmatpush.bf16.msra.mxu0 0
        %5890 = vmatpush.bf16.msra.mxu0 0
        %5891 = vmatpush.bf16.msra.mxu0 0
        %5892 = vmatpush.bf16.msra.mxu0 0
        %5893 = vmatpush.bf16.msra.mxu0 0
        %5894 = vmatpush.bf16.msra.mxu0 0
        %5895 = vmatpush.bf16.msra.mxu0 %v5867
        %5896 = vmatpush.bf16.msra.mxu0 %v5864
        %5897 = vmatmul.bf16.gmra.mxu0 %v5878
        %v5898 = vpop.f32.mrf.mxu0
        %v5899 = vadd.f32 0.0, %v5898
        %v5900 = vpop.f32.mrf.mxu0
        %v5901 = vadd.f32 0.0, %v5900
        %5902 = vmatmul.bf16.gmra.mxu0 %v5881
        %v5903 = vpop.f32.mrf.mxu0
        %v5904 = vadd.f32 0.0, %v5903
        %v5905 = vpop.f32.mrf.mxu0
        %v5906 = vadd.f32 0.0, %v5905
        %5907 = vmatmul.bf16.gmra.mxu0 %v5884
        %v5908 = vpop.f32.mrf.mxu0
        %v5909 = vadd.f32 0.0, %v5908
        %v5910 = vpop.f32.mrf.mxu0
        %v5911 = vadd.f32 0.0, %v5910
        %5912 = vmatmul.bf16.gmra.mxu0 %v5887
        %v5913 = vpop.f32.mrf.mxu0
        %v5914 = vadd.f32 0.0, %v5913
        %v5915 = vpop.f32.mrf.mxu0
        %v5916 = vadd.f32 0.0, %v5915
        %5917 = vdwg.mxu0
        %5918 = vmatpush.bf16.msra.mxu0 0
        %5919 = vmatpush.bf16.msra.mxu0 0
        %5920 = vmatpush.bf16.msra.mxu0 0
        %5921 = vmatpush.bf16.msra.mxu0 0
        %5922 = vmatpush.bf16.msra.mxu0 0
        %5923 = vmatpush.bf16.msra.mxu0 0
        %5924 = vmatpush.bf16.msra.mxu0 %v5868
        %5925 = vmatpush.bf16.msra.mxu0 %v5865
        %5926 = vmatmul.bf16.gmra.mxu0 %v5878
        %v5927 = vpop.f32.mrf.mxu0
        %v5928 = vadd.f32 0.0, %v5927
        %v5929 = vpop.f32.mrf.mxu0
        %v5930 = vadd.f32 0.0, %v5929
        %5931 = vmatmul.bf16.gmra.mxu0 %v5881
        %v5932 = vpop.f32.mrf.mxu0
        %v5933 = vadd.f32 0.0, %v5932
        %v5934 = vpop.f32.mrf.mxu0
        %v5935 = vadd.f32 0.0, %v5934
        %5936 = vmatmul.bf16.gmra.mxu0 %v5884
        %v5937 = vpop.f32.mrf.mxu0
        %v5938 = vadd.f32 0.0, %v5937
        %v5939 = vpop.f32.mrf.mxu0
        %v5940 = vadd.f32 0.0, %v5939
        %5941 = vmatmul.bf16.gmra.mxu0 %v5887
        %v5942 = vpop.f32.mrf.mxu0
        %v5943 = vadd.f32 0.0, %v5942
        %v5944 = vpop.f32.mrf.mxu0
        %v5945 = vadd.f32 0.0, %v5944
        %5946 = vdwg.mxu0
        %5947 = vmatpush.bf16.msra.mxu0 0
        %5948 = vmatpush.bf16.msra.mxu0 0
        %5949 = vmatpush.bf16.msra.mxu0 0
        %5950 = vmatpush.bf16.msra.mxu0 0
        %5951 = vmatpush.bf16.msra.mxu0 0
        %5952 = vmatpush.bf16.msra.mxu0 0
        %5953 = vmatpush.bf16.msra.mxu0 %v5869
        %5954 = vmatpush.bf16.msra.mxu0 %v5866
        %5955 = vmatmul.bf16.gmra.mxu0 %v5878
        %v5956 = vpop.f32.mrf.mxu0
        %v5957 = vadd.f32 0.0, %v5956
        %v5958 = vpop.f32.mrf.mxu0
        %v5959 = vadd.f32 0.0, %v5958
        %5960 = vmatmul.bf16.gmra.mxu0 %v5881
        %v5961 = vpop.f32.mrf.mxu0
        %v5962 = vadd.f32 0.0, %v5961
        %v5963 = vpop.f32.mrf.mxu0
        %v5964 = vadd.f32 0.0, %v5963
        %5965 = vmatmul.bf16.gmra.mxu0 %v5884
        %v5966 = vpop.f32.mrf.mxu0
        %v5967 = vadd.f32 0.0, %v5966
        %v5968 = vpop.f32.mrf.mxu0
        %v5969 = vadd.f32 0.0, %v5968
        %5970 = vmatmul.bf16.gmra.mxu0 %v5887
        %v5971 = vpop.f32.mrf.mxu0
        %v5972 = vadd.f32 0.0, %v5971
        %v5973 = vpop.f32.mrf.mxu0
        %v5974 = vadd.f32 0.0, %v5973
        %5975 = vdwg.mxu0
        %v5976 = vunpack.c.l.b16 %v907
        %v5977 = vunpack.c.l.b16 %v908
        %v5978 = vunpack.c.l.b16 %v909
        %v5979 = vunpack.c.l.b16 %v910
        %v5980 = vunpack.c.l.b16 %v911
        %v5981 = vunpack.c.l.b16 %v912
        %v5982 = vunpack.c.l.b16 %v913
        %v5983 = vunpack.c.l.b16 %v914
        %v5984 = vpack.c.b16 %v5977, %v5976
        %v5985 = vpack.c.b16 %v5979, %v5978
        %v5986 = vpack.c.b16 %v5981, %v5980
        %v5987 = vpack.c.b16 %v5983, %v5982
        %v5996 = vunpack.c.l.b16 %v5828
        %v5997 = vunpack.c.h.b16 %v5828
        %v5998 = vunpack.c.l.b16 %v5829
        %v5999 = vunpack.c.l.b16 %v5830
        %v6000 = vunpack.c.h.b16 %v5830
        %v6001 = vunpack.c.l.b16 %v5831
        %v6002 = vunpack.c.l.b16 %v5832
        %v6003 = vunpack.c.h.b16 %v5832
        %v6004 = vunpack.c.l.b16 %v5833
        %v6005 = vunpack.c.l.b16 %v5834
        %v6006 = vunpack.c.h.b16 %v5834
        %v6007 = vunpack.c.l.b16 %v5835
        %v6008 = vpack.c.b16 %v5999, %v5996
        %v6009 = vpack.c.b16 %v6000, %v5997
        %v6010 = vpack.c.b16 %v6001, %v5998
        %v6011 = vpack.c.b16 %v6005, %v6002
        %v6012 = vpack.c.b16 %v6006, %v6003
        %v6013 = vpack.c.b16 %v6007, %v6004
        %v6021 = vsel %vm5876, %v5984, 0
        %v6024 = vsel %vm5876, %v5985, 0
        %v6027 = vsel %vm5876, %v5986, 0
        %v6030 = vsel %vm5876, %v5987, 0
        %6032 = vmatpush.bf16.msra.mxu0 0
        %6033 = vmatpush.bf16.msra.mxu0 0
        %6034 = vmatpush.bf16.msra.mxu0 0
        %6035 = vmatpush.bf16.msra.mxu0 0
        %6036 = vmatpush.bf16.msra.mxu0 0
        %6037 = vmatpush.bf16.msra.mxu0 0
        %6038 = vmatpush.bf16.msra.mxu0 %v6011
        %6039 = vmatpush.bf16.msra.mxu0 %v6008
        %6040 = vmatmul.bf16.gmra.mxu0 %v6021
        %v6041 = vpop.f32.mrf.mxu0
        %v6042 = vadd.f32 %v5899, %v6041
        %v6043 = vpop.f32.mrf.mxu0
        %v6044 = vadd.f32 %v5901, %v6043
        %6045 = vmatmul.bf16.gmra.mxu0 %v6024
        %v6046 = vpop.f32.mrf.mxu0
        %v6047 = vadd.f32 %v5904, %v6046
        %v6048 = vpop.f32.mrf.mxu0
        %v6049 = vadd.f32 %v5906, %v6048
        %6050 = vmatmul.bf16.gmra.mxu0 %v6027
        %v6051 = vpop.f32.mrf.mxu0
        %v6052 = vadd.f32 %v5909, %v6051
        %v6053 = vpop.f32.mrf.mxu0
        %v6054 = vadd.f32 %v5911, %v6053
        %6055 = vmatmul.bf16.gmra.mxu0 %v6030
        %v6056 = vpop.f32.mrf.mxu0
        %v6057 = vadd.f32 %v5914, %v6056
        %v6058 = vpop.f32.mrf.mxu0
        %v6059 = vadd.f32 %v5916, %v6058
        %6060 = vdwg.mxu0
        %6061 = vmatpush.bf16.msra.mxu0 0
        %6062 = vmatpush.bf16.msra.mxu0 0
        %6063 = vmatpush.bf16.msra.mxu0 0
        %6064 = vmatpush.bf16.msra.mxu0 0
        %6065 = vmatpush.bf16.msra.mxu0 0
        %6066 = vmatpush.bf16.msra.mxu0 0
        %6067 = vmatpush.bf16.msra.mxu0 %v6012
        %6068 = vmatpush.bf16.msra.mxu0 %v6009
        %6069 = vmatmul.bf16.gmra.mxu0 %v6021
        %v6070 = vpop.f32.mrf.mxu0
        %v6071 = vadd.f32 %v5928, %v6070
        %v6072 = vpop.f32.mrf.mxu0
        %v6073 = vadd.f32 %v5930, %v6072
        %6074 = vmatmul.bf16.gmra.mxu0 %v6024
        %v6075 = vpop.f32.mrf.mxu0
        %v6076 = vadd.f32 %v5933, %v6075
        %v6077 = vpop.f32.mrf.mxu0
        %v6078 = vadd.f32 %v5935, %v6077
        %6079 = vmatmul.bf16.gmra.mxu0 %v6027
        %v6080 = vpop.f32.mrf.mxu0
        %v6081 = vadd.f32 %v5938, %v6080
        %v6082 = vpop.f32.mrf.mxu0
        %v6083 = vadd.f32 %v5940, %v6082
        %6084 = vmatmul.bf16.gmra.mxu0 %v6030
        %v6085 = vpop.f32.mrf.mxu0
        %v6086 = vadd.f32 %v5943, %v6085
        %v6087 = vpop.f32.mrf.mxu0
        %v6088 = vadd.f32 %v5945, %v6087
        %6089 = vdwg.mxu0
        %6090 = vmatpush.bf16.msra.mxu0 0
        %6091 = vmatpush.bf16.msra.mxu0 0
        %6092 = vmatpush.bf16.msra.mxu0 0
        %6093 = vmatpush.bf16.msra.mxu0 0
        %6094 = vmatpush.bf16.msra.mxu0 0
        %6095 = vmatpush.bf16.msra.mxu0 0
        %6096 = vmatpush.bf16.msra.mxu0 %v6013
        %6097 = vmatpush.bf16.msra.mxu0 %v6010
        %6098 = vmatmul.bf16.gmra.mxu0 %v6021
        %v6099 = vpop.f32.mrf.mxu0
        %v6100 = vadd.f32 %v5957, %v6099
        %v6101 = vpop.f32.mrf.mxu0
        %v6102 = vadd.f32 %v5959, %v6101
        %6103 = vmatmul.bf16.gmra.mxu0 %v6024
        %v6104 = vpop.f32.mrf.mxu0
        %v6105 = vadd.f32 %v5962, %v6104
        %v6106 = vpop.f32.mrf.mxu0
        %v6107 = vadd.f32 %v5964, %v6106
        %6108 = vmatmul.bf16.gmra.mxu0 %v6027
        %v6109 = vpop.f32.mrf.mxu0
        %v6110 = vadd.f32 %v5967, %v6109
        %v6111 = vpop.f32.mrf.mxu0
        %v6112 = vadd.f32 %v5969, %v6111
        %6113 = vmatmul.bf16.gmra.mxu0 %v6030
        %v6114 = vpop.f32.mrf.mxu0
        %v6115 = vadd.f32 %v5972, %v6114
        %v6116 = vpop.f32.mrf.mxu0
        %v6117 = vadd.f32 %v5974, %v6116
        %6118 = vdwg.mxu0
        %v6119 = vld [vmem:[%s11] sm:$0xff]
        %v6120 = vld [vmem:[%s11 + $0x8] sm:$0xf]
        %v6121 = vld [vmem:[%s11 + $0xc] sm:$0xff]
        %v6122 = vld [vmem:[%s11 + $0x14] sm:$0xf]
        %v6123 = vld [vmem:[%s11 + $0x18] sm:$0xff]
        %v6124 = vld [vmem:[%s11 + $0x20] sm:$0xf]
        %v6125 = vld [vmem:[%s11 + $0x24] sm:$0xff]
        %v6126 = vld [vmem:[%s11 + $0x2c] sm:$0xf]
        %v6127 = vld [vmem:[%s11 + $0x30] sm:$0xff]
        %v6128 = vld [vmem:[%s11 + $0x38] sm:$0xf]
        %v6129 = vld [vmem:[%s11 + $0x3c] sm:$0xff]
        %v6130 = vld [vmem:[%s11 + $0x44] sm:$0xf]
        %v6131 = vld [vmem:[%s11 + $0x48] sm:$0xff]
        %v6132 = vld [vmem:[%s11 + $0x50] sm:$0xf]
        %v6133 = vld [vmem:[%s11 + $0x54] sm:$0xff]
        %v6134 = vld [vmem:[%s11 + $0x5c] sm:$0xf]
        %v6151 = vunpack.c.l.b16 %v6119
        %v6152 = vunpack.c.h.b16 %v6119
        %v6153 = vunpack.c.l.b16 %v6120
        %v6154 = vunpack.c.l.b16 %v6121
        %v6155 = vunpack.c.h.b16 %v6121
        %v6156 = vunpack.c.l.b16 %v6122
        %v6157 = vunpack.c.l.b16 %v6123
        %v6158 = vunpack.c.h.b16 %v6123
        %v6159 = vunpack.c.l.b16 %v6124
        %v6160 = vunpack.c.l.b16 %v6125
        %v6161 = vunpack.c.h.b16 %v6125
        %v6162 = vunpack.c.l.b16 %v6126
        %v6163 = vunpack.c.l.b16 %v6127
        %v6164 = vunpack.c.h.b16 %v6127
        %v6165 = vunpack.c.l.b16 %v6128
        %v6166 = vunpack.c.l.b16 %v6129
        %v6167 = vunpack.c.h.b16 %v6129
        %v6168 = vunpack.c.l.b16 %v6130
        %v6169 = vunpack.c.l.b16 %v6131
        %v6170 = vunpack.c.h.b16 %v6131
        %v6171 = vunpack.c.l.b16 %v6132
        %v6172 = vunpack.c.l.b16 %v6133
        %v6173 = vunpack.c.h.b16 %v6133
        %v6174 = vunpack.c.l.b16 %v6134
        %v6175 = vpack.c.b16 %v6154, %v6151
        %v6176 = vpack.c.b16 %v6155, %v6152
        %v6177 = vpack.c.b16 %v6156, %v6153
        %v6178 = vpack.c.b16 %v6160, %v6157
        %v6179 = vpack.c.b16 %v6161, %v6158
        %v6180 = vpack.c.b16 %v6162, %v6159
        %v6181 = vpack.c.b16 %v6166, %v6163
        %v6182 = vpack.c.b16 %v6167, %v6164
        %v6183 = vpack.c.b16 %v6168, %v6165
        %v6184 = vpack.c.b16 %v6172, %v6169
        %v6185 = vpack.c.b16 %v6173, %v6170
        %v6186 = vpack.c.b16 %v6174, %v6171
        %v6200 = vsel %vm799, %v5824, 0
        %v6203 = vsel %vm799, %v5825, 0
        %v6206 = vsel %vm799, %v5826, 0
        %v6209 = vsel %vm799, %v5827, 0
        %6211 = vmatpush.bf16.msra.mxu0 0
        %6212 = vmatpush.bf16.msra.mxu0 0
        %6213 = vmatpush.bf16.msra.mxu0 0
        %6214 = vmatpush.bf16.msra.mxu0 0
        %6215 = vmatpush.bf16.msra.mxu0 %v6184
        %6216 = vmatpush.bf16.msra.mxu0 %v6181
        %6217 = vmatpush.bf16.msra.mxu0 %v6178
        %6218 = vmatpush.bf16.msra.mxu0 %v6175
        %6219 = vmatmul.bf16.gmra.mxu0 %v6200
        %v6220 = vpop.f32.mrf.mxu0
        %v6221 = vadd.f32 0.0, %v6220
        %v6222 = vpop.f32.mrf.mxu0
        %v6223 = vadd.f32 0.0, %v6222
        %6224 = vmatmul.bf16.gmra.mxu0 %v6203
        %v6225 = vpop.f32.mrf.mxu0
        %v6226 = vadd.f32 0.0, %v6225
        %v6227 = vpop.f32.mrf.mxu0
        %v6228 = vadd.f32 0.0, %v6227
        %6229 = vmatmul.bf16.gmra.mxu0 %v6206
        %v6230 = vpop.f32.mrf.mxu0
        %v6231 = vadd.f32 0.0, %v6230
        %v6232 = vpop.f32.mrf.mxu0
        %v6233 = vadd.f32 0.0, %v6232
        %6234 = vmatmul.bf16.gmra.mxu0 %v6209
        %v6235 = vpop.f32.mrf.mxu0
        %v6236 = vadd.f32 0.0, %v6235
        %v6237 = vpop.f32.mrf.mxu0
        %v6238 = vadd.f32 0.0, %v6237
        %6239 = vdwg.mxu0
        %6240 = vmatpush.bf16.msra.mxu0 0
        %6241 = vmatpush.bf16.msra.mxu0 0
        %6242 = vmatpush.bf16.msra.mxu0 0
        %6243 = vmatpush.bf16.msra.mxu0 0
        %6244 = vmatpush.bf16.msra.mxu0 %v6185
        %6245 = vmatpush.bf16.msra.mxu0 %v6182
        %6246 = vmatpush.bf16.msra.mxu0 %v6179
        %6247 = vmatpush.bf16.msra.mxu0 %v6176
        %6248 = vmatmul.bf16.gmra.mxu0 %v6200
        %v6249 = vpop.f32.mrf.mxu0
        %v6250 = vadd.f32 0.0, %v6249
        %v6251 = vpop.f32.mrf.mxu0
        %v6252 = vadd.f32 0.0, %v6251
        %6253 = vmatmul.bf16.gmra.mxu0 %v6203
        %v6254 = vpop.f32.mrf.mxu0
        %v6255 = vadd.f32 0.0, %v6254
        %v6256 = vpop.f32.mrf.mxu0
        %v6257 = vadd.f32 0.0, %v6256
        %6258 = vmatmul.bf16.gmra.mxu0 %v6206
        %v6259 = vpop.f32.mrf.mxu0
        %v6260 = vadd.f32 0.0, %v6259
        %v6261 = vpop.f32.mrf.mxu0
        %v6262 = vadd.f32 0.0, %v6261
        %6263 = vmatmul.bf16.gmra.mxu0 %v6209
        %v6264 = vpop.f32.mrf.mxu0
        %v6265 = vadd.f32 0.0, %v6264
        %v6266 = vpop.f32.mrf.mxu0
        %v6267 = vadd.f32 0.0, %v6266
        %6268 = vdwg.mxu0
        %6269 = vmatpush.bf16.msra.mxu0 0
        %6270 = vmatpush.bf16.msra.mxu0 0
        %6271 = vmatpush.bf16.msra.mxu0 0
        %6272 = vmatpush.bf16.msra.mxu0 0
        %6273 = vmatpush.bf16.msra.mxu0 %v6186
        %6274 = vmatpush.bf16.msra.mxu0 %v6183
        %6275 = vmatpush.bf16.msra.mxu0 %v6180
        %6276 = vmatpush.bf16.msra.mxu0 %v6177
        %6277 = vmatmul.bf16.gmra.mxu0 %v6200
        %v6278 = vpop.f32.mrf.mxu0
        %v6279 = vadd.f32 0.0, %v6278
        %v6280 = vpop.f32.mrf.mxu0
        %v6281 = vadd.f32 0.0, %v6280
        %6282 = vmatmul.bf16.gmra.mxu0 %v6203
        %v6283 = vpop.f32.mrf.mxu0
        %v6284 = vadd.f32 0.0, %v6283
        %v6285 = vpop.f32.mrf.mxu0
        %v6286 = vadd.f32 0.0, %v6285
        %6287 = vmatmul.bf16.gmra.mxu0 %v6206
        %v6288 = vpop.f32.mrf.mxu0
        %v6289 = vadd.f32 0.0, %v6288
        %v6290 = vpop.f32.mrf.mxu0
        %v6291 = vadd.f32 0.0, %v6290
        %6292 = vmatmul.bf16.gmra.mxu0 %v6209
        %v6293 = vpop.f32.mrf.mxu0
        %v6294 = vadd.f32 0.0, %v6293
        %v6295 = vpop.f32.mrf.mxu0
        %v6296 = vadd.f32 0.0, %v6295
        %6297 = vdwg.mxu0
        %v6298 = vadd.f32 %v6042, %v6221
        %v6299 = vadd.f32 %v6071, %v6250
        %v6300 = vadd.f32 %v6100, %v6279
        %v6301 = vadd.f32 %v6044, %v6223
        %v6302 = vadd.f32 %v6073, %v6252
        %v6303 = vadd.f32 %v6102, %v6281
        %v6304 = vadd.f32 %v6047, %v6226
        %v6305 = vadd.f32 %v6076, %v6255
        %v6306 = vadd.f32 %v6105, %v6284
        %v6307 = vadd.f32 %v6049, %v6228
        %v6308 = vadd.f32 %v6078, %v6257
        %v6309 = vadd.f32 %v6107, %v6286
        %v6310 = vadd.f32 %v6052, %v6231
        %v6311 = vadd.f32 %v6081, %v6260
        %v6312 = vadd.f32 %v6110, %v6289
        %v6313 = vadd.f32 %v6054, %v6233
        %v6314 = vadd.f32 %v6083, %v6262
        %v6315 = vadd.f32 %v6112, %v6291
        %v6316 = vadd.f32 %v6057, %v6236
        %v6317 = vadd.f32 %v6086, %v6265
        %v6318 = vadd.f32 %v6115, %v6294
        %v6319 = vadd.f32 %v6059, %v6238
        %v6320 = vadd.f32 %v6088, %v6267
        %v6321 = vadd.f32 %v6117, %v6296
        %v6322 = vld [vmem:[%s12] sm:$0x7]
        %v6324 = vperm.slane %v6322, 0
        %v6325 = vperm.slane %v6322, 1
        %v6326 = vperm.slane %v6322, 2
        %v6330 = vadd.f32 %v6298, %v6324
        %v6331 = vadd.f32 %v6299, %v6325
        %v6332 = vadd.f32 %v6300, %v6326
        %v6333 = vadd.f32 %v6301, %v6324
        %v6334 = vadd.f32 %v6302, %v6325
        %v6335 = vadd.f32 %v6303, %v6326
        %v6336 = vadd.f32 %v6304, %v6324
        %v6337 = vadd.f32 %v6305, %v6325
        %v6338 = vadd.f32 %v6306, %v6326
        %v6339 = vadd.f32 %v6307, %v6324
        %v6340 = vadd.f32 %v6308, %v6325
        %v6341 = vadd.f32 %v6309, %v6326
        %v6342 = vadd.f32 %v6310, %v6324
        %v6343 = vadd.f32 %v6311, %v6325
        %v6344 = vadd.f32 %v6312, %v6326
        %v6345 = vadd.f32 %v6313, %v6324
        %v6346 = vadd.f32 %v6314, %v6325
        %v6347 = vadd.f32 %v6315, %v6326
        %v6348 = vadd.f32 %v6316, %v6324
        %v6349 = vadd.f32 %v6317, %v6325
        %v6350 = vadd.f32 %v6318, %v6326
        %v6351 = vadd.f32 %v6319, %v6324
        %v6352 = vadd.f32 %v6320, %v6325
        %v6353 = vadd.f32 %v6321, %v6326
        %v6354 = vld [vmem:[%s438] sm:$0xff]
        %v6355 = vld [vmem:[%s438 + $0x8] sm:$0xff]
        %v6356 = vld [vmem:[%s438 + $0x10] sm:$0xff]
        %v6357 = vld [vmem:[%s438 + $0x18] sm:$0xff]
        %v6358 = vld [vmem:[%s438 + $0x20] sm:$0xff]
        %v6359 = vld [vmem:[%s438 + $0x28] sm:$0xff]
        %v6360 = vld [vmem:[%s438 + $0x30] sm:$0xff]
        %v6361 = vld [vmem:[%s438 + $0x38] sm:$0xff]
        %v6362 = vld [vmem:[%s438 + $0x40] sm:$0xff]
        %v6363 = vld [vmem:[%s438 + $0x48] sm:$0xff]
        %v6364 = vld [vmem:[%s438 + $0x50] sm:$0xff]
        %v6365 = vld [vmem:[%s438 + $0x58] sm:$0xff]
        %v6366 = vld [vmem:[%s438 + $0x60] sm:$0xff]
        %v6367 = vld [vmem:[%s438 + $0x68] sm:$0xff]
        %v6368 = vld [vmem:[%s438 + $0x70] sm:$0xff]
        %v6369 = vld [vmem:[%s438 + $0x78] sm:$0xff]
        %v6370 = vld [vmem:[%s438 + $0x80] sm:$0xff]
        %v6371 = vld [vmem:[%s438 + $0x88] sm:$0xff]
        %v6372 = vld [vmem:[%s438 + $0x90] sm:$0xff]
        %v6373 = vld [vmem:[%s438 + $0x98] sm:$0xff]
        %v6374 = vld [vmem:[%s438 + $0xa0] sm:$0xff]
        %v6375 = vld [vmem:[%s438 + $0xa8] sm:$0xff]
        %v6376 = vld [vmem:[%s438 + $0xb0] sm:$0xff]
        %v6377 = vld [vmem:[%s438 + $0xb8] sm:$0xff]
        %v6378 = vadd.f32 %v6330, %v6354
        %v6379 = vadd.f32 %v6331, %v6355
        %v6380 = vadd.f32 %v6332, %v6356
        %v6381 = vadd.f32 %v6333, %v6357
        %v6382 = vadd.f32 %v6334, %v6358
        %v6383 = vadd.f32 %v6335, %v6359
        %v6384 = vadd.f32 %v6336, %v6360
        %v6385 = vadd.f32 %v6337, %v6361
        %v6386 = vadd.f32 %v6338, %v6362
        %v6387 = vadd.f32 %v6339, %v6363
        %v6388 = vadd.f32 %v6340, %v6364
        %v6389 = vadd.f32 %v6341, %v6365
        %v6390 = vadd.f32 %v6342, %v6366
        %v6391 = vadd.f32 %v6343, %v6367
        %v6392 = vadd.f32 %v6344, %v6368
        %v6393 = vadd.f32 %v6345, %v6369
        %v6394 = vadd.f32 %v6346, %v6370
        %v6395 = vadd.f32 %v6347, %v6371
        %v6396 = vadd.f32 %v6348, %v6372
        %v6397 = vadd.f32 %v6349, %v6373
        %v6398 = vadd.f32 %v6350, %v6374
        %v6399 = vadd.f32 %v6351, %v6375
        %v6400 = vadd.f32 %v6352, %v6376
        %v6401 = vadd.f32 %v6353, %v6377
        %v6402 = vmax.f32 %v6378, 0.0
        %v6403 = vmax.f32 %v6379, 0.0
        %v6404 = vmax.f32 %v6380, 0.0
        %v6405 = vmax.f32 %v6381, 0.0
        %v6406 = vmax.f32 %v6382, 0.0
        %v6407 = vmax.f32 %v6383, 0.0
        %v6408 = vmax.f32 %v6384, 0.0
        %v6409 = vmax.f32 %v6385, 0.0
        %v6410 = vmax.f32 %v6386, 0.0
        %v6411 = vmax.f32 %v6387, 0.0
        %v6412 = vmax.f32 %v6388, 0.0
        %v6413 = vmax.f32 %v6389, 0.0
        %v6414 = vmax.f32 %v6390, 0.0
        %v6415 = vmax.f32 %v6391, 0.0
        %v6416 = vmax.f32 %v6392, 0.0
        %v6417 = vmax.f32 %v6393, 0.0
        %v6418 = vmax.f32 %v6394, 0.0
        %v6419 = vmax.f32 %v6395, 0.0
        %v6420 = vmax.f32 %v6396, 0.0
        %v6421 = vmax.f32 %v6397, 0.0
        %v6422 = vmax.f32 %v6398, 0.0
        %v6423 = vmax.f32 %v6399, 0.0
        %v6424 = vmax.f32 %v6400, 0.0
        %v6425 = vmax.f32 %v6401, 0.0
        %6426 = vst [vmem:[%s433] sm:$0xff] %v6402
        %6427 = vst [vmem:[%s433 + $0x8] sm:$0xff] %v6403
        %6428 = vst.msk [vmem:[%s433 + $0x10] sm:$0xff] %vm799, %v6404
        %6429 = vst [vmem:[%s433 + $0x18] sm:$0xff] %v6405
        %6430 = vst [vmem:[%s433 + $0x20] sm:$0xff] %v6406
        %6431 = vst.msk [vmem:[%s433 + $0x28] sm:$0xff] %vm799, %v6407
        %6432 = vst [vmem:[%s433 + $0x30] sm:$0xff] %v6408
        %6433 = vst [vmem:[%s433 + $0x38] sm:$0xff] %v6409
        %6434 = vst.msk [vmem:[%s433 + $0x40] sm:$0xff] %vm799, %v6410
        %6435 = vst [vmem:[%s433 + $0x48] sm:$0xff] %v6411
        %6436 = vst [vmem:[%s433 + $0x50] sm:$0xff] %v6412
        %6437 = vst.msk [vmem:[%s433 + $0x58] sm:$0xff] %vm799, %v6413
        %6438 = vst [vmem:[%s433 + $0x60] sm:$0xff] %v6414
        %6439 = vst [vmem:[%s433 + $0x68] sm:$0xff] %v6415
        %6440 = vst.msk [vmem:[%s433 + $0x70] sm:$0xff] %vm799, %v6416
        %6441 = vst [vmem:[%s433 + $0x78] sm:$0xff] %v6417
        %6442 = vst [vmem:[%s433 + $0x80] sm:$0xff] %v6418
        %6443 = vst.msk [vmem:[%s433 + $0x88] sm:$0xff] %vm799, %v6419
        %6444 = vst [vmem:[%s433 + $0x90] sm:$0xff] %v6420
        %6445 = vst [vmem:[%s433 + $0x98] sm:$0xff] %v6421
        %6446 = vst.msk [vmem:[%s433 + $0xa0] sm:$0xff] %vm799, %v6422
        %6447 = vst [vmem:[%s433 + $0xa8] sm:$0xff] %v6423
        %6448 = vst [vmem:[%s433 + $0xb0] sm:$0xff] %v6424
        %6449 = vst.msk [vmem:[%s433 + $0xb8] sm:$0xff] %vm799, %v6425
        %s6450 = sand.u32 %s313, 1
        %s6451 = scalar_lea.sflag [#allocation6], %s6450
        %s6452 = sand.u32 %s313, 1
        %s6453 = smul.addr %s6452, 192
        %s6454 = scalar_lea.vmem [#allocation5], %s6453
        // Predicated region
        $region73: #{tpu_custom_call.1} parent=71 // pred_check
          %p6455 = pneg %p323
        $region74: #{tpu_custom_call.1} parent=71 // pred_check_branch
          %6457 = sbr.rel (%p6455) target = $region76
        $region75: #{tpu_custom_call.1} parent=71 // pred_region
          %6459 = vsyncadd %s6451, 0
          %s6460 = smul.addr %s27, 24
          %s6461 = smul.addr %s6460, 8
          %s6462 = scalar_lea.hbm %s13, %s6461
          %s6463 = sshll.u32 %s6454, 4
          %s6464 = int_to_ptr.vmem [resolvable:$true] %s6463
          %s6465 = sshll.u32 %s6462, 4
          %s6466 = int_to_ptr.hbm [resolvable:$true] %s6465
          %6471 = dma.vmem_to_hbm [thread:$0]  %s6464, 3072, %s6466, %s6451, 384, 384, 24
        $region76: #{tpu_custom_call.1} parent=71 // pred_fallthru
          _
      $region72: #{tpu_custom_call.1} parent=5 // pred_fallthru
        _
      %p6472 = scmp.le.s32.totalorder 2, %s22
      // Predicated region
      $region77: #{tpu_custom_call.1} parent=5 // pred_check
        %p6473 = pneg %p6472
      $region78: #{tpu_custom_call.1} parent=5 // pred_check_branch
        %6475 = sbr.rel (%p6473) target = $region80
      $region79: #{tpu_custom_call.1} parent=5 // pred_region
        %s6476 = ssub.s32 %s22, 2
        // Predicated region
        $region81: #{tpu_custom_call.1} parent=79 // pred_check
          %p6477 = pneg %p329
        $region82: #{tpu_custom_call.1} parent=79 // pred_check_branch
          %6479 = sbr.rel (%p6477) target = $region84
        $region83: #{tpu_custom_call.1} parent=79 // pred_region
          %s6480 = sand.u32 %s314, 1
          %s6481 = scalar_lea.sflag [#allocation6], %s6480
          %s6482 = sand.u32 %s314, 1
          %s6483 = smul.addr %s6482, 192
          %s6484 = scalar_lea.vmem [#allocation5], %s6483
          %6486 = dma.done %s6481, 3072
        $region84: #{tpu_custom_call.1} parent=79 // pred_fallthru
          _
      $region80: #{tpu_custom_call.1} parent=5 // pred_fallthru
        _
    $region6: #{tpu_custom_call.1} parent=1 // loop_footer
      %s26 = sadd.s32 1, %s22
    $region7: #{tpu_custom_call.1} parent=1 // loop_footer_branch
      %21 = sbr.rel target = $region3
    $region8: #{tpu_custom_call.1} parent=1 // loop_exit
      _
    %6487 = vsyncpa [#allocation6], 1
    %s6488 = scalar_lea.sflag [#allocation6], 1
    %6489 = vsyncpa %s6488, 1

</llo_original>
